<compile_context>
chip_gen: v7x
topology: tpu7x:2x2x1
jax: 0.10.0
libtpu: 0.0.40
codegen_flags: <defaults>
</compile_context>

<pallas_src>
import jax
import jax.numpy as jnp
from jax.experimental import pallas as pl
from jax.experimental.pallas import tpu as pltpu

D_IN = 429
D_IN_PAD = 512          # pad ragged contraction dim 429 -> 512 (multiple of 128)
D_OUT = 39


def _mlp_kernel(x_ref,
                w1_ref, b1_ref,
                w2_ref, b2_ref,
                w3_ref, b3_ref,
                w4_ref, b4_ref,
                o_ref):
    """Fused 4-layer MLP on one batch tile: (Linear + Sigmoid) x3 -> Linear.

    x tile and weights are bf16 in VMEM, every dot accumulates in f32 on the
    MXU, and sigmoid is the native logistic (single EUP transcendental).
    """
    h = jnp.dot(x_ref[...], w1_ref[...],
                preferred_element_type=jnp.float32) + b1_ref[...]
    h = jax.nn.sigmoid(h).astype(jnp.bfloat16)

    h = jnp.dot(h, w2_ref[...],
                preferred_element_type=jnp.float32) + b2_ref[...]
    h = jax.nn.sigmoid(h).astype(jnp.bfloat16)

    h = jnp.dot(h, w3_ref[...],
                preferred_element_type=jnp.float32) + b3_ref[...]
    h = jax.nn.sigmoid(h).astype(jnp.bfloat16)

    out = jnp.dot(h, w4_ref[...],
                  preferred_element_type=jnp.float32) + b4_ref[...]
    o_ref[...] = out.astype(o_ref.dtype)


def _pick_tm(batch):
    # 256 rows feeds a full native MXU pass per layer on v6e/v7x; tiny batches
    # just round up to the sublane granule (8).
    if batch >= 256:
        return 256
    return max(8, ((batch + 7) // 8) * 8)


@jax.jit
def classifier_forward(x, prep_params):
    """x: (B, 429) float32 -> (B, 39) float32.

    prep_params: output of prepare_params() — bf16 weights (w1 row-padded to
    512), f32 (1, out) biases.
    """
    (w1, b1), (w2, b2), (w3, b3), (w4, b4) = prep_params
    B = x.shape[0]
    tm = _pick_tm(B)
    b_pad = ((B + tm - 1) // tm) * tm

    # Zero-pad batch to a tile multiple and features 429 -> 512; cast to bf16
    # so the x DMA bytes are halved as well.
    xp = jnp.pad(x, ((0, b_pad - B), (0, D_IN_PAD - D_IN))).astype(jnp.bfloat16)

    # Constant index_map => block never changes => weights stay VMEM-resident
    # across all batch tiles (single weight DMA, amortized over the grid).
    resident = lambda a: pl.BlockSpec(a.shape, lambda i: (0, 0))

    out = pl.pallas_call(
        _mlp_kernel,
        out_shape=jax.ShapeDtypeStruct((b_pad, D_OUT), jnp.float32),
        grid=(b_pad // tm,),
        in_specs=[pl.BlockSpec((tm, D_IN_PAD), lambda i: (i, 0)),
                  resident(w1), resident(b1),
                  resident(w2), resident(b2),
                  resident(w3), resident(b3),
                  resident(w4), resident(b4)],
        out_specs=pl.BlockSpec((tm, D_OUT), lambda i: (i, 0)),
        compiler_params=pltpu.CompilerParams(
            # batch tiles are independent -> shard across v7x's 2 TensorCores
            dimension_semantics=("parallel",),
            # actual footprint (~2.2 MiB bf16 weights + tiles/intermediates)
            # is well under this; keep headroom vs v7x's 64 MiB physical VMEM.
            vmem_limit_bytes=24 << 20),
    )(xp, w1, b1, w2, b2, w3, b3, w4, b4)

    return out[:B] if b_pad != B else out


def init_params(key):
    """nn.Linear-style init (U[-1/sqrt(fan_in), 1/sqrt(fan_in)]).

    Weights stored transposed: (in_features, out_features); biases (1, out).
    """
    dims = [(D_IN, 1024), (1024, 512), (512, 128), (128, D_OUT)]
    params = []
    for fan_in, fan_out in dims:
        key, kw, kb = jax.random.split(key, 3)
        bound = float(fan_in) ** -0.5
        w = jax.random.uniform(kw, (fan_in, fan_out), jnp.float32, -bound, bound)
        b = jax.random.uniform(kb, (1, fan_out), jnp.float32, -bound, bound)
        params.append((w, b))
    return params


def prepare_params(params):
    """One-time prep: pad w1 rows 429->512, cast weights to bf16, keep f32 biases.

    Do this once and reuse across calls (serving loop) so the cast/pad is not
    repeated per forward pass.
    """
    (w1, b1) = params[0]
    w1p = jnp.pad(w1, ((0, D_IN_PAD - D_IN), (0, 0)))
    prepped = [(w1p.astype(jnp.bfloat16), b1)]
    for w, b in params[1:]:
        prepped.append((w.astype(jnp.bfloat16), b))
    return prepped


def reference_forward(x, prep_params):
    """Pure-JAX reference mirroring the kernel's bf16-input / f32-accum numerics."""
    h = jnp.pad(x, ((0, 0), (0, D_IN_PAD - D_IN))).astype(jnp.bfloat16)
    n = len(prep_params)
    for i, (w, b) in enumerate(prep_params):
        h = jnp.dot(h, w, preferred_element_type=jnp.float32) + b
        if i < n - 1:
            h = jax.nn.sigmoid(h).astype(jnp.bfloat16)
    return h


if __name__ == "__main__":
    key = jax.random.PRNGKey(0)
    key, kx = jax.random.split(key)

    batch = 8
    x = jax.random.normal(kx, (batch, D_IN), jnp.float32)

    params = init_params(key)
    prep = prepare_params(params)

    out = classifier_forward(x, prep)
    out = jax.block_until_ready(out)

    ref = reference_forward(x, prep)
    assert out.shape == (batch, D_OUT), out.shape
    max_err = float(jnp.max(jnp.abs(out - ref)))
    assert max_err < 5e-3, max_err

    print("KERNEL_OK")
</pallas_src>

<mosaic_0001>
module attributes {stable_mosaic.version = 11 : i64} {
  func.func @_mlp_kernel(%arg0: i32, %arg1: memref<8x512xbf16, #tpu.memory_space<vmem>>, %arg2: memref<512x1024xbf16, #tpu.memory_space<vmem>>, %arg3: memref<1x1024xf32, #tpu.memory_space<vmem>>, %arg4: memref<1024x512xbf16, #tpu.memory_space<vmem>>, %arg5: memref<1x512xf32, #tpu.memory_space<vmem>>, %arg6: memref<512x128xbf16, #tpu.memory_space<vmem>>, %arg7: memref<1x128xf32, #tpu.memory_space<vmem>>, %arg8: memref<128x39xbf16, #tpu.memory_space<vmem>>, %arg9: memref<1x39xf32, #tpu.memory_space<vmem>>, %arg10: memref<8x39xf32, #tpu.memory_space<vmem>>) attributes {dimension_semantics = [#tpu.dimension_semantics<parallel>], iteration_bounds = array<i64: 1>, scalar_prefetch = 0 : i64, scratch_operands = 0 : i64, tpu.core_type = #tpu.core_type<tc>, window_params = [{transform_indices = @transform_0, window_bounds = array<i64: 8, 512>}, {pipeline_mode = #tpu.pipeline_mode<synchronous>, transform_indices = @transform_1, window_bounds = array<i64: 512, 1024>}, {pipeline_mode = #tpu.pipeline_mode<synchronous>, transform_indices = @transform_2, window_bounds = array<i64: 1, 1024>}, {pipeline_mode = #tpu.pipeline_mode<synchronous>, transform_indices = @transform_3, window_bounds = array<i64: 1024, 512>}, {pipeline_mode = #tpu.pipeline_mode<synchronous>, transform_indices = @transform_4, window_bounds = array<i64: 1, 512>}, {pipeline_mode = #tpu.pipeline_mode<synchronous>, transform_indices = @transform_5, window_bounds = array<i64: 512, 128>}, {pipeline_mode = #tpu.pipeline_mode<synchronous>, transform_indices = @transform_6, window_bounds = array<i64: 1, 128>}, {pipeline_mode = #tpu.pipeline_mode<synchronous>, transform_indices = @transform_7, window_bounds = array<i64: 128, 39>}, {pipeline_mode = #tpu.pipeline_mode<synchronous>, transform_indices = @transform_8, window_bounds = array<i64: 1, 39>}, {transform_indices = @transform_9, window_bounds = array<i64: 8, 39>}]} {
    %c0 = arith.constant 0 : index
    %c0_0 = arith.constant 0 : index
    %0 = vector.load %arg1[%c0, %c0_0] : memref<8x512xbf16, #tpu.memory_space<vmem>>, vector<8x512xbf16>
    %c0_1 = arith.constant 0 : index
    %c0_2 = arith.constant 0 : index
    %1 = vector.load %arg2[%c0_1, %c0_2] : memref<512x1024xbf16, #tpu.memory_space<vmem>>, vector<512x1024xbf16>
    %cst = arith.constant dense<0.000000e+00> : vector<8x1024xf32>
    %2 = tpu.matmul %0, %1, %cst {dimension_numbers = #tpu.dot_dimension_numbers<[1], [0], [0], [1], [0, 0, 1, 1], [], []>} : vector<8x512xbf16>, vector<512x1024xbf16>, vector<8x1024xf32> -> vector<8x1024xf32>
    %c0_3 = arith.constant 0 : index
    %c0_4 = arith.constant 0 : index
    %3 = vector.load %arg3[%c0_3, %c0_4] : memref<1x1024xf32, #tpu.memory_space<vmem>>, vector<1x1024xf32>
    %4 = vector.broadcast %3 : vector<1x1024xf32> to vector<8x1024xf32>
    %5 = arith.addf %2, %4 : vector<8x1024xf32>
    %6 = arith.negf %5 : vector<8x1024xf32>
    %7 = math.exp %6 : vector<8x1024xf32>
    %cst_5 = arith.constant 1.000000e+00 : f32
    %8 = vector.broadcast %cst_5 : f32 to vector<8x1024xf32>
    %9 = arith.addf %8, %7 : vector<8x1024xf32>
    %10 = arith.divf %8, %9 : vector<8x1024xf32>
    %11 = arith.truncf %10 : vector<8x1024xf32> to vector<8x1024xbf16>
    %c0_6 = arith.constant 0 : index
    %c0_7 = arith.constant 0 : index
    %12 = vector.load %arg4[%c0_6, %c0_7] : memref<1024x512xbf16, #tpu.memory_space<vmem>>, vector<1024x512xbf16>
    %cst_8 = arith.constant dense<0.000000e+00> : vector<8x512xf32>
    %13 = tpu.matmul %11, %12, %cst_8 {dimension_numbers = #tpu.dot_dimension_numbers<[1], [0], [0], [1], [0, 0, 1, 1], [], []>} : vector<8x1024xbf16>, vector<1024x512xbf16>, vector<8x512xf32> -> vector<8x512xf32>
    %c0_9 = arith.constant 0 : index
    %c0_10 = arith.constant 0 : index
    %14 = vector.load %arg5[%c0_9, %c0_10] : memref<1x512xf32, #tpu.memory_space<vmem>>, vector<1x512xf32>
    %15 = vector.broadcast %14 : vector<1x512xf32> to vector<8x512xf32>
    %16 = arith.addf %13, %15 : vector<8x512xf32>
    %17 = arith.negf %16 : vector<8x512xf32>
    %18 = math.exp %17 : vector<8x512xf32>
    %cst_11 = arith.constant 1.000000e+00 : f32
    %19 = vector.broadcast %cst_11 : f32 to vector<8x512xf32>
    %20 = arith.addf %19, %18 : vector<8x512xf32>
    %21 = arith.divf %19, %20 : vector<8x512xf32>
    %22 = arith.truncf %21 : vector<8x512xf32> to vector<8x512xbf16>
    %c0_12 = arith.constant 0 : index
    %c0_13 = arith.constant 0 : index
    %23 = vector.load %arg6[%c0_12, %c0_13] : memref<512x128xbf16, #tpu.memory_space<vmem>>, vector<512x128xbf16>
    %cst_14 = arith.constant dense<0.000000e+00> : vector<8x128xf32>
    %24 = tpu.matmul %22, %23, %cst_14 {dimension_numbers = #tpu.dot_dimension_numbers<[1], [0], [0], [1], [0, 0, 1, 1], [], []>} : vector<8x512xbf16>, vector<512x128xbf16>, vector<8x128xf32> -> vector<8x128xf32>
    %c0_15 = arith.constant 0 : index
    %c0_16 = arith.constant 0 : index
    %25 = vector.load %arg7[%c0_15, %c0_16] : memref<1x128xf32, #tpu.memory_space<vmem>>, vector<1x128xf32>
    %26 = vector.broadcast %25 : vector<1x128xf32> to vector<8x128xf32>
    %27 = arith.addf %24, %26 : vector<8x128xf32>
    %28 = arith.negf %27 : vector<8x128xf32>
    %29 = math.exp %28 : vector<8x128xf32>
    %cst_17 = arith.constant 1.000000e+00 : f32
    %30 = vector.broadcast %cst_17 : f32 to vector<8x128xf32>
    %31 = arith.addf %30, %29 : vector<8x128xf32>
    %32 = arith.divf %30, %31 : vector<8x128xf32>
    %33 = arith.truncf %32 : vector<8x128xf32> to vector<8x128xbf16>
    %c0_18 = arith.constant 0 : index
    %c0_19 = arith.constant 0 : index
    %34 = vector.load %arg8[%c0_18, %c0_19] : memref<128x39xbf16, #tpu.memory_space<vmem>>, vector<128x39xbf16>
    %cst_20 = arith.constant dense<0.000000e+00> : vector<8x39xf32>
    %35 = tpu.matmul %33, %34, %cst_20 {dimension_numbers = #tpu.dot_dimension_numbers<[1], [0], [0], [1], [0, 0, 1, 1], [], []>} : vector<8x128xbf16>, vector<128x39xbf16>, vector<8x39xf32> -> vector<8x39xf32>
    %c0_21 = arith.constant 0 : index
    %c0_22 = arith.constant 0 : index
    %36 = vector.load %arg9[%c0_21, %c0_22] : memref<1x39xf32, #tpu.memory_space<vmem>>, vector<1x39xf32>
    %37 = vector.broadcast %36 : vector<1x39xf32> to vector<8x39xf32>
    %38 = arith.addf %35, %37 : vector<8x39xf32>
    %c0_23 = arith.constant 0 : index
    %c0_24 = arith.constant 0 : index
    %39 = vector.load %arg10[%c0_23, %c0_24] : memref<8x39xf32, #tpu.memory_space<vmem>>, vector<8x39xf32>
    tpu.vector_store %arg10[%c0_23, %c0_24], %38 {strides = array<i32>} : memref<8x39xf32, #tpu.memory_space<vmem>>, vector<8x39xf32>,
    return
  }
  func.func @transform_0(%arg0: i32) -> (i32, i32) {
    %c0_i32 = arith.constant 0 : i32
    %c0_i32_0 = arith.constant 0 : i32
    return %arg0, %c0_i32 : i32, i32
  }
  func.func @transform_1(%arg0: i32) -> (i32, i32) {
    %c0_i32 = arith.constant 0 : i32
    %c0_i32_0 = arith.constant 0 : i32
    %c0_i32_1 = arith.constant 0 : i32
    return %c0_i32, %c0_i32_0 : i32, i32
  }
  func.func @transform_2(%arg0: i32) -> (i32, i32) {
    %c0_i32 = arith.constant 0 : i32
    %c0_i32_0 = arith.constant 0 : i32
    %c0_i32_1 = arith.constant 0 : i32
    return %c0_i32, %c0_i32_0 : i32, i32
  }
  func.func @transform_3(%arg0: i32) -> (i32, i32) {
    %c0_i32 = arith.constant 0 : i32
    %c0_i32_0 = arith.constant 0 : i32
    %c0_i32_1 = arith.constant 0 : i32
    return %c0_i32, %c0_i32_0 : i32, i32
  }
  func.func @transform_4(%arg0: i32) -> (i32, i32) {
    %c0_i32 = arith.constant 0 : i32
    %c0_i32_0 = arith.constant 0 : i32
    %c0_i32_1 = arith.constant 0 : i32
    return %c0_i32, %c0_i32_0 : i32, i32
  }
  func.func @transform_5(%arg0: i32) -> (i32, i32) {
    %c0_i32 = arith.constant 0 : i32
    %c0_i32_0 = arith.constant 0 : i32
    %c0_i32_1 = arith.constant 0 : i32
    return %c0_i32, %c0_i32_0 : i32, i32
  }
  func.func @transform_6(%arg0: i32) -> (i32, i32) {
    %c0_i32 = arith.constant 0 : i32
    %c0_i32_0 = arith.constant 0 : i32
    %c0_i32_1 = arith.constant 0 : i32
    return %c0_i32, %c0_i32_0 : i32, i32
  }
  func.func @transform_7(%arg0: i32) -> (i32, i32) {
    %c0_i32 = arith.constant 0 : i32
    %c0_i32_0 = arith.constant 0 : i32
    %c0_i32_1 = arith.constant 0 : i32
    return %c0_i32, %c0_i32_0 : i32, i32
  }
  func.func @transform_8(%arg0: i32) -> (i32, i32) {
    %c0_i32 = arith.constant 0 : i32
    %c0_i32_0 = arith.constant 0 : i32
    %c0_i32_1 = arith.constant 0 : i32
    return %c0_i32, %c0_i32_0 : i32, i32
  }
  func.func @transform_9(%arg0: i32) -> (i32, i32) {
    %c0_i32 = arith.constant 0 : i32
    %c0_i32_0 = arith.constant 0 : i32
    return %arg0, %c0_i32 : i32, i32
  }
}

</mosaic_0001>

<llo_original>
// kernel: classifier_forward.1
$region0: #{classifier_forward.1}
  #allocation0 [shape = 'u32[]', space=smem, size = 0x4, offset = 0x4, fixed_abs, tag = 'smem constant byte address 0x4 - core index']
  #allocation1 [shape = 'u32[144,128]{1,0:T(1,128)}', space=vmem, size = 0x12000, scoped, tag = 'internal scratch']
  %s0 = inlined_call_operand.vmem [shape: bf16[8,512], index: 0, kind: input, shape index: {}]
  %s1 = inlined_call_operand.hbm [shape: bf16[512,1024], index: 1, kind: input, shape index: {}]
  %s2 = inlined_call_operand.vmem [shape: f32[1,1024], index: 2, kind: input, shape index: {}]
  %s3 = inlined_call_operand.hbm [shape: bf16[1024,512], index: 3, kind: input, shape index: {}]
  %s4 = inlined_call_operand.vmem [shape: f32[1,512], index: 4, kind: input, shape index: {}]
  %s5 = inlined_call_operand.hbm [shape: bf16[512,128], index: 5, kind: input, shape index: {}]
  %s6 = inlined_call_operand.vmem [shape: f32[1,128], index: 6, kind: input, shape index: {}]
  %s7 = inlined_call_operand.vmem [shape: bf16[128,39], index: 7, kind: input, shape index: {}]
  %s8 = inlined_call_operand.vmem [shape: f32[1,39], index: 8, kind: input, shape index: {}]
  %s9 = inlined_call_operand.hbm [shape: f32[8,39], index: 9, kind: output, shape index: {}]
  %s10 = sld [smem:[#allocation0]]
  $region58: #{classifier_forward.1} parent=0
    _
  %s12 = ssub.s32 1, %s10
  %s13 = scalar_select 0, %s12, %s10
  $region1: #{classifier_forward.1} parent=0
    #allocation2 [shape = 'u8[1048576]{0}', space=vmem, size = 0x100000, scoped, tag = 'input window, operand 1, single buffered']
    #allocation3 [shape = 's32[1]{0}', space=sflag, size = 0x4, scoped, tag = 'scoped memory for classifier_forward.1']
    #allocation4 [shape = 's32[1]{0}', space=sflag, size = 0x4, scoped, tag = 'scoped memory for classifier_forward.1']
    #allocation5 [shape = 'u8[1048576]{0}', space=vmem, size = 0x100000, scoped, tag = 'input window, operand 3, single buffered']
    #allocation6 [shape = 's32[1]{0}', space=sflag, size = 0x4, scoped, tag = 'scoped memory for classifier_forward.1']
    #allocation7 [shape = 'u8[131072]{0}', space=vmem, size = 0x20000, scoped, tag = 'input window, operand 5, single buffered']
    #allocation8 [shape = 'u8[4096]{0}', space=vmem, size = 0x1000, scoped, tag = 'output window, operand 0, single buffered']
    %14 = vsyncpa [#allocation3], 0
    %15 = vsyncpa [#allocation6], 0
    %16 = vsyncpa [#allocation4], 0
    // Predicated region
    $region2: #{classifier_forward.1} parent=1 // pred_check
      _
    $region3: #{classifier_forward.1} parent=1 // pred_check_branch
      %18 = sbr.rel (0) target = $region5
    $region4: #{classifier_forward.1} parent=1 // pred_region
      _
    $region5: #{classifier_forward.1} parent=1 // pred_fallthru
      _
    // Predicated region
    $region6: #{classifier_forward.1} parent=1 // pred_check
      _
    $region7: #{classifier_forward.1} parent=1 // pred_check_branch
      %20 = sbr.rel (0) target = $region9
    $region8: #{classifier_forward.1} parent=1 // pred_region
      %s22 = ssub.s32 32768, 32768
      %23 = vsyncadd [#allocation3], %s22
      %s24 = sshll.u32 [#allocation2], 4
      %s25 = int_to_ptr.vmem [resolvable:$true] %s24
      %30 = dma.hbm_to_vmem [thread:$0]  %s1, 32768, %s25, [#allocation3], 512, 512, 32
    $region9: #{classifier_forward.1} parent=1 // pred_fallthru
      _
    // Predicated region
    $region10: #{classifier_forward.1} parent=1 // pred_check
      _
    $region11: #{classifier_forward.1} parent=1 // pred_check_branch
      %32 = sbr.rel (0) target = $region13
    $region12: #{classifier_forward.1} parent=1 // pred_region
      _
    $region13: #{classifier_forward.1} parent=1 // pred_fallthru
      _
    // Predicated region
    $region14: #{classifier_forward.1} parent=1 // pred_check
      _
    $region15: #{classifier_forward.1} parent=1 // pred_check_branch
      %34 = sbr.rel (0) target = $region17
    $region16: #{classifier_forward.1} parent=1 // pred_region
      %s36 = ssub.s32 32768, 32768
      %37 = vsyncadd [#allocation6], %s36
      %s38 = sshll.u32 [#allocation5], 4
      %s39 = int_to_ptr.vmem [resolvable:$true] %s38
      %44 = dma.hbm_to_vmem [thread:$0]  %s3, 32768, %s39, [#allocation6], 256, 256, 16
    $region17: #{classifier_forward.1} parent=1 // pred_fallthru
      _
    // Predicated region
    $region18: #{classifier_forward.1} parent=1 // pred_check
      _
    $region19: #{classifier_forward.1} parent=1 // pred_check_branch
      %46 = sbr.rel (0) target = $region21
    $region20: #{classifier_forward.1} parent=1 // pred_region
      _
    $region21: #{classifier_forward.1} parent=1 // pred_fallthru
      _
    // Predicated region
    $region22: #{classifier_forward.1} parent=1 // pred_check
      _
    $region23: #{classifier_forward.1} parent=1 // pred_check_branch
      %48 = sbr.rel (0) target = $region25
    $region24: #{classifier_forward.1} parent=1 // pred_region
      %s50 = ssub.s32 4096, 4096
      %51 = vsyncadd [#allocation6], %s50
      %s52 = sshll.u32 [#allocation7], 4
      %s53 = int_to_ptr.vmem [resolvable:$true] %s52
      %58 = dma.hbm_to_vmem [thread:$0]  %s5, 4096, %s53, [#allocation6], 64, 64, 4
    $region25: #{classifier_forward.1} parent=1 // pred_fallthru
      _
    // Predicated region
    $region26: #{classifier_forward.1} parent=1 // pred_check
      _
    $region27: #{classifier_forward.1} parent=1 // pred_check_branch
      %60 = sbr.rel (0) target = $region29
    $region28: #{classifier_forward.1} parent=1 // pred_region
      _
    $region29: #{classifier_forward.1} parent=1 // pred_fallthru
      _
    // Predicated region
    $region30: #{classifier_forward.1} parent=1 // pred_check
      _
    $region31: #{classifier_forward.1} parent=1 // pred_check_branch
      %62 = sbr.rel (0) target = $region33
    $region32: #{classifier_forward.1} parent=1 // pred_region
      _
    $region33: #{classifier_forward.1} parent=1 // pred_fallthru
      _
    // Predicated region
    $region34: #{classifier_forward.1} parent=1 // pred_check
      _
    $region35: #{classifier_forward.1} parent=1 // pred_check_branch
      %64 = sbr.rel (0) target = $region37
    $region36: #{classifier_forward.1} parent=1 // pred_region
      _
    $region37: #{classifier_forward.1} parent=1 // pred_fallthru
      _
    // Predicated region
    $region38: #{classifier_forward.1} parent=1 // pred_check
      _
    $region39: #{classifier_forward.1} parent=1 // pred_check_branch
      %66 = sbr.rel (0) target = $region41
    $region40: #{classifier_forward.1} parent=1 // pred_region
      %67 = dma.done [#allocation3], 32768
    $region41: #{classifier_forward.1} parent=1 // pred_fallthru
      _
    // Predicated region
    $region42: #{classifier_forward.1} parent=1 // pred_check
      _
    $region43: #{classifier_forward.1} parent=1 // pred_check_branch
      %69 = sbr.rel (0) target = $region45
    $region44: #{classifier_forward.1} parent=1 // pred_region
      %70 = dma.done [#allocation6], 32768
    $region45: #{classifier_forward.1} parent=1 // pred_fallthru
      _
    // Predicated region
    $region46: #{classifier_forward.1} parent=1 // pred_check
      _
    $region47: #{classifier_forward.1} parent=1 // pred_check_branch
      %72 = sbr.rel (0) target = $region49
    $region48: #{classifier_forward.1} parent=1 // pred_region
      %73 = dma.done [#allocation6], 4096
    $region49: #{classifier_forward.1} parent=1 // pred_fallthru
      _
    %v75 = vld [vmem:[%s0] sm:$0xff]
    %v76 = vld [vmem:[%s0 + $0x8] sm:$0xff]
    %v77 = vld [vmem:[#allocation2] sm:$0xff]
    %v78 = vld [vmem:[#allocation2 + $0x8] sm:$0xff]
    %v79 = vld [vmem:[#allocation2 + $0x10] sm:$0xff]
    %v80 = vld [vmem:[#allocation2 + $0x18] sm:$0xff]
    %v81 = vld [vmem:[#allocation2 + $0x20] sm:$0xff]
    %v82 = vld [vmem:[#allocation2 + $0x28] sm:$0xff]
    %v83 = vld [vmem:[#allocation2 + $0x30] sm:$0xff]
    %v84 = vld [vmem:[#allocation2 + $0x38] sm:$0xff]
    %v85 = vld [vmem:[#allocation2 + $0x40] sm:$0xff]
    %v86 = vld [vmem:[#allocation2 + $0x48] sm:$0xff]
    %v87 = vld [vmem:[#allocation2 + $0x50] sm:$0xff]
    %v88 = vld [vmem:[#allocation2 + $0x58] sm:$0xff]
    %v89 = vld [vmem:[#allocation2 + $0x60] sm:$0xff]
    %v90 = vld [vmem:[#allocation2 + $0x68] sm:$0xff]
    %v91 = vld [vmem:[#allocation2 + $0x70] sm:$0xff]
    %v92 = vld [vmem:[#allocation2 + $0x78] sm:$0xff]
    %v93 = vld [vmem:[#allocation2 + $0x80] sm:$0xff]
    %v94 = vld [vmem:[#allocation2 + $0x88] sm:$0xff]
    %v95 = vld [vmem:[#allocation2 + $0x90] sm:$0xff]
    %v96 = vld [vmem:[#allocation2 + $0x98] sm:$0xff]
    %v97 = vld [vmem:[#allocation2 + $0xa0] sm:$0xff]
    %v98 = vld [vmem:[#allocation2 + $0xa8] sm:$0xff]
    %v99 = vld [vmem:[#allocation2 + $0xb0] sm:$0xff]
    %v100 = vld [vmem:[#allocation2 + $0xb8] sm:$0xff]
    %v101 = vld [vmem:[#allocation2 + $0xc0] sm:$0xff]
    %v102 = vld [vmem:[#allocation2 + $0xc8] sm:$0xff]
    %v103 = vld [vmem:[#allocation2 + $0xd0] sm:$0xff]
    %v104 = vld [vmem:[#allocation2 + $0xd8] sm:$0xff]
    %v105 = vld [vmem:[#allocation2 + $0xe0] sm:$0xff]
    %v106 = vld [vmem:[#allocation2 + $0xe8] sm:$0xff]
    %v107 = vld [vmem:[#allocation2 + $0xf0] sm:$0xff]
    %v108 = vld [vmem:[#allocation2 + $0xf8] sm:$0xff]
    %v109 = vld [vmem:[#allocation2 + $0x100] sm:$0xff]
    %v110 = vld [vmem:[#allocation2 + $0x108] sm:$0xff]
    %v111 = vld [vmem:[#allocation2 + $0x110] sm:$0xff]
    %v112 = vld [vmem:[#allocation2 + $0x118] sm:$0xff]
    %v113 = vld [vmem:[#allocation2 + $0x120] sm:$0xff]
    %v114 = vld [vmem:[#allocation2 + $0x128] sm:$0xff]
    %v115 = vld [vmem:[#allocation2 + $0x130] sm:$0xff]
    %v116 = vld [vmem:[#allocation2 + $0x138] sm:$0xff]
    %v117 = vld [vmem:[#allocation2 + $0x140] sm:$0xff]
    %v118 = vld [vmem:[#allocation2 + $0x148] sm:$0xff]
    %v119 = vld [vmem:[#allocation2 + $0x150] sm:$0xff]
    %v120 = vld [vmem:[#allocation2 + $0x158] sm:$0xff]
    %v121 = vld [vmem:[#allocation2 + $0x160] sm:$0xff]
    %v122 = vld [vmem:[#allocation2 + $0x168] sm:$0xff]
    %v123 = vld [vmem:[#allocation2 + $0x170] sm:$0xff]
    %v124 = vld [vmem:[#allocation2 + $0x178] sm:$0xff]
    %v125 = vld [vmem:[#allocation2 + $0x180] sm:$0xff]
    %v126 = vld [vmem:[#allocation2 + $0x188] sm:$0xff]
    %v127 = vld [vmem:[#allocation2 + $0x190] sm:$0xff]
    %v128 = vld [vmem:[#allocation2 + $0x198] sm:$0xff]
    %v129 = vld [vmem:[#allocation2 + $0x1a0] sm:$0xff]
    %v130 = vld [vmem:[#allocation2 + $0x1a8] sm:$0xff]
    %v131 = vld [vmem:[#allocation2 + $0x1b0] sm:$0xff]
    %v132 = vld [vmem:[#allocation2 + $0x1b8] sm:$0xff]
    %v133 = vld [vmem:[#allocation2 + $0x1c0] sm:$0xff]
    %v134 = vld [vmem:[#allocation2 + $0x1c8] sm:$0xff]
    %v135 = vld [vmem:[#allocation2 + $0x1d0] sm:$0xff]
    %v136 = vld [vmem:[#allocation2 + $0x1d8] sm:$0xff]
    %v137 = vld [vmem:[#allocation2 + $0x1e0] sm:$0xff]
    %v138 = vld [vmem:[#allocation2 + $0x1e8] sm:$0xff]
    %v139 = vld [vmem:[#allocation2 + $0x1f0] sm:$0xff]
    %v140 = vld [vmem:[#allocation2 + $0x1f8] sm:$0xff]
    %v141 = vld [vmem:[#allocation2 + $0x200] sm:$0xff]
    %v142 = vld [vmem:[#allocation2 + $0x208] sm:$0xff]
    %v143 = vld [vmem:[#allocation2 + $0x210] sm:$0xff]
    %v144 = vld [vmem:[#allocation2 + $0x218] sm:$0xff]
    %v145 = vld [vmem:[#allocation2 + $0x220] sm:$0xff]
    %v146 = vld [vmem:[#allocation2 + $0x228] sm:$0xff]
    %v147 = vld [vmem:[#allocation2 + $0x230] sm:$0xff]
    %v148 = vld [vmem:[#allocation2 + $0x238] sm:$0xff]
    %v149 = vld [vmem:[#allocation2 + $0x240] sm:$0xff]
    %v150 = vld [vmem:[#allocation2 + $0x248] sm:$0xff]
    %v151 = vld [vmem:[#allocation2 + $0x250] sm:$0xff]
    %v152 = vld [vmem:[#allocation2 + $0x258] sm:$0xff]
    %v153 = vld [vmem:[#allocation2 + $0x260] sm:$0xff]
    %v154 = vld [vmem:[#allocation2 + $0x268] sm:$0xff]
    %v155 = vld [vmem:[#allocation2 + $0x270] sm:$0xff]
    %v156 = vld [vmem:[#allocation2 + $0x278] sm:$0xff]
    %v157 = vld [vmem:[#allocation2 + $0x280] sm:$0xff]
    %v158 = vld [vmem:[#allocation2 + $0x288] sm:$0xff]
    %v159 = vld [vmem:[#allocation2 + $0x290] sm:$0xff]
    %v160 = vld [vmem:[#allocation2 + $0x298] sm:$0xff]
    %v161 = vld [vmem:[#allocation2 + $0x2a0] sm:$0xff]
    %v162 = vld [vmem:[#allocation2 + $0x2a8] sm:$0xff]
    %v163 = vld [vmem:[#allocation2 + $0x2b0] sm:$0xff]
    %v164 = vld [vmem:[#allocation2 + $0x2b8] sm:$0xff]
    %v165 = vld [vmem:[#allocation2 + $0x2c0] sm:$0xff]
    %v166 = vld [vmem:[#allocation2 + $0x2c8] sm:$0xff]
    %v167 = vld [vmem:[#allocation2 + $0x2d0] sm:$0xff]
    %v168 = vld [vmem:[#allocation2 + $0x2d8] sm:$0xff]
    %v169 = vld [vmem:[#allocation2 + $0x2e0] sm:$0xff]
    %v170 = vld [vmem:[#allocation2 + $0x2e8] sm:$0xff]
    %v171 = vld [vmem:[#allocation2 + $0x2f0] sm:$0xff]
    %v172 = vld [vmem:[#allocation2 + $0x2f8] sm:$0xff]
    %v173 = vld [vmem:[#allocation2 + $0x300] sm:$0xff]
    %v174 = vld [vmem:[#allocation2 + $0x308] sm:$0xff]
    %v175 = vld [vmem:[#allocation2 + $0x310] sm:$0xff]
    %v176 = vld [vmem:[#allocation2 + $0x318] sm:$0xff]
    %v177 = vld [vmem:[#allocation2 + $0x320] sm:$0xff]
    %v178 = vld [vmem:[#allocation2 + $0x328] sm:$0xff]
    %v179 = vld [vmem:[#allocation2 + $0x330] sm:$0xff]
    %v180 = vld [vmem:[#allocation2 + $0x338] sm:$0xff]
    %v181 = vld [vmem:[#allocation2 + $0x340] sm:$0xff]
    %v182 = vld [vmem:[#allocation2 + $0x348] sm:$0xff]
    %v183 = vld [vmem:[#allocation2 + $0x350] sm:$0xff]
    %v184 = vld [vmem:[#allocation2 + $0x358] sm:$0xff]
    %v185 = vld [vmem:[#allocation2 + $0x360] sm:$0xff]
    %v186 = vld [vmem:[#allocation2 + $0x368] sm:$0xff]
    %v187 = vld [vmem:[#allocation2 + $0x370] sm:$0xff]
    %v188 = vld [vmem:[#allocation2 + $0x378] sm:$0xff]
    %v189 = vld [vmem:[#allocation2 + $0x380] sm:$0xff]
    %v190 = vld [vmem:[#allocation2 + $0x388] sm:$0xff]
    %v191 = vld [vmem:[#allocation2 + $0x390] sm:$0xff]
    %v192 = vld [vmem:[#allocation2 + $0x398] sm:$0xff]
    %v193 = vld [vmem:[#allocation2 + $0x3a0] sm:$0xff]
    %v194 = vld [vmem:[#allocation2 + $0x3a8] sm:$0xff]
    %v195 = vld [vmem:[#allocation2 + $0x3b0] sm:$0xff]
    %v196 = vld [vmem:[#allocation2 + $0x3b8] sm:$0xff]
    %v197 = vld [vmem:[#allocation2 + $0x3c0] sm:$0xff]
    %v198 = vld [vmem:[#allocation2 + $0x3c8] sm:$0xff]
    %v199 = vld [vmem:[#allocation2 + $0x3d0] sm:$0xff]
    %v200 = vld [vmem:[#allocation2 + $0x3d8] sm:$0xff]
    %v201 = vld [vmem:[#allocation2 + $0x3e0] sm:$0xff]
    %v202 = vld [vmem:[#allocation2 + $0x3e8] sm:$0xff]
    %v203 = vld [vmem:[#allocation2 + $0x3f0] sm:$0xff]
    %v204 = vld [vmem:[#allocation2 + $0x3f8] sm:$0xff]
    %v205 = vld [vmem:[#allocation2 + $0x400] sm:$0xff]
    %v206 = vld [vmem:[#allocation2 + $0x408] sm:$0xff]
    %v207 = vld [vmem:[#allocation2 + $0x410] sm:$0xff]
    %v208 = vld [vmem:[#allocation2 + $0x418] sm:$0xff]
    %v209 = vld [vmem:[#allocation2 + $0x420] sm:$0xff]
    %v210 = vld [vmem:[#allocation2 + $0x428] sm:$0xff]
    %v211 = vld [vmem:[#allocation2 + $0x430] sm:$0xff]
    %v212 = vld [vmem:[#allocation2 + $0x438] sm:$0xff]
    %v213 = vld [vmem:[#allocation2 + $0x440] sm:$0xff]
    %v214 = vld [vmem:[#allocation2 + $0x448] sm:$0xff]
    %v215 = vld [vmem:[#allocation2 + $0x450] sm:$0xff]
    %v216 = vld [vmem:[#allocation2 + $0x458] sm:$0xff]
    %v217 = vld [vmem:[#allocation2 + $0x460] sm:$0xff]
    %v218 = vld [vmem:[#allocation2 + $0x468] sm:$0xff]
    %v219 = vld [vmem:[#allocation2 + $0x470] sm:$0xff]
    %v220 = vld [vmem:[#allocation2 + $0x478] sm:$0xff]
    %v221 = vld [vmem:[#allocation2 + $0x480] sm:$0xff]
    %v222 = vld [vmem:[#allocation2 + $0x488] sm:$0xff]
    %v223 = vld [vmem:[#allocation2 + $0x490] sm:$0xff]
    %v224 = vld [vmem:[#allocation2 + $0x498] sm:$0xff]
    %v225 = vld [vmem:[#allocation2 + $0x4a0] sm:$0xff]
    %v226 = vld [vmem:[#allocation2 + $0x4a8] sm:$0xff]
    %v227 = vld [vmem:[#allocation2 + $0x4b0] sm:$0xff]
    %v228 = vld [vmem:[#allocation2 + $0x4b8] sm:$0xff]
    %v229 = vld [vmem:[#allocation2 + $0x4c0] sm:$0xff]
    %v230 = vld [vmem:[#allocation2 + $0x4c8] sm:$0xff]
    %v231 = vld [vmem:[#allocation2 + $0x4d0] sm:$0xff]
    %v232 = vld [vmem:[#allocation2 + $0x4d8] sm:$0xff]
    %v233 = vld [vmem:[#allocation2 + $0x4e0] sm:$0xff]
    %v234 = vld [vmem:[#allocation2 + $0x4e8] sm:$0xff]
    %v235 = vld [vmem:[#allocation2 + $0x4f0] sm:$0xff]
    %v236 = vld [vmem:[#allocation2 + $0x4f8] sm:$0xff]
    %v237 = vld [vmem:[#allocation2 + $0x500] sm:$0xff]
    %v238 = vld [vmem:[#allocation2 + $0x508] sm:$0xff]
    %v239 = vld [vmem:[#allocation2 + $0x510] sm:$0xff]
    %v240 = vld [vmem:[#allocation2 + $0x518] sm:$0xff]
    %v241 = vld [vmem:[#allocation2 + $0x520] sm:$0xff]
    %v242 = vld [vmem:[#allocation2 + $0x528] sm:$0xff]
    %v243 = vld [vmem:[#allocation2 + $0x530] sm:$0xff]
    %v244 = vld [vmem:[#allocation2 + $0x538] sm:$0xff]
    %v245 = vld [vmem:[#allocation2 + $0x540] sm:$0xff]
    %v246 = vld [vmem:[#allocation2 + $0x548] sm:$0xff]
    %v247 = vld [vmem:[#allocation2 + $0x550] sm:$0xff]
    %v248 = vld [vmem:[#allocation2 + $0x558] sm:$0xff]
    %v249 = vld [vmem:[#allocation2 + $0x560] sm:$0xff]
    %v250 = vld [vmem:[#allocation2 + $0x568] sm:$0xff]
    %v251 = vld [vmem:[#allocation2 + $0x570] sm:$0xff]
    %v252 = vld [vmem:[#allocation2 + $0x578] sm:$0xff]
    %v253 = vld [vmem:[#allocation2 + $0x580] sm:$0xff]
    %v254 = vld [vmem:[#allocation2 + $0x588] sm:$0xff]
    %v255 = vld [vmem:[#allocation2 + $0x590] sm:$0xff]
    %v256 = vld [vmem:[#allocation2 + $0x598] sm:$0xff]
    %v257 = vld [vmem:[#allocation2 + $0x5a0] sm:$0xff]
    %v258 = vld [vmem:[#allocation2 + $0x5a8] sm:$0xff]
    %v259 = vld [vmem:[#allocation2 + $0x5b0] sm:$0xff]
    %v260 = vld [vmem:[#allocation2 + $0x5b8] sm:$0xff]
    %v261 = vld [vmem:[#allocation2 + $0x5c0] sm:$0xff]
    %v262 = vld [vmem:[#allocation2 + $0x5c8] sm:$0xff]
    %v263 = vld [vmem:[#allocation2 + $0x5d0] sm:$0xff]
    %v264 = vld [vmem:[#allocation2 + $0x5d8] sm:$0xff]
    %v265 = vld [vmem:[#allocation2 + $0x5e0] sm:$0xff]
    %v266 = vld [vmem:[#allocation2 + $0x5e8] sm:$0xff]
    %v267 = vld [vmem:[#allocation2 + $0x5f0] sm:$0xff]
    %v268 = vld [vmem:[#allocation2 + $0x5f8] sm:$0xff]
    %v269 = vld [vmem:[#allocation2 + $0x600] sm:$0xff]
    %v270 = vld [vmem:[#allocation2 + $0x608] sm:$0xff]
    %v271 = vld [vmem:[#allocation2 + $0x610] sm:$0xff]
    %v272 = vld [vmem:[#allocation2 + $0x618] sm:$0xff]
    %v273 = vld [vmem:[#allocation2 + $0x620] sm:$0xff]
    %v274 = vld [vmem:[#allocation2 + $0x628] sm:$0xff]
    %v275 = vld [vmem:[#allocation2 + $0x630] sm:$0xff]
    %v276 = vld [vmem:[#allocation2 + $0x638] sm:$0xff]
    %v277 = vld [vmem:[#allocation2 + $0x640] sm:$0xff]
    %v278 = vld [vmem:[#allocation2 + $0x648] sm:$0xff]
    %v279 = vld [vmem:[#allocation2 + $0x650] sm:$0xff]
    %v280 = vld [vmem:[#allocation2 + $0x658] sm:$0xff]
    %v281 = vld [vmem:[#allocation2 + $0x660] sm:$0xff]
    %v282 = vld [vmem:[#allocation2 + $0x668] sm:$0xff]
    %v283 = vld [vmem:[#allocation2 + $0x670] sm:$0xff]
    %v284 = vld [vmem:[#allocation2 + $0x678] sm:$0xff]
    %v285 = vld [vmem:[#allocation2 + $0x680] sm:$0xff]
    %v286 = vld [vmem:[#allocation2 + $0x688] sm:$0xff]
    %v287 = vld [vmem:[#allocation2 + $0x690] sm:$0xff]
    %v288 = vld [vmem:[#allocation2 + $0x698] sm:$0xff]
    %v289 = vld [vmem:[#allocation2 + $0x6a0] sm:$0xff]
    %v290 = vld [vmem:[#allocation2 + $0x6a8] sm:$0xff]
    %v291 = vld [vmem:[#allocation2 + $0x6b0] sm:$0xff]
    %v292 = vld [vmem:[#allocation2 + $0x6b8] sm:$0xff]
    %v293 = vld [vmem:[#allocation2 + $0x6c0] sm:$0xff]
    %v294 = vld [vmem:[#allocation2 + $0x6c8] sm:$0xff]
    %v295 = vld [vmem:[#allocation2 + $0x6d0] sm:$0xff]
    %v296 = vld [vmem:[#allocation2 + $0x6d8] sm:$0xff]
    %v297 = vld [vmem:[#allocation2 + $0x6e0] sm:$0xff]
    %v298 = vld [vmem:[#allocation2 + $0x6e8] sm:$0xff]
    %v299 = vld [vmem:[#allocation2 + $0x6f0] sm:$0xff]
    %v300 = vld [vmem:[#allocation2 + $0x6f8] sm:$0xff]
    %v301 = vld [vmem:[#allocation2 + $0x700] sm:$0xff]
    %v302 = vld [vmem:[#allocation2 + $0x708] sm:$0xff]
    %v303 = vld [vmem:[#allocation2 + $0x710] sm:$0xff]
    %v304 = vld [vmem:[#allocation2 + $0x718] sm:$0xff]
    %v305 = vld [vmem:[#allocation2 + $0x720] sm:$0xff]
    %v306 = vld [vmem:[#allocation2 + $0x728] sm:$0xff]
    %v307 = vld [vmem:[#allocation2 + $0x730] sm:$0xff]
    %v308 = vld [vmem:[#allocation2 + $0x738] sm:$0xff]
    %v309 = vld [vmem:[#allocation2 + $0x740] sm:$0xff]
    %v310 = vld [vmem:[#allocation2 + $0x748] sm:$0xff]
    %v311 = vld [vmem:[#allocation2 + $0x750] sm:$0xff]
    %v312 = vld [vmem:[#allocation2 + $0x758] sm:$0xff]
    %v313 = vld [vmem:[#allocation2 + $0x760] sm:$0xff]
    %v314 = vld [vmem:[#allocation2 + $0x768] sm:$0xff]
    %v315 = vld [vmem:[#allocation2 + $0x770] sm:$0xff]
    %v316 = vld [vmem:[#allocation2 + $0x778] sm:$0xff]
    %v317 = vld [vmem:[#allocation2 + $0x780] sm:$0xff]
    %v318 = vld [vmem:[#allocation2 + $0x788] sm:$0xff]
    %v319 = vld [vmem:[#allocation2 + $0x790] sm:$0xff]
    %v320 = vld [vmem:[#allocation2 + $0x798] sm:$0xff]
    %v321 = vld [vmem:[#allocation2 + $0x7a0] sm:$0xff]
    %v322 = vld [vmem:[#allocation2 + $0x7a8] sm:$0xff]
    %v323 = vld [vmem:[#allocation2 + $0x7b0] sm:$0xff]
    %v324 = vld [vmem:[#allocation2 + $0x7b8] sm:$0xff]
    %v325 = vld [vmem:[#allocation2 + $0x7c0] sm:$0xff]
    %v326 = vld [vmem:[#allocation2 + $0x7c8] sm:$0xff]
    %v327 = vld [vmem:[#allocation2 + $0x7d0] sm:$0xff]
    %v328 = vld [vmem:[#allocation2 + $0x7d8] sm:$0xff]
    %v329 = vld [vmem:[#allocation2 + $0x7e0] sm:$0xff]
    %v330 = vld [vmem:[#allocation2 + $0x7e8] sm:$0xff]
    %v331 = vld [vmem:[#allocation2 + $0x7f0] sm:$0xff]
    %v332 = vld [vmem:[#allocation2 + $0x7f8] sm:$0xff]
    %v333 = vld [vmem:[%s2] sm:$0xff]
    %v335 = vlaneseq
    %v336 = vshrl.u32 %v335, 7
    %v337 = vsub.s32 0, %v336
    %v338 = vrot.slane %v333, %v337
    %v339 = vlaneseq
    %v340 = vshrl.u32 %v339, 7
    %v341 = vsub.s32 1, %v340
    %v342 = vrot.slane %v333, %v341
    %v343 = vlaneseq
    %v344 = vshrl.u32 %v343, 7
    %v345 = vsub.s32 2, %v344
    %v346 = vrot.slane %v333, %v345
    %v347 = vlaneseq
    %v348 = vshrl.u32 %v347, 7
    %v349 = vsub.s32 3, %v348
    %v350 = vrot.slane %v333, %v349
    %v351 = vlaneseq
    %v352 = vshrl.u32 %v351, 7
    %v353 = vsub.s32 4, %v352
    %v354 = vrot.slane %v333, %v353
    %v355 = vlaneseq
    %v356 = vshrl.u32 %v355, 7
    %v357 = vsub.s32 5, %v356
    %v358 = vrot.slane %v333, %v357
    %v359 = vlaneseq
    %v360 = vshrl.u32 %v359, 7
    %v361 = vsub.s32 6, %v360
    %v362 = vrot.slane %v333, %v361
    %v363 = vlaneseq
    %v364 = vshrl.u32 %v363, 7
    %v365 = vsub.s32 7, %v364
    %v366 = vrot.slane %v333, %v365
    %v377 = vunpack.c.l.b16 %v75
    %v378 = vunpack.c.h.b16 %v75
    %v379 = vunpack.c.l.b16 %v76
    %v380 = vunpack.c.h.b16 %v76
    %v381 = vpack.c.b16 %v377, %v377
    %v382 = vpack.c.b16 %v378, %v378
    %v383 = vpack.c.b16 %v379, %v379
    %v384 = vpack.c.b16 %v380, %v380
    %v645 = vunpack.c.l.b16 %v77
    %v646 = vunpack.c.h.b16 %v77
    %v647 = vunpack.c.l.b16 %v78
    %v648 = vunpack.c.h.b16 %v78
    %v649 = vunpack.c.l.b16 %v79
    %v650 = vunpack.c.h.b16 %v79
    %v651 = vunpack.c.l.b16 %v80
    %v652 = vunpack.c.h.b16 %v80
    %v653 = vunpack.c.l.b16 %v81
    %v654 = vunpack.c.h.b16 %v81
    %v655 = vunpack.c.l.b16 %v82
    %v656 = vunpack.c.h.b16 %v82
    %v657 = vunpack.c.l.b16 %v83
    %v658 = vunpack.c.h.b16 %v83
    %v659 = vunpack.c.l.b16 %v84
    %v660 = vunpack.c.h.b16 %v84
    %v661 = vunpack.c.l.b16 %v85
    %v662 = vunpack.c.h.b16 %v85
    %v663 = vunpack.c.l.b16 %v86
    %v664 = vunpack.c.h.b16 %v86
    %v665 = vunpack.c.l.b16 %v87
    %v666 = vunpack.c.h.b16 %v87
    %v667 = vunpack.c.l.b16 %v88
    %v668 = vunpack.c.h.b16 %v88
    %v669 = vunpack.c.l.b16 %v89
    %v670 = vunpack.c.h.b16 %v89
    %v671 = vunpack.c.l.b16 %v90
    %v672 = vunpack.c.h.b16 %v90
    %v673 = vunpack.c.l.b16 %v91
    %v674 = vunpack.c.h.b16 %v91
    %v675 = vunpack.c.l.b16 %v92
    %v676 = vunpack.c.h.b16 %v92
    %v677 = vunpack.c.l.b16 %v93
    %v678 = vunpack.c.h.b16 %v93
    %v679 = vunpack.c.l.b16 %v94
    %v680 = vunpack.c.h.b16 %v94
    %v681 = vunpack.c.l.b16 %v95
    %v682 = vunpack.c.h.b16 %v95
    %v683 = vunpack.c.l.b16 %v96
    %v684 = vunpack.c.h.b16 %v96
    %v685 = vunpack.c.l.b16 %v97
    %v686 = vunpack.c.h.b16 %v97
    %v687 = vunpack.c.l.b16 %v98
    %v688 = vunpack.c.h.b16 %v98
    %v689 = vunpack.c.l.b16 %v99
    %v690 = vunpack.c.h.b16 %v99
    %v691 = vunpack.c.l.b16 %v100
    %v692 = vunpack.c.h.b16 %v100
    %v693 = vunpack.c.l.b16 %v101
    %v694 = vunpack.c.h.b16 %v101
    %v695 = vunpack.c.l.b16 %v102
    %v696 = vunpack.c.h.b16 %v102
    %v697 = vunpack.c.l.b16 %v103
    %v698 = vunpack.c.h.b16 %v103
    %v699 = vunpack.c.l.b16 %v104
    %v700 = vunpack.c.h.b16 %v104
    %v701 = vunpack.c.l.b16 %v105
    %v702 = vunpack.c.h.b16 %v105
    %v703 = vunpack.c.l.b16 %v106
    %v704 = vunpack.c.h.b16 %v106
    %v705 = vunpack.c.l.b16 %v107
    %v706 = vunpack.c.h.b16 %v107
    %v707 = vunpack.c.l.b16 %v108
    %v708 = vunpack.c.h.b16 %v108
    %v709 = vunpack.c.l.b16 %v109
    %v710 = vunpack.c.h.b16 %v109
    %v711 = vunpack.c.l.b16 %v110
    %v712 = vunpack.c.h.b16 %v110
    %v713 = vunpack.c.l.b16 %v111
    %v714 = vunpack.c.h.b16 %v111
    %v715 = vunpack.c.l.b16 %v112
    %v716 = vunpack.c.h.b16 %v112
    %v717 = vunpack.c.l.b16 %v113
    %v718 = vunpack.c.h.b16 %v113
    %v719 = vunpack.c.l.b16 %v114
    %v720 = vunpack.c.h.b16 %v114
    %v721 = vunpack.c.l.b16 %v115
    %v722 = vunpack.c.h.b16 %v115
    %v723 = vunpack.c.l.b16 %v116
    %v724 = vunpack.c.h.b16 %v116
    %v725 = vunpack.c.l.b16 %v117
    %v726 = vunpack.c.h.b16 %v117
    %v727 = vunpack.c.l.b16 %v118
    %v728 = vunpack.c.h.b16 %v118
    %v729 = vunpack.c.l.b16 %v119
    %v730 = vunpack.c.h.b16 %v119
    %v731 = vunpack.c.l.b16 %v120
    %v732 = vunpack.c.h.b16 %v120
    %v733 = vunpack.c.l.b16 %v121
    %v734 = vunpack.c.h.b16 %v121
    %v735 = vunpack.c.l.b16 %v122
    %v736 = vunpack.c.h.b16 %v122
    %v737 = vunpack.c.l.b16 %v123
    %v738 = vunpack.c.h.b16 %v123
    %v739 = vunpack.c.l.b16 %v124
    %v740 = vunpack.c.h.b16 %v124
    %v741 = vunpack.c.l.b16 %v125
    %v742 = vunpack.c.h.b16 %v125
    %v743 = vunpack.c.l.b16 %v126
    %v744 = vunpack.c.h.b16 %v126
    %v745 = vunpack.c.l.b16 %v127
    %v746 = vunpack.c.h.b16 %v127
    %v747 = vunpack.c.l.b16 %v128
    %v748 = vunpack.c.h.b16 %v128
    %v749 = vunpack.c.l.b16 %v129
    %v750 = vunpack.c.h.b16 %v129
    %v751 = vunpack.c.l.b16 %v130
    %v752 = vunpack.c.h.b16 %v130
    %v753 = vunpack.c.l.b16 %v131
    %v754 = vunpack.c.h.b16 %v131
    %v755 = vunpack.c.l.b16 %v132
    %v756 = vunpack.c.h.b16 %v132
    %v757 = vunpack.c.l.b16 %v133
    %v758 = vunpack.c.h.b16 %v133
    %v759 = vunpack.c.l.b16 %v134
    %v760 = vunpack.c.h.b16 %v134
    %v761 = vunpack.c.l.b16 %v135
    %v762 = vunpack.c.h.b16 %v135
    %v763 = vunpack.c.l.b16 %v136
    %v764 = vunpack.c.h.b16 %v136
    %v765 = vunpack.c.l.b16 %v137
    %v766 = vunpack.c.h.b16 %v137
    %v767 = vunpack.c.l.b16 %v138
    %v768 = vunpack.c.h.b16 %v138
    %v769 = vunpack.c.l.b16 %v139
    %v770 = vunpack.c.h.b16 %v139
    %v771 = vunpack.c.l.b16 %v140
    %v772 = vunpack.c.h.b16 %v140
    %v773 = vunpack.c.l.b16 %v141
    %v774 = vunpack.c.h.b16 %v141
    %v775 = vunpack.c.l.b16 %v142
    %v776 = vunpack.c.h.b16 %v142
    %v777 = vunpack.c.l.b16 %v143
    %v778 = vunpack.c.h.b16 %v143
    %v779 = vunpack.c.l.b16 %v144
    %v780 = vunpack.c.h.b16 %v144
    %v781 = vunpack.c.l.b16 %v145
    %v782 = vunpack.c.h.b16 %v145
    %v783 = vunpack.c.l.b16 %v146
    %v784 = vunpack.c.h.b16 %v146
    %v785 = vunpack.c.l.b16 %v147
    %v786 = vunpack.c.h.b16 %v147
    %v787 = vunpack.c.l.b16 %v148
    %v788 = vunpack.c.h.b16 %v148
    %v789 = vunpack.c.l.b16 %v149
    %v790 = vunpack.c.h.b16 %v149
    %v791 = vunpack.c.l.b16 %v150
    %v792 = vunpack.c.h.b16 %v150
    %v793 = vunpack.c.l.b16 %v151
    %v794 = vunpack.c.h.b16 %v151
    %v795 = vunpack.c.l.b16 %v152
    %v796 = vunpack.c.h.b16 %v152
    %v797 = vunpack.c.l.b16 %v153
    %v798 = vunpack.c.h.b16 %v153
    %v799 = vunpack.c.l.b16 %v154
    %v800 = vunpack.c.h.b16 %v154
    %v801 = vunpack.c.l.b16 %v155
    %v802 = vunpack.c.h.b16 %v155
    %v803 = vunpack.c.l.b16 %v156
    %v804 = vunpack.c.h.b16 %v156
    %v805 = vunpack.c.l.b16 %v157
    %v806 = vunpack.c.h.b16 %v157
    %v807 = vunpack.c.l.b16 %v158
    %v808 = vunpack.c.h.b16 %v158
    %v809 = vunpack.c.l.b16 %v159
    %v810 = vunpack.c.h.b16 %v159
    %v811 = vunpack.c.l.b16 %v160
    %v812 = vunpack.c.h.b16 %v160
    %v813 = vunpack.c.l.b16 %v161
    %v814 = vunpack.c.h.b16 %v161
    %v815 = vunpack.c.l.b16 %v162
    %v816 = vunpack.c.h.b16 %v162
    %v817 = vunpack.c.l.b16 %v163
    %v818 = vunpack.c.h.b16 %v163
    %v819 = vunpack.c.l.b16 %v164
    %v820 = vunpack.c.h.b16 %v164
    %v821 = vunpack.c.l.b16 %v165
    %v822 = vunpack.c.h.b16 %v165
    %v823 = vunpack.c.l.b16 %v166
    %v824 = vunpack.c.h.b16 %v166
    %v825 = vunpack.c.l.b16 %v167
    %v826 = vunpack.c.h.b16 %v167
    %v827 = vunpack.c.l.b16 %v168
    %v828 = vunpack.c.h.b16 %v168
    %v829 = vunpack.c.l.b16 %v169
    %v830 = vunpack.c.h.b16 %v169
    %v831 = vunpack.c.l.b16 %v170
    %v832 = vunpack.c.h.b16 %v170
    %v833 = vunpack.c.l.b16 %v171
    %v834 = vunpack.c.h.b16 %v171
    %v835 = vunpack.c.l.b16 %v172
    %v836 = vunpack.c.h.b16 %v172
    %v837 = vunpack.c.l.b16 %v173
    %v838 = vunpack.c.h.b16 %v173
    %v839 = vunpack.c.l.b16 %v174
    %v840 = vunpack.c.h.b16 %v174
    %v841 = vunpack.c.l.b16 %v175
    %v842 = vunpack.c.h.b16 %v175
    %v843 = vunpack.c.l.b16 %v176
    %v844 = vunpack.c.h.b16 %v176
    %v845 = vunpack.c.l.b16 %v177
    %v846 = vunpack.c.h.b16 %v177
    %v847 = vunpack.c.l.b16 %v178
    %v848 = vunpack.c.h.b16 %v178
    %v849 = vunpack.c.l.b16 %v179
    %v850 = vunpack.c.h.b16 %v179
    %v851 = vunpack.c.l.b16 %v180
    %v852 = vunpack.c.h.b16 %v180
    %v853 = vunpack.c.l.b16 %v181
    %v854 = vunpack.c.h.b16 %v181
    %v855 = vunpack.c.l.b16 %v182
    %v856 = vunpack.c.h.b16 %v182
    %v857 = vunpack.c.l.b16 %v183
    %v858 = vunpack.c.h.b16 %v183
    %v859 = vunpack.c.l.b16 %v184
    %v860 = vunpack.c.h.b16 %v184
    %v861 = vunpack.c.l.b16 %v185
    %v862 = vunpack.c.h.b16 %v185
    %v863 = vunpack.c.l.b16 %v186
    %v864 = vunpack.c.h.b16 %v186
    %v865 = vunpack.c.l.b16 %v187
    %v866 = vunpack.c.h.b16 %v187
    %v867 = vunpack.c.l.b16 %v188
    %v868 = vunpack.c.h.b16 %v188
    %v869 = vunpack.c.l.b16 %v189
    %v870 = vunpack.c.h.b16 %v189
    %v871 = vunpack.c.l.b16 %v190
    %v872 = vunpack.c.h.b16 %v190
    %v873 = vunpack.c.l.b16 %v191
    %v874 = vunpack.c.h.b16 %v191
    %v875 = vunpack.c.l.b16 %v192
    %v876 = vunpack.c.h.b16 %v192
    %v877 = vunpack.c.l.b16 %v193
    %v878 = vunpack.c.h.b16 %v193
    %v879 = vunpack.c.l.b16 %v194
    %v880 = vunpack.c.h.b16 %v194
    %v881 = vunpack.c.l.b16 %v195
    %v882 = vunpack.c.h.b16 %v195
    %v883 = vunpack.c.l.b16 %v196
    %v884 = vunpack.c.h.b16 %v196
    %v885 = vunpack.c.l.b16 %v197
    %v886 = vunpack.c.h.b16 %v197
    %v887 = vunpack.c.l.b16 %v198
    %v888 = vunpack.c.h.b16 %v198
    %v889 = vunpack.c.l.b16 %v199
    %v890 = vunpack.c.h.b16 %v199
    %v891 = vunpack.c.l.b16 %v200
    %v892 = vunpack.c.h.b16 %v200
    %v893 = vunpack.c.l.b16 %v201
    %v894 = vunpack.c.h.b16 %v201
    %v895 = vunpack.c.l.b16 %v202
    %v896 = vunpack.c.h.b16 %v202
    %v897 = vunpack.c.l.b16 %v203
    %v898 = vunpack.c.h.b16 %v203
    %v899 = vunpack.c.l.b16 %v204
    %v900 = vunpack.c.h.b16 %v204
    %v901 = vunpack.c.l.b16 %v205
    %v902 = vunpack.c.h.b16 %v205
    %v903 = vunpack.c.l.b16 %v206
    %v904 = vunpack.c.h.b16 %v206
    %v905 = vunpack.c.l.b16 %v207
    %v906 = vunpack.c.h.b16 %v207
    %v907 = vunpack.c.l.b16 %v208
    %v908 = vunpack.c.h.b16 %v208
    %v909 = vunpack.c.l.b16 %v209
    %v910 = vunpack.c.h.b16 %v209
    %v911 = vunpack.c.l.b16 %v210
    %v912 = vunpack.c.h.b16 %v210
    %v913 = vunpack.c.l.b16 %v211
    %v914 = vunpack.c.h.b16 %v211
    %v915 = vunpack.c.l.b16 %v212
    %v916 = vunpack.c.h.b16 %v212
    %v917 = vunpack.c.l.b16 %v213
    %v918 = vunpack.c.h.b16 %v213
    %v919 = vunpack.c.l.b16 %v214
    %v920 = vunpack.c.h.b16 %v214
    %v921 = vunpack.c.l.b16 %v215
    %v922 = vunpack.c.h.b16 %v215
    %v923 = vunpack.c.l.b16 %v216
    %v924 = vunpack.c.h.b16 %v216
    %v925 = vunpack.c.l.b16 %v217
    %v926 = vunpack.c.h.b16 %v217
    %v927 = vunpack.c.l.b16 %v218
    %v928 = vunpack.c.h.b16 %v218
    %v929 = vunpack.c.l.b16 %v219
    %v930 = vunpack.c.h.b16 %v219
    %v931 = vunpack.c.l.b16 %v220
    %v932 = vunpack.c.h.b16 %v220
    %v933 = vunpack.c.l.b16 %v221
    %v934 = vunpack.c.h.b16 %v221
    %v935 = vunpack.c.l.b16 %v222
    %v936 = vunpack.c.h.b16 %v222
    %v937 = vunpack.c.l.b16 %v223
    %v938 = vunpack.c.h.b16 %v223
    %v939 = vunpack.c.l.b16 %v224
    %v940 = vunpack.c.h.b16 %v224
    %v941 = vunpack.c.l.b16 %v225
    %v942 = vunpack.c.h.b16 %v225
    %v943 = vunpack.c.l.b16 %v226
    %v944 = vunpack.c.h.b16 %v226
    %v945 = vunpack.c.l.b16 %v227
    %v946 = vunpack.c.h.b16 %v227
    %v947 = vunpack.c.l.b16 %v228
    %v948 = vunpack.c.h.b16 %v228
    %v949 = vunpack.c.l.b16 %v229
    %v950 = vunpack.c.h.b16 %v229
    %v951 = vunpack.c.l.b16 %v230
    %v952 = vunpack.c.h.b16 %v230
    %v953 = vunpack.c.l.b16 %v231
    %v954 = vunpack.c.h.b16 %v231
    %v955 = vunpack.c.l.b16 %v232
    %v956 = vunpack.c.h.b16 %v232
    %v957 = vunpack.c.l.b16 %v233
    %v958 = vunpack.c.h.b16 %v233
    %v959 = vunpack.c.l.b16 %v234
    %v960 = vunpack.c.h.b16 %v234
    %v961 = vunpack.c.l.b16 %v235
    %v962 = vunpack.c.h.b16 %v235
    %v963 = vunpack.c.l.b16 %v236
    %v964 = vunpack.c.h.b16 %v236
    %v965 = vunpack.c.l.b16 %v237
    %v966 = vunpack.c.h.b16 %v237
    %v967 = vunpack.c.l.b16 %v238
    %v968 = vunpack.c.h.b16 %v238
    %v969 = vunpack.c.l.b16 %v239
    %v970 = vunpack.c.h.b16 %v239
    %v971 = vunpack.c.l.b16 %v240
    %v972 = vunpack.c.h.b16 %v240
    %v973 = vunpack.c.l.b16 %v241
    %v974 = vunpack.c.h.b16 %v241
    %v975 = vunpack.c.l.b16 %v242
    %v976 = vunpack.c.h.b16 %v242
    %v977 = vunpack.c.l.b16 %v243
    %v978 = vunpack.c.h.b16 %v243
    %v979 = vunpack.c.l.b16 %v244
    %v980 = vunpack.c.h.b16 %v244
    %v981 = vunpack.c.l.b16 %v245
    %v982 = vunpack.c.h.b16 %v245
    %v983 = vunpack.c.l.b16 %v246
    %v984 = vunpack.c.h.b16 %v246
    %v985 = vunpack.c.l.b16 %v247
    %v986 = vunpack.c.h.b16 %v247
    %v987 = vunpack.c.l.b16 %v248
    %v988 = vunpack.c.h.b16 %v248
    %v989 = vunpack.c.l.b16 %v249
    %v990 = vunpack.c.h.b16 %v249
    %v991 = vunpack.c.l.b16 %v250
    %v992 = vunpack.c.h.b16 %v250
    %v993 = vunpack.c.l.b16 %v251
    %v994 = vunpack.c.h.b16 %v251
    %v995 = vunpack.c.l.b16 %v252
    %v996 = vunpack.c.h.b16 %v252
    %v997 = vunpack.c.l.b16 %v253
    %v998 = vunpack.c.h.b16 %v253
    %v999 = vunpack.c.l.b16 %v254
    %v1000 = vunpack.c.h.b16 %v254
    %v1001 = vunpack.c.l.b16 %v255
    %v1002 = vunpack.c.h.b16 %v255
    %v1003 = vunpack.c.l.b16 %v256
    %v1004 = vunpack.c.h.b16 %v256
    %v1005 = vunpack.c.l.b16 %v257
    %v1006 = vunpack.c.h.b16 %v257
    %v1007 = vunpack.c.l.b16 %v258
    %v1008 = vunpack.c.h.b16 %v258
    %v1009 = vunpack.c.l.b16 %v259
    %v1010 = vunpack.c.h.b16 %v259
    %v1011 = vunpack.c.l.b16 %v260
    %v1012 = vunpack.c.h.b16 %v260
    %v1013 = vunpack.c.l.b16 %v261
    %v1014 = vunpack.c.h.b16 %v261
    %v1015 = vunpack.c.l.b16 %v262
    %v1016 = vunpack.c.h.b16 %v262
    %v1017 = vunpack.c.l.b16 %v263
    %v1018 = vunpack.c.h.b16 %v263
    %v1019 = vunpack.c.l.b16 %v264
    %v1020 = vunpack.c.h.b16 %v264
    %v1021 = vunpack.c.l.b16 %v265
    %v1022 = vunpack.c.h.b16 %v265
    %v1023 = vunpack.c.l.b16 %v266
    %v1024 = vunpack.c.h.b16 %v266
    %v1025 = vunpack.c.l.b16 %v267
    %v1026 = vunpack.c.h.b16 %v267
    %v1027 = vunpack.c.l.b16 %v268
    %v1028 = vunpack.c.h.b16 %v268
    %v1029 = vunpack.c.l.b16 %v269
    %v1030 = vunpack.c.h.b16 %v269
    %v1031 = vunpack.c.l.b16 %v270
    %v1032 = vunpack.c.h.b16 %v270
    %v1033 = vunpack.c.l.b16 %v271
    %v1034 = vunpack.c.h.b16 %v271
    %v1035 = vunpack.c.l.b16 %v272
    %v1036 = vunpack.c.h.b16 %v272
    %v1037 = vunpack.c.l.b16 %v273
    %v1038 = vunpack.c.h.b16 %v273
    %v1039 = vunpack.c.l.b16 %v274
    %v1040 = vunpack.c.h.b16 %v274
    %v1041 = vunpack.c.l.b16 %v275
    %v1042 = vunpack.c.h.b16 %v275
    %v1043 = vunpack.c.l.b16 %v276
    %v1044 = vunpack.c.h.b16 %v276
    %v1045 = vunpack.c.l.b16 %v277
    %v1046 = vunpack.c.h.b16 %v277
    %v1047 = vunpack.c.l.b16 %v278
    %v1048 = vunpack.c.h.b16 %v278
    %v1049 = vunpack.c.l.b16 %v279
    %v1050 = vunpack.c.h.b16 %v279
    %v1051 = vunpack.c.l.b16 %v280
    %v1052 = vunpack.c.h.b16 %v280
    %v1053 = vunpack.c.l.b16 %v281
    %v1054 = vunpack.c.h.b16 %v281
    %v1055 = vunpack.c.l.b16 %v282
    %v1056 = vunpack.c.h.b16 %v282
    %v1057 = vunpack.c.l.b16 %v283
    %v1058 = vunpack.c.h.b16 %v283
    %v1059 = vunpack.c.l.b16 %v284
    %v1060 = vunpack.c.h.b16 %v284
    %v1061 = vunpack.c.l.b16 %v285
    %v1062 = vunpack.c.h.b16 %v285
    %v1063 = vunpack.c.l.b16 %v286
    %v1064 = vunpack.c.h.b16 %v286
    %v1065 = vunpack.c.l.b16 %v287
    %v1066 = vunpack.c.h.b16 %v287
    %v1067 = vunpack.c.l.b16 %v288
    %v1068 = vunpack.c.h.b16 %v288
    %v1069 = vunpack.c.l.b16 %v289
    %v1070 = vunpack.c.h.b16 %v289
    %v1071 = vunpack.c.l.b16 %v290
    %v1072 = vunpack.c.h.b16 %v290
    %v1073 = vunpack.c.l.b16 %v291
    %v1074 = vunpack.c.h.b16 %v291
    %v1075 = vunpack.c.l.b16 %v292
    %v1076 = vunpack.c.h.b16 %v292
    %v1077 = vunpack.c.l.b16 %v293
    %v1078 = vunpack.c.h.b16 %v293
    %v1079 = vunpack.c.l.b16 %v294
    %v1080 = vunpack.c.h.b16 %v294
    %v1081 = vunpack.c.l.b16 %v295
    %v1082 = vunpack.c.h.b16 %v295
    %v1083 = vunpack.c.l.b16 %v296
    %v1084 = vunpack.c.h.b16 %v296
    %v1085 = vunpack.c.l.b16 %v297
    %v1086 = vunpack.c.h.b16 %v297
    %v1087 = vunpack.c.l.b16 %v298
    %v1088 = vunpack.c.h.b16 %v298
    %v1089 = vunpack.c.l.b16 %v299
    %v1090 = vunpack.c.h.b16 %v299
    %v1091 = vunpack.c.l.b16 %v300
    %v1092 = vunpack.c.h.b16 %v300
    %v1093 = vunpack.c.l.b16 %v301
    %v1094 = vunpack.c.h.b16 %v301
    %v1095 = vunpack.c.l.b16 %v302
    %v1096 = vunpack.c.h.b16 %v302
    %v1097 = vunpack.c.l.b16 %v303
    %v1098 = vunpack.c.h.b16 %v303
    %v1099 = vunpack.c.l.b16 %v304
    %v1100 = vunpack.c.h.b16 %v304
    %v1101 = vunpack.c.l.b16 %v305
    %v1102 = vunpack.c.h.b16 %v305
    %v1103 = vunpack.c.l.b16 %v306
    %v1104 = vunpack.c.h.b16 %v306
    %v1105 = vunpack.c.l.b16 %v307
    %v1106 = vunpack.c.h.b16 %v307
    %v1107 = vunpack.c.l.b16 %v308
    %v1108 = vunpack.c.h.b16 %v308
    %v1109 = vunpack.c.l.b16 %v309
    %v1110 = vunpack.c.h.b16 %v309
    %v1111 = vunpack.c.l.b16 %v310
    %v1112 = vunpack.c.h.b16 %v310
    %v1113 = vunpack.c.l.b16 %v311
    %v1114 = vunpack.c.h.b16 %v311
    %v1115 = vunpack.c.l.b16 %v312
    %v1116 = vunpack.c.h.b16 %v312
    %v1117 = vunpack.c.l.b16 %v313
    %v1118 = vunpack.c.h.b16 %v313
    %v1119 = vunpack.c.l.b16 %v314
    %v1120 = vunpack.c.h.b16 %v314
    %v1121 = vunpack.c.l.b16 %v315
    %v1122 = vunpack.c.h.b16 %v315
    %v1123 = vunpack.c.l.b16 %v316
    %v1124 = vunpack.c.h.b16 %v316
    %v1125 = vunpack.c.l.b16 %v317
    %v1126 = vunpack.c.h.b16 %v317
    %v1127 = vunpack.c.l.b16 %v318
    %v1128 = vunpack.c.h.b16 %v318
    %v1129 = vunpack.c.l.b16 %v319
    %v1130 = vunpack.c.h.b16 %v319
    %v1131 = vunpack.c.l.b16 %v320
    %v1132 = vunpack.c.h.b16 %v320
    %v1133 = vunpack.c.l.b16 %v321
    %v1134 = vunpack.c.h.b16 %v321
    %v1135 = vunpack.c.l.b16 %v322
    %v1136 = vunpack.c.h.b16 %v322
    %v1137 = vunpack.c.l.b16 %v323
    %v1138 = vunpack.c.h.b16 %v323
    %v1139 = vunpack.c.l.b16 %v324
    %v1140 = vunpack.c.h.b16 %v324
    %v1141 = vunpack.c.l.b16 %v325
    %v1142 = vunpack.c.h.b16 %v325
    %v1143 = vunpack.c.l.b16 %v326
    %v1144 = vunpack.c.h.b16 %v326
    %v1145 = vunpack.c.l.b16 %v327
    %v1146 = vunpack.c.h.b16 %v327
    %v1147 = vunpack.c.l.b16 %v328
    %v1148 = vunpack.c.h.b16 %v328
    %v1149 = vunpack.c.l.b16 %v329
    %v1150 = vunpack.c.h.b16 %v329
    %v1151 = vunpack.c.l.b16 %v330
    %v1152 = vunpack.c.h.b16 %v330
    %v1153 = vunpack.c.l.b16 %v331
    %v1154 = vunpack.c.h.b16 %v331
    %v1155 = vunpack.c.l.b16 %v332
    %v1156 = vunpack.c.h.b16 %v332
    %v1157 = vpack.c.b16 %v653, %v645
    %v1158 = vpack.c.b16 %v654, %v646
    %v1159 = vpack.c.b16 %v655, %v647
    %v1160 = vpack.c.b16 %v656, %v648
    %v1161 = vpack.c.b16 %v657, %v649
    %v1162 = vpack.c.b16 %v658, %v650
    %v1163 = vpack.c.b16 %v659, %v651
    %v1164 = vpack.c.b16 %v660, %v652
    %v1165 = vpack.c.b16 %v669, %v661
    %v1166 = vpack.c.b16 %v670, %v662
    %v1167 = vpack.c.b16 %v671, %v663
    %v1168 = vpack.c.b16 %v672, %v664
    %v1169 = vpack.c.b16 %v673, %v665
    %v1170 = vpack.c.b16 %v674, %v666
    %v1171 = vpack.c.b16 %v675, %v667
    %v1172 = vpack.c.b16 %v676, %v668
    %v1173 = vpack.c.b16 %v685, %v677
    %v1174 = vpack.c.b16 %v686, %v678
    %v1175 = vpack.c.b16 %v687, %v679
    %v1176 = vpack.c.b16 %v688, %v680
    %v1177 = vpack.c.b16 %v689, %v681
    %v1178 = vpack.c.b16 %v690, %v682
    %v1179 = vpack.c.b16 %v691, %v683
    %v1180 = vpack.c.b16 %v692, %v684
    %v1181 = vpack.c.b16 %v701, %v693
    %v1182 = vpack.c.b16 %v702, %v694
    %v1183 = vpack.c.b16 %v703, %v695
    %v1184 = vpack.c.b16 %v704, %v696
    %v1185 = vpack.c.b16 %v705, %v697
    %v1186 = vpack.c.b16 %v706, %v698
    %v1187 = vpack.c.b16 %v707, %v699
    %v1188 = vpack.c.b16 %v708, %v700
    %v1189 = vpack.c.b16 %v717, %v709
    %v1190 = vpack.c.b16 %v718, %v710
    %v1191 = vpack.c.b16 %v719, %v711
    %v1192 = vpack.c.b16 %v720, %v712
    %v1193 = vpack.c.b16 %v721, %v713
    %v1194 = vpack.c.b16 %v722, %v714
    %v1195 = vpack.c.b16 %v723, %v715
    %v1196 = vpack.c.b16 %v724, %v716
    %v1197 = vpack.c.b16 %v733, %v725
    %v1198 = vpack.c.b16 %v734, %v726
    %v1199 = vpack.c.b16 %v735, %v727
    %v1200 = vpack.c.b16 %v736, %v728
    %v1201 = vpack.c.b16 %v737, %v729
    %v1202 = vpack.c.b16 %v738, %v730
    %v1203 = vpack.c.b16 %v739, %v731
    %v1204 = vpack.c.b16 %v740, %v732
    %v1205 = vpack.c.b16 %v749, %v741
    %v1206 = vpack.c.b16 %v750, %v742
    %v1207 = vpack.c.b16 %v751, %v743
    %v1208 = vpack.c.b16 %v752, %v744
    %v1209 = vpack.c.b16 %v753, %v745
    %v1210 = vpack.c.b16 %v754, %v746
    %v1211 = vpack.c.b16 %v755, %v747
    %v1212 = vpack.c.b16 %v756, %v748
    %v1213 = vpack.c.b16 %v765, %v757
    %v1214 = vpack.c.b16 %v766, %v758
    %v1215 = vpack.c.b16 %v767, %v759
    %v1216 = vpack.c.b16 %v768, %v760
    %v1217 = vpack.c.b16 %v769, %v761
    %v1218 = vpack.c.b16 %v770, %v762
    %v1219 = vpack.c.b16 %v771, %v763
    %v1220 = vpack.c.b16 %v772, %v764
    %v1221 = vpack.c.b16 %v781, %v773
    %v1222 = vpack.c.b16 %v782, %v774
    %v1223 = vpack.c.b16 %v783, %v775
    %v1224 = vpack.c.b16 %v784, %v776
    %v1225 = vpack.c.b16 %v785, %v777
    %v1226 = vpack.c.b16 %v786, %v778
    %v1227 = vpack.c.b16 %v787, %v779
    %v1228 = vpack.c.b16 %v788, %v780
    %v1229 = vpack.c.b16 %v797, %v789
    %v1230 = vpack.c.b16 %v798, %v790
    %v1231 = vpack.c.b16 %v799, %v791
    %v1232 = vpack.c.b16 %v800, %v792
    %v1233 = vpack.c.b16 %v801, %v793
    %v1234 = vpack.c.b16 %v802, %v794
    %v1235 = vpack.c.b16 %v803, %v795
    %v1236 = vpack.c.b16 %v804, %v796
    %v1237 = vpack.c.b16 %v813, %v805
    %v1238 = vpack.c.b16 %v814, %v806
    %v1239 = vpack.c.b16 %v815, %v807
    %v1240 = vpack.c.b16 %v816, %v808
    %v1241 = vpack.c.b16 %v817, %v809
    %v1242 = vpack.c.b16 %v818, %v810
    %v1243 = vpack.c.b16 %v819, %v811
    %v1244 = vpack.c.b16 %v820, %v812
    %v1245 = vpack.c.b16 %v829, %v821
    %v1246 = vpack.c.b16 %v830, %v822
    %v1247 = vpack.c.b16 %v831, %v823
    %v1248 = vpack.c.b16 %v832, %v824
    %v1249 = vpack.c.b16 %v833, %v825
    %v1250 = vpack.c.b16 %v834, %v826
    %v1251 = vpack.c.b16 %v835, %v827
    %v1252 = vpack.c.b16 %v836, %v828
    %v1253 = vpack.c.b16 %v845, %v837
    %v1254 = vpack.c.b16 %v846, %v838
    %v1255 = vpack.c.b16 %v847, %v839
    %v1256 = vpack.c.b16 %v848, %v840
    %v1257 = vpack.c.b16 %v849, %v841
    %v1258 = vpack.c.b16 %v850, %v842
    %v1259 = vpack.c.b16 %v851, %v843
    %v1260 = vpack.c.b16 %v852, %v844
    %v1261 = vpack.c.b16 %v861, %v853
    %v1262 = vpack.c.b16 %v862, %v854
    %v1263 = vpack.c.b16 %v863, %v855
    %v1264 = vpack.c.b16 %v864, %v856
    %v1265 = vpack.c.b16 %v865, %v857
    %v1266 = vpack.c.b16 %v866, %v858
    %v1267 = vpack.c.b16 %v867, %v859
    %v1268 = vpack.c.b16 %v868, %v860
    %v1269 = vpack.c.b16 %v877, %v869
    %v1270 = vpack.c.b16 %v878, %v870
    %v1271 = vpack.c.b16 %v879, %v871
    %v1272 = vpack.c.b16 %v880, %v872
    %v1273 = vpack.c.b16 %v881, %v873
    %v1274 = vpack.c.b16 %v882, %v874
    %v1275 = vpack.c.b16 %v883, %v875
    %v1276 = vpack.c.b16 %v884, %v876
    %v1277 = vpack.c.b16 %v893, %v885
    %v1278 = vpack.c.b16 %v894, %v886
    %v1279 = vpack.c.b16 %v895, %v887
    %v1280 = vpack.c.b16 %v896, %v888
    %v1281 = vpack.c.b16 %v897, %v889
    %v1282 = vpack.c.b16 %v898, %v890
    %v1283 = vpack.c.b16 %v899, %v891
    %v1284 = vpack.c.b16 %v900, %v892
    %v1285 = vpack.c.b16 %v909, %v901
    %v1286 = vpack.c.b16 %v910, %v902
    %v1287 = vpack.c.b16 %v911, %v903
    %v1288 = vpack.c.b16 %v912, %v904
    %v1289 = vpack.c.b16 %v913, %v905
    %v1290 = vpack.c.b16 %v914, %v906
    %v1291 = vpack.c.b16 %v915, %v907
    %v1292 = vpack.c.b16 %v916, %v908
    %v1293 = vpack.c.b16 %v925, %v917
    %v1294 = vpack.c.b16 %v926, %v918
    %v1295 = vpack.c.b16 %v927, %v919
    %v1296 = vpack.c.b16 %v928, %v920
    %v1297 = vpack.c.b16 %v929, %v921
    %v1298 = vpack.c.b16 %v930, %v922
    %v1299 = vpack.c.b16 %v931, %v923
    %v1300 = vpack.c.b16 %v932, %v924
    %v1301 = vpack.c.b16 %v941, %v933
    %v1302 = vpack.c.b16 %v942, %v934
    %v1303 = vpack.c.b16 %v943, %v935
    %v1304 = vpack.c.b16 %v944, %v936
    %v1305 = vpack.c.b16 %v945, %v937
    %v1306 = vpack.c.b16 %v946, %v938
    %v1307 = vpack.c.b16 %v947, %v939
    %v1308 = vpack.c.b16 %v948, %v940
    %v1309 = vpack.c.b16 %v957, %v949
    %v1310 = vpack.c.b16 %v958, %v950
    %v1311 = vpack.c.b16 %v959, %v951
    %v1312 = vpack.c.b16 %v960, %v952
    %v1313 = vpack.c.b16 %v961, %v953
    %v1314 = vpack.c.b16 %v962, %v954
    %v1315 = vpack.c.b16 %v963, %v955
    %v1316 = vpack.c.b16 %v964, %v956
    %v1317 = vpack.c.b16 %v973, %v965
    %v1318 = vpack.c.b16 %v974, %v966
    %v1319 = vpack.c.b16 %v975, %v967
    %v1320 = vpack.c.b16 %v976, %v968
    %v1321 = vpack.c.b16 %v977, %v969
    %v1322 = vpack.c.b16 %v978, %v970
    %v1323 = vpack.c.b16 %v979, %v971
    %v1324 = vpack.c.b16 %v980, %v972
    %v1325 = vpack.c.b16 %v989, %v981
    %v1326 = vpack.c.b16 %v990, %v982
    %v1327 = vpack.c.b16 %v991, %v983
    %v1328 = vpack.c.b16 %v992, %v984
    %v1329 = vpack.c.b16 %v993, %v985
    %v1330 = vpack.c.b16 %v994, %v986
    %v1331 = vpack.c.b16 %v995, %v987
    %v1332 = vpack.c.b16 %v996, %v988
    %v1333 = vpack.c.b16 %v1005, %v997
    %v1334 = vpack.c.b16 %v1006, %v998
    %v1335 = vpack.c.b16 %v1007, %v999
    %v1336 = vpack.c.b16 %v1008, %v1000
    %v1337 = vpack.c.b16 %v1009, %v1001
    %v1338 = vpack.c.b16 %v1010, %v1002
    %v1339 = vpack.c.b16 %v1011, %v1003
    %v1340 = vpack.c.b16 %v1012, %v1004
    %v1341 = vpack.c.b16 %v1021, %v1013
    %v1342 = vpack.c.b16 %v1022, %v1014
    %v1343 = vpack.c.b16 %v1023, %v1015
    %v1344 = vpack.c.b16 %v1024, %v1016
    %v1345 = vpack.c.b16 %v1025, %v1017
    %v1346 = vpack.c.b16 %v1026, %v1018
    %v1347 = vpack.c.b16 %v1027, %v1019
    %v1348 = vpack.c.b16 %v1028, %v1020
    %v1349 = vpack.c.b16 %v1037, %v1029
    %v1350 = vpack.c.b16 %v1038, %v1030
    %v1351 = vpack.c.b16 %v1039, %v1031
    %v1352 = vpack.c.b16 %v1040, %v1032
    %v1353 = vpack.c.b16 %v1041, %v1033
    %v1354 = vpack.c.b16 %v1042, %v1034
    %v1355 = vpack.c.b16 %v1043, %v1035
    %v1356 = vpack.c.b16 %v1044, %v1036
    %v1357 = vpack.c.b16 %v1053, %v1045
    %v1358 = vpack.c.b16 %v1054, %v1046
    %v1359 = vpack.c.b16 %v1055, %v1047
    %v1360 = vpack.c.b16 %v1056, %v1048
    %v1361 = vpack.c.b16 %v1057, %v1049
    %v1362 = vpack.c.b16 %v1058, %v1050
    %v1363 = vpack.c.b16 %v1059, %v1051
    %v1364 = vpack.c.b16 %v1060, %v1052
    %v1365 = vpack.c.b16 %v1069, %v1061
    %v1366 = vpack.c.b16 %v1070, %v1062
    %v1367 = vpack.c.b16 %v1071, %v1063
    %v1368 = vpack.c.b16 %v1072, %v1064
    %v1369 = vpack.c.b16 %v1073, %v1065
    %v1370 = vpack.c.b16 %v1074, %v1066
    %v1371 = vpack.c.b16 %v1075, %v1067
    %v1372 = vpack.c.b16 %v1076, %v1068
    %v1373 = vpack.c.b16 %v1085, %v1077
    %v1374 = vpack.c.b16 %v1086, %v1078
    %v1375 = vpack.c.b16 %v1087, %v1079
    %v1376 = vpack.c.b16 %v1088, %v1080
    %v1377 = vpack.c.b16 %v1089, %v1081
    %v1378 = vpack.c.b16 %v1090, %v1082
    %v1379 = vpack.c.b16 %v1091, %v1083
    %v1380 = vpack.c.b16 %v1092, %v1084
    %v1381 = vpack.c.b16 %v1101, %v1093
    %v1382 = vpack.c.b16 %v1102, %v1094
    %v1383 = vpack.c.b16 %v1103, %v1095
    %v1384 = vpack.c.b16 %v1104, %v1096
    %v1385 = vpack.c.b16 %v1105, %v1097
    %v1386 = vpack.c.b16 %v1106, %v1098
    %v1387 = vpack.c.b16 %v1107, %v1099
    %v1388 = vpack.c.b16 %v1108, %v1100
    %v1389 = vpack.c.b16 %v1117, %v1109
    %v1390 = vpack.c.b16 %v1118, %v1110
    %v1391 = vpack.c.b16 %v1119, %v1111
    %v1392 = vpack.c.b16 %v1120, %v1112
    %v1393 = vpack.c.b16 %v1121, %v1113
    %v1394 = vpack.c.b16 %v1122, %v1114
    %v1395 = vpack.c.b16 %v1123, %v1115
    %v1396 = vpack.c.b16 %v1124, %v1116
    %v1397 = vpack.c.b16 %v1133, %v1125
    %v1398 = vpack.c.b16 %v1134, %v1126
    %v1399 = vpack.c.b16 %v1135, %v1127
    %v1400 = vpack.c.b16 %v1136, %v1128
    %v1401 = vpack.c.b16 %v1137, %v1129
    %v1402 = vpack.c.b16 %v1138, %v1130
    %v1403 = vpack.c.b16 %v1139, %v1131
    %v1404 = vpack.c.b16 %v1140, %v1132
    %v1405 = vpack.c.b16 %v1149, %v1141
    %v1406 = vpack.c.b16 %v1150, %v1142
    %v1407 = vpack.c.b16 %v1151, %v1143
    %v1408 = vpack.c.b16 %v1152, %v1144
    %v1409 = vpack.c.b16 %v1153, %v1145
    %v1410 = vpack.c.b16 %v1154, %v1146
    %v1411 = vpack.c.b16 %v1155, %v1147
    %v1412 = vpack.c.b16 %v1156, %v1148
    %1669 = vmatprep.subr.bf16.mxu0 %v1158
    %1670 = vmatpush1.bf16.msra.mxu0 %v1157
    %1671 = vmatprep.subr.bf16.mxu0 %v1166
    %1672 = vmatpush1.bf16.msra.mxu0 %v1165
    %1673 = vmatprep.subr.bf16.mxu0 %v1174
    %1674 = vmatpush1.bf16.msra.mxu0 %v1173
    %1675 = vmatprep.subr.bf16.mxu0 %v1182
    %1676 = vmatpush1.bf16.msra.mxu0 %v1181
    %1677 = vmatprep.subr.bf16.mxu0 %v1190
    %1678 = vmatpush1.bf16.msra.mxu0 %v1189
    %1679 = vmatprep.subr.bf16.mxu0 %v1198
    %1680 = vmatpush1.bf16.msra.mxu0 %v1197
    %1681 = vmatprep.subr.bf16.mxu0 %v1206
    %1682 = vmatpush1.bf16.msra.mxu0 %v1205
    %1683 = vmatprep.subr.bf16.mxu0 %v1214
    %1684 = vmatpush1.bf16.msra.mxu0 %v1213
    %1685 = vmatprep.subr.bf16.mxu0 %v1222
    %1686 = vmatpush1.bf16.msra.mxu0 %v1221
    %1687 = vmatprep.subr.bf16.mxu0 %v1230
    %1688 = vmatpush1.bf16.msra.mxu0 %v1229
    %1689 = vmatprep.subr.bf16.mxu0 %v1238
    %1690 = vmatpush1.bf16.msra.mxu0 %v1237
    %1691 = vmatprep.subr.bf16.mxu0 %v1246
    %1692 = vmatpush1.bf16.msra.mxu0 %v1245
    %1693 = vmatprep.subr.bf16.mxu0 %v1254
    %1694 = vmatpush1.bf16.msra.mxu0 %v1253
    %1695 = vmatprep.subr.bf16.mxu0 %v1262
    %1696 = vmatpush1.bf16.msra.mxu0 %v1261
    %1697 = vmatprep.subr.bf16.mxu0 %v1270
    %1698 = vmatpush1.bf16.msra.mxu0 %v1269
    %1699 = vmatprep.subr.bf16.mxu0 %v1278
    %1700 = vmatpush1.bf16.msra.mxu0 %v1277
    %1701 = vmatprep.mubr.bf16.mxu0 %v382
    %1702 = vmatmul.mubr.bf16.gmra.mrb[0].mxu0 %v381
    %v1703 = vpop.f32.mrb[0].mxu0
    %v1704 = vadd.f32 %v338, %v1703
    %v1705 = vpop.f32.mrb[0].mxu0
    %v1706 = vadd.f32 %v342, %v1705
    %v1707 = vpop.f32.mrb[0].mxu0
    %v1708 = vpop.f32.mrb[0].mxu0
    %1709 = vdwg.mxu0
    %1710 = vmatprep.subr.bf16.mxu0 %v1286
    %1711 = vmatpush1.bf16.msra.mxu0 %v1285
    %1712 = vmatprep.subr.bf16.mxu0 %v1294
    %1713 = vmatpush1.bf16.msra.mxu0 %v1293
    %1714 = vmatprep.subr.bf16.mxu0 %v1302
    %1715 = vmatpush1.bf16.msra.mxu0 %v1301
    %1716 = vmatprep.subr.bf16.mxu0 %v1310
    %1717 = vmatpush1.bf16.msra.mxu0 %v1309
    %1718 = vmatprep.subr.bf16.mxu0 %v1318
    %1719 = vmatpush1.bf16.msra.mxu0 %v1317
    %1720 = vmatprep.subr.bf16.mxu0 %v1326
    %1721 = vmatpush1.bf16.msra.mxu0 %v1325
    %1722 = vmatprep.subr.bf16.mxu0 %v1334
    %1723 = vmatpush1.bf16.msra.mxu0 %v1333
    %1724 = vmatprep.subr.bf16.mxu0 %v1342
    %1725 = vmatpush1.bf16.msra.mxu0 %v1341
    %1726 = vmatprep.subr.bf16.mxu0 %v1350
    %1727 = vmatpush1.bf16.msra.mxu0 %v1349
    %1728 = vmatprep.subr.bf16.mxu0 %v1358
    %1729 = vmatpush1.bf16.msra.mxu0 %v1357
    %1730 = vmatprep.subr.bf16.mxu0 %v1366
    %1731 = vmatpush1.bf16.msra.mxu0 %v1365
    %1732 = vmatprep.subr.bf16.mxu0 %v1374
    %1733 = vmatpush1.bf16.msra.mxu0 %v1373
    %1734 = vmatprep.subr.bf16.mxu0 %v1382
    %1735 = vmatpush1.bf16.msra.mxu0 %v1381
    %1736 = vmatprep.subr.bf16.mxu0 %v1390
    %1737 = vmatpush1.bf16.msra.mxu0 %v1389
    %1738 = vmatprep.subr.bf16.mxu0 %v1398
    %1739 = vmatpush1.bf16.msra.mxu0 %v1397
    %1740 = vmatprep.subr.bf16.mxu0 %v1406
    %1741 = vmatpush1.bf16.msra.mxu0 %v1405
    %1742 = vmatprep.mubr.bf16.mxu0 %v384
    %1743 = vmatmul.mubr.bf16.gmra.mrb[0].mxu0 %v383
    %v1744 = vpop.f32.mrb[0].mxu0
    %v1745 = vadd.f32 %v1704, %v1744
    %v1746 = vpop.f32.mrb[0].mxu0
    %v1747 = vadd.f32 %v1706, %v1746
    %v1748 = vpop.f32.mrb[0].mxu0
    %v1749 = vpop.f32.mrb[0].mxu0
    %1750 = vdwg.mxu0
    %1751 = vmatprep.subr.bf16.mxu0 %v1160
    %1752 = vmatpush1.bf16.msra.mxu0 %v1159
    %1753 = vmatprep.subr.bf16.mxu0 %v1168
    %1754 = vmatpush1.bf16.msra.mxu0 %v1167
    %1755 = vmatprep.subr.bf16.mxu0 %v1176
    %1756 = vmatpush1.bf16.msra.mxu0 %v1175
    %1757 = vmatprep.subr.bf16.mxu0 %v1184
    %1758 = vmatpush1.bf16.msra.mxu0 %v1183
    %1759 = vmatprep.subr.bf16.mxu0 %v1192
    %1760 = vmatpush1.bf16.msra.mxu0 %v1191
    %1761 = vmatprep.subr.bf16.mxu0 %v1200
    %1762 = vmatpush1.bf16.msra.mxu0 %v1199
    %1763 = vmatprep.subr.bf16.mxu0 %v1208
    %1764 = vmatpush1.bf16.msra.mxu0 %v1207
    %1765 = vmatprep.subr.bf16.mxu0 %v1216
    %1766 = vmatpush1.bf16.msra.mxu0 %v1215
    %1767 = vmatprep.subr.bf16.mxu0 %v1224
    %1768 = vmatpush1.bf16.msra.mxu0 %v1223
    %1769 = vmatprep.subr.bf16.mxu0 %v1232
    %1770 = vmatpush1.bf16.msra.mxu0 %v1231
    %1771 = vmatprep.subr.bf16.mxu0 %v1240
    %1772 = vmatpush1.bf16.msra.mxu0 %v1239
    %1773 = vmatprep.subr.bf16.mxu0 %v1248
    %1774 = vmatpush1.bf16.msra.mxu0 %v1247
    %1775 = vmatprep.subr.bf16.mxu0 %v1256
    %1776 = vmatpush1.bf16.msra.mxu0 %v1255
    %1777 = vmatprep.subr.bf16.mxu0 %v1264
    %1778 = vmatpush1.bf16.msra.mxu0 %v1263
    %1779 = vmatprep.subr.bf16.mxu0 %v1272
    %1780 = vmatpush1.bf16.msra.mxu0 %v1271
    %1781 = vmatprep.subr.bf16.mxu0 %v1280
    %1782 = vmatpush1.bf16.msra.mxu0 %v1279
    %1783 = vmatprep.mubr.bf16.mxu0 %v382
    %1784 = vmatmul.mubr.bf16.gmra.mrb[0].mxu0 %v381
    %v1785 = vpop.f32.mrb[0].mxu0
    %v1786 = vadd.f32 %v346, %v1785
    %v1787 = vpop.f32.mrb[0].mxu0
    %v1788 = vadd.f32 %v350, %v1787
    %v1789 = vpop.f32.mrb[0].mxu0
    %v1790 = vpop.f32.mrb[0].mxu0
    %1791 = vdwg.mxu0
    %1792 = vmatprep.subr.bf16.mxu0 %v1288
    %1793 = vmatpush1.bf16.msra.mxu0 %v1287
    %1794 = vmatprep.subr.bf16.mxu0 %v1296
    %1795 = vmatpush1.bf16.msra.mxu0 %v1295
    %1796 = vmatprep.subr.bf16.mxu0 %v1304
    %1797 = vmatpush1.bf16.msra.mxu0 %v1303
    %1798 = vmatprep.subr.bf16.mxu0 %v1312
    %1799 = vmatpush1.bf16.msra.mxu0 %v1311
    %1800 = vmatprep.subr.bf16.mxu0 %v1320
    %1801 = vmatpush1.bf16.msra.mxu0 %v1319
    %1802 = vmatprep.subr.bf16.mxu0 %v1328
    %1803 = vmatpush1.bf16.msra.mxu0 %v1327
    %1804 = vmatprep.subr.bf16.mxu0 %v1336
    %1805 = vmatpush1.bf16.msra.mxu0 %v1335
    %1806 = vmatprep.subr.bf16.mxu0 %v1344
    %1807 = vmatpush1.bf16.msra.mxu0 %v1343
    %1808 = vmatprep.subr.bf16.mxu0 %v1352
    %1809 = vmatpush1.bf16.msra.mxu0 %v1351
    %1810 = vmatprep.subr.bf16.mxu0 %v1360
    %1811 = vmatpush1.bf16.msra.mxu0 %v1359
    %1812 = vmatprep.subr.bf16.mxu0 %v1368
    %1813 = vmatpush1.bf16.msra.mxu0 %v1367
    %1814 = vmatprep.subr.bf16.mxu0 %v1376
    %1815 = vmatpush1.bf16.msra.mxu0 %v1375
    %1816 = vmatprep.subr.bf16.mxu0 %v1384
    %1817 = vmatpush1.bf16.msra.mxu0 %v1383
    %1818 = vmatprep.subr.bf16.mxu0 %v1392
    %1819 = vmatpush1.bf16.msra.mxu0 %v1391
    %1820 = vmatprep.subr.bf16.mxu0 %v1400
    %1821 = vmatpush1.bf16.msra.mxu0 %v1399
    %1822 = vmatprep.subr.bf16.mxu0 %v1408
    %1823 = vmatpush1.bf16.msra.mxu0 %v1407
    %1824 = vmatprep.mubr.bf16.mxu0 %v384
    %1825 = vmatmul.mubr.bf16.gmra.mrb[0].mxu0 %v383
    %v1826 = vpop.f32.mrb[0].mxu0
    %v1827 = vadd.f32 %v1786, %v1826
    %v1828 = vpop.f32.mrb[0].mxu0
    %v1829 = vadd.f32 %v1788, %v1828
    %v1830 = vpop.f32.mrb[0].mxu0
    %v1831 = vpop.f32.mrb[0].mxu0
    %1832 = vdwg.mxu0
    %1833 = vmatprep.subr.bf16.mxu0 %v1162
    %1834 = vmatpush1.bf16.msra.mxu0 %v1161
    %1835 = vmatprep.subr.bf16.mxu0 %v1170
    %1836 = vmatpush1.bf16.msra.mxu0 %v1169
    %1837 = vmatprep.subr.bf16.mxu0 %v1178
    %1838 = vmatpush1.bf16.msra.mxu0 %v1177
    %1839 = vmatprep.subr.bf16.mxu0 %v1186
    %1840 = vmatpush1.bf16.msra.mxu0 %v1185
    %1841 = vmatprep.subr.bf16.mxu0 %v1194
    %1842 = vmatpush1.bf16.msra.mxu0 %v1193
    %1843 = vmatprep.subr.bf16.mxu0 %v1202
    %1844 = vmatpush1.bf16.msra.mxu0 %v1201
    %1845 = vmatprep.subr.bf16.mxu0 %v1210
    %1846 = vmatpush1.bf16.msra.mxu0 %v1209
    %1847 = vmatprep.subr.bf16.mxu0 %v1218
    %1848 = vmatpush1.bf16.msra.mxu0 %v1217
    %1849 = vmatprep.subr.bf16.mxu0 %v1226
    %1850 = vmatpush1.bf16.msra.mxu0 %v1225
    %1851 = vmatprep.subr.bf16.mxu0 %v1234
    %1852 = vmatpush1.bf16.msra.mxu0 %v1233
    %1853 = vmatprep.subr.bf16.mxu0 %v1242
    %1854 = vmatpush1.bf16.msra.mxu0 %v1241
    %1855 = vmatprep.subr.bf16.mxu0 %v1250
    %1856 = vmatpush1.bf16.msra.mxu0 %v1249
    %1857 = vmatprep.subr.bf16.mxu0 %v1258
    %1858 = vmatpush1.bf16.msra.mxu0 %v1257
    %1859 = vmatprep.subr.bf16.mxu0 %v1266
    %1860 = vmatpush1.bf16.msra.mxu0 %v1265
    %1861 = vmatprep.subr.bf16.mxu0 %v1274
    %1862 = vmatpush1.bf16.msra.mxu0 %v1273
    %1863 = vmatprep.subr.bf16.mxu0 %v1282
    %1864 = vmatpush1.bf16.msra.mxu0 %v1281
    %1865 = vmatprep.mubr.bf16.mxu0 %v382
    %1866 = vmatmul.mubr.bf16.gmra.mrb[0].mxu0 %v381
    %v1867 = vpop.f32.mrb[0].mxu0
    %v1868 = vadd.f32 %v354, %v1867
    %v1869 = vpop.f32.mrb[0].mxu0
    %v1870 = vadd.f32 %v358, %v1869
    %v1871 = vpop.f32.mrb[0].mxu0
    %v1872 = vpop.f32.mrb[0].mxu0
    %1873 = vdwg.mxu0
    %1874 = vmatprep.subr.bf16.mxu0 %v1290
    %1875 = vmatpush1.bf16.msra.mxu0 %v1289
    %1876 = vmatprep.subr.bf16.mxu0 %v1298
    %1877 = vmatpush1.bf16.msra.mxu0 %v1297
    %1878 = vmatprep.subr.bf16.mxu0 %v1306
    %1879 = vmatpush1.bf16.msra.mxu0 %v1305
    %1880 = vmatprep.subr.bf16.mxu0 %v1314
    %1881 = vmatpush1.bf16.msra.mxu0 %v1313
    %1882 = vmatprep.subr.bf16.mxu0 %v1322
    %1883 = vmatpush1.bf16.msra.mxu0 %v1321
    %1884 = vmatprep.subr.bf16.mxu0 %v1330
    %1885 = vmatpush1.bf16.msra.mxu0 %v1329
    %1886 = vmatprep.subr.bf16.mxu0 %v1338
    %1887 = vmatpush1.bf16.msra.mxu0 %v1337
    %1888 = vmatprep.subr.bf16.mxu0 %v1346
    %1889 = vmatpush1.bf16.msra.mxu0 %v1345
    %1890 = vmatprep.subr.bf16.mxu0 %v1354
    %1891 = vmatpush1.bf16.msra.mxu0 %v1353
    %1892 = vmatprep.subr.bf16.mxu0 %v1362
    %1893 = vmatpush1.bf16.msra.mxu0 %v1361
    %1894 = vmatprep.subr.bf16.mxu0 %v1370
    %1895 = vmatpush1.bf16.msra.mxu0 %v1369
    %1896 = vmatprep.subr.bf16.mxu0 %v1378
    %1897 = vmatpush1.bf16.msra.mxu0 %v1377
    %1898 = vmatprep.subr.bf16.mxu0 %v1386
    %1899 = vmatpush1.bf16.msra.mxu0 %v1385
    %1900 = vmatprep.subr.bf16.mxu0 %v1394
    %1901 = vmatpush1.bf16.msra.mxu0 %v1393
    %1902 = vmatprep.subr.bf16.mxu0 %v1402
    %1903 = vmatpush1.bf16.msra.mxu0 %v1401
    %1904 = vmatprep.subr.bf16.mxu0 %v1410
    %1905 = vmatpush1.bf16.msra.mxu0 %v1409
    %1906 = vmatprep.mubr.bf16.mxu0 %v384
    %1907 = vmatmul.mubr.bf16.gmra.mrb[0].mxu0 %v383
    %v1908 = vpop.f32.mrb[0].mxu0
    %v1909 = vadd.f32 %v1868, %v1908
    %v1910 = vpop.f32.mrb[0].mxu0
    %v1911 = vadd.f32 %v1870, %v1910
    %v1912 = vpop.f32.mrb[0].mxu0
    %v1913 = vpop.f32.mrb[0].mxu0
    %1914 = vdwg.mxu0
    %1915 = vmatprep.subr.bf16.mxu0 %v1164
    %1916 = vmatpush1.bf16.msra.mxu0 %v1163
    %1917 = vmatprep.subr.bf16.mxu0 %v1172
    %1918 = vmatpush1.bf16.msra.mxu0 %v1171
    %1919 = vmatprep.subr.bf16.mxu0 %v1180
    %1920 = vmatpush1.bf16.msra.mxu0 %v1179
    %1921 = vmatprep.subr.bf16.mxu0 %v1188
    %1922 = vmatpush1.bf16.msra.mxu0 %v1187
    %1923 = vmatprep.subr.bf16.mxu0 %v1196
    %1924 = vmatpush1.bf16.msra.mxu0 %v1195
    %1925 = vmatprep.subr.bf16.mxu0 %v1204
    %1926 = vmatpush1.bf16.msra.mxu0 %v1203
    %1927 = vmatprep.subr.bf16.mxu0 %v1212
    %1928 = vmatpush1.bf16.msra.mxu0 %v1211
    %1929 = vmatprep.subr.bf16.mxu0 %v1220
    %1930 = vmatpush1.bf16.msra.mxu0 %v1219
    %1931 = vmatprep.subr.bf16.mxu0 %v1228
    %1932 = vmatpush1.bf16.msra.mxu0 %v1227
    %1933 = vmatprep.subr.bf16.mxu0 %v1236
    %1934 = vmatpush1.bf16.msra.mxu0 %v1235
    %1935 = vmatprep.subr.bf16.mxu0 %v1244
    %1936 = vmatpush1.bf16.msra.mxu0 %v1243
    %1937 = vmatprep.subr.bf16.mxu0 %v1252
    %1938 = vmatpush1.bf16.msra.mxu0 %v1251
    %1939 = vmatprep.subr.bf16.mxu0 %v1260
    %1940 = vmatpush1.bf16.msra.mxu0 %v1259
    %1941 = vmatprep.subr.bf16.mxu0 %v1268
    %1942 = vmatpush1.bf16.msra.mxu0 %v1267
    %1943 = vmatprep.subr.bf16.mxu0 %v1276
    %1944 = vmatpush1.bf16.msra.mxu0 %v1275
    %1945 = vmatprep.subr.bf16.mxu0 %v1284
    %1946 = vmatpush1.bf16.msra.mxu0 %v1283
    %1947 = vmatprep.mubr.bf16.mxu0 %v382
    %1948 = vmatmul.mubr.bf16.gmra.mrb[0].mxu0 %v381
    %v1949 = vpop.f32.mrb[0].mxu0
    %v1950 = vadd.f32 %v362, %v1949
    %v1951 = vpop.f32.mrb[0].mxu0
    %v1952 = vadd.f32 %v366, %v1951
    %v1953 = vpop.f32.mrb[0].mxu0
    %v1954 = vpop.f32.mrb[0].mxu0
    %1955 = vdwg.mxu0
    %1956 = vmatprep.subr.bf16.mxu0 %v1292
    %1957 = vmatpush1.bf16.msra.mxu0 %v1291
    %1958 = vmatprep.subr.bf16.mxu0 %v1300
    %1959 = vmatpush1.bf16.msra.mxu0 %v1299
    %1960 = vmatprep.subr.bf16.mxu0 %v1308
    %1961 = vmatpush1.bf16.msra.mxu0 %v1307
    %1962 = vmatprep.subr.bf16.mxu0 %v1316
    %1963 = vmatpush1.bf16.msra.mxu0 %v1315
    %1964 = vmatprep.subr.bf16.mxu0 %v1324
    %1965 = vmatpush1.bf16.msra.mxu0 %v1323
    %1966 = vmatprep.subr.bf16.mxu0 %v1332
    %1967 = vmatpush1.bf16.msra.mxu0 %v1331
    %1968 = vmatprep.subr.bf16.mxu0 %v1340
    %1969 = vmatpush1.bf16.msra.mxu0 %v1339
    %1970 = vmatprep.subr.bf16.mxu0 %v1348
    %1971 = vmatpush1.bf16.msra.mxu0 %v1347
    %1972 = vmatprep.subr.bf16.mxu0 %v1356
    %1973 = vmatpush1.bf16.msra.mxu0 %v1355
    %1974 = vmatprep.subr.bf16.mxu0 %v1364
    %1975 = vmatpush1.bf16.msra.mxu0 %v1363
    %1976 = vmatprep.subr.bf16.mxu0 %v1372
    %1977 = vmatpush1.bf16.msra.mxu0 %v1371
    %1978 = vmatprep.subr.bf16.mxu0 %v1380
    %1979 = vmatpush1.bf16.msra.mxu0 %v1379
    %1980 = vmatprep.subr.bf16.mxu0 %v1388
    %1981 = vmatpush1.bf16.msra.mxu0 %v1387
    %1982 = vmatprep.subr.bf16.mxu0 %v1396
    %1983 = vmatpush1.bf16.msra.mxu0 %v1395
    %1984 = vmatprep.subr.bf16.mxu0 %v1404
    %1985 = vmatpush1.bf16.msra.mxu0 %v1403
    %1986 = vmatprep.subr.bf16.mxu0 %v1412
    %1987 = vmatpush1.bf16.msra.mxu0 %v1411
    %1988 = vmatprep.mubr.bf16.mxu0 %v384
    %1989 = vmatmul.mubr.bf16.gmra.mrb[0].mxu0 %v383
    %v1990 = vpop.f32.mrb[0].mxu0
    %v1991 = vadd.f32 %v1950, %v1990
    %v1992 = vpop.f32.mrb[0].mxu0
    %v1993 = vadd.f32 %v1952, %v1992
    %v1994 = vpop.f32.mrb[0].mxu0
    %v1995 = vpop.f32.mrb[0].mxu0
    %1996 = vdwg.mxu0
    %v1997 = vxor.u32 %v1745, 2147483648
    %v1998 = vxor.u32 %v1747, 2147483648
    %v1999 = vxor.u32 %v1827, 2147483648
    %v2000 = vxor.u32 %v1829, 2147483648
    %v2001 = vxor.u32 %v1909, 2147483648
    %v2002 = vxor.u32 %v1911, 2147483648
    %v2003 = vxor.u32 %v1991, 2147483648
    %v2004 = vxor.u32 %v1993, 2147483648
    %v2005 = vmul.f32 %v1997, 1.442695
    %v2006 = vpow.pop %v2005
    %v2007 = vmul.f32 %v1998, 1.442695
    %v2008 = vpow.pop %v2007
    %v2009 = vmul.f32 %v1999, 1.442695
    %v2010 = vpow.pop %v2009
    %v2011 = vmul.f32 %v2000, 1.442695
    %v2012 = vpow.pop %v2011
    %v2013 = vmul.f32 %v2001, 1.442695
    %v2014 = vpow.pop %v2013
    %v2015 = vmul.f32 %v2002, 1.442695
    %v2016 = vpow.pop %v2015
    %v2017 = vmul.f32 %v2003, 1.442695
    %v2018 = vpow.pop %v2017
    %v2019 = vmul.f32 %v2004, 1.442695
    %v2020 = vpow.pop %v2019
    %v2021 = vadd.f32 %v2006, 1.0
    %v2022 = vadd.f32 %v2008, 1.0
    %v2023 = vadd.f32 %v2010, 1.0
    %v2024 = vadd.f32 %v2012, 1.0
    %v2025 = vadd.f32 %v2014, 1.0
    %v2026 = vadd.f32 %v2016, 1.0
    %v2027 = vadd.f32 %v2018, 1.0
    %v2028 = vadd.f32 %v2020, 1.0
    %v2029 = vrcp.pop %v2021
    %v2030 = vmul.f32 1.0, %v2029
    %v2031 = vrcp.pop %v2022
    %v2032 = vmul.f32 1.0, %v2031
    %v2033 = vrcp.pop %v2023
    %v2034 = vmul.f32 1.0, %v2033
    %v2035 = vrcp.pop %v2024
    %v2036 = vmul.f32 1.0, %v2035
    %v2037 = vrcp.pop %v2025
    %v2038 = vmul.f32 1.0, %v2037
    %v2039 = vrcp.pop %v2026
    %v2040 = vmul.f32 1.0, %v2039
    %v2041 = vrcp.pop %v2027
    %v2042 = vmul.f32 1.0, %v2041
    %v2043 = vrcp.pop %v2028
    %v2044 = vmul.f32 1.0, %v2043
    %v2045 = vpack.c.bf16 %v2030, %v2030
    %v2046 = vpack.c.bf16 %v2032, %v2032
    %v2047 = vpack.c.bf16 %v2034, %v2034
    %v2048 = vpack.c.bf16 %v2036, %v2036
    %v2049 = vpack.c.bf16 %v2038, %v2038
    %v2050 = vpack.c.bf16 %v2040, %v2040
    %v2051 = vpack.c.bf16 %v2042, %v2042
    %v2052 = vpack.c.bf16 %v2044, %v2044
    %v2053 = vld [vmem:[#allocation5] sm:$0xff]
    %v2054 = vld [vmem:[#allocation5 + $0x8] sm:$0xff]
    %v2055 = vld [vmem:[#allocation5 + $0x10] sm:$0xff]
    %v2056 = vld [vmem:[#allocation5 + $0x18] sm:$0xff]
    %v2057 = vld [vmem:[#allocation5 + $0x20] sm:$0xff]
    %v2058 = vld [vmem:[#allocation5 + $0x28] sm:$0xff]
    %v2059 = vld [vmem:[#allocation5 + $0x30] sm:$0xff]
    %v2060 = vld [vmem:[#allocation5 + $0x38] sm:$0xff]
    %v2061 = vld [vmem:[#allocation5 + $0x40] sm:$0xff]
    %v2062 = vld [vmem:[#allocation5 + $0x48] sm:$0xff]
    %v2063 = vld [vmem:[#allocation5 + $0x50] sm:$0xff]
    %v2064 = vld [vmem:[#allocation5 + $0x58] sm:$0xff]
    %v2065 = vld [vmem:[#allocation5 + $0x60] sm:$0xff]
    %v2066 = vld [vmem:[#allocation5 + $0x68] sm:$0xff]
    %v2067 = vld [vmem:[#allocation5 + $0x70] sm:$0xff]
    %v2068 = vld [vmem:[#allocation5 + $0x78] sm:$0xff]
    %v2069 = vld [vmem:[#allocation5 + $0x80] sm:$0xff]
    %v2070 = vld [vmem:[#allocation5 + $0x88] sm:$0xff]
    %v2071 = vld [vmem:[#allocation5 + $0x90] sm:$0xff]
    %v2072 = vld [vmem:[#allocation5 + $0x98] sm:$0xff]
    %v2073 = vld [vmem:[#allocation5 + $0xa0] sm:$0xff]
    %v2074 = vld [vmem:[#allocation5 + $0xa8] sm:$0xff]
    %v2075 = vld [vmem:[#allocation5 + $0xb0] sm:$0xff]
    %v2076 = vld [vmem:[#allocation5 + $0xb8] sm:$0xff]
    %v2077 = vld [vmem:[#allocation5 + $0xc0] sm:$0xff]
    %v2078 = vld [vmem:[#allocation5 + $0xc8] sm:$0xff]
    %v2079 = vld [vmem:[#allocation5 + $0xd0] sm:$0xff]
    %v2080 = vld [vmem:[#allocation5 + $0xd8] sm:$0xff]
    %v2081 = vld [vmem:[#allocation5 + $0xe0] sm:$0xff]
    %v2082 = vld [vmem:[#allocation5 + $0xe8] sm:$0xff]
    %v2083 = vld [vmem:[#allocation5 + $0xf0] sm:$0xff]
    %v2084 = vld [vmem:[#allocation5 + $0xf8] sm:$0xff]
    %v2085 = vld [vmem:[#allocation5 + $0x100] sm:$0xff]
    %v2086 = vld [vmem:[#allocation5 + $0x108] sm:$0xff]
    %v2087 = vld [vmem:[#allocation5 + $0x110] sm:$0xff]
    %v2088 = vld [vmem:[#allocation5 + $0x118] sm:$0xff]
    %v2089 = vld [vmem:[#allocation5 + $0x120] sm:$0xff]
    %v2090 = vld [vmem:[#allocation5 + $0x128] sm:$0xff]
    %v2091 = vld [vmem:[#allocation5 + $0x130] sm:$0xff]
    %v2092 = vld [vmem:[#allocation5 + $0x138] sm:$0xff]
    %v2093 = vld [vmem:[#allocation5 + $0x140] sm:$0xff]
    %v2094 = vld [vmem:[#allocation5 + $0x148] sm:$0xff]
    %v2095 = vld [vmem:[#allocation5 + $0x150] sm:$0xff]
    %v2096 = vld [vmem:[#allocation5 + $0x158] sm:$0xff]
    %v2097 = vld [vmem:[#allocation5 + $0x160] sm:$0xff]
    %v2098 = vld [vmem:[#allocation5 + $0x168] sm:$0xff]
    %v2099 = vld [vmem:[#allocation5 + $0x170] sm:$0xff]
    %v2100 = vld [vmem:[#allocation5 + $0x178] sm:$0xff]
    %v2101 = vld [vmem:[#allocation5 + $0x180] sm:$0xff]
    %v2102 = vld [vmem:[#allocation5 + $0x188] sm:$0xff]
    %v2103 = vld [vmem:[#allocation5 + $0x190] sm:$0xff]
    %v2104 = vld [vmem:[#allocation5 + $0x198] sm:$0xff]
    %v2105 = vld [vmem:[#allocation5 + $0x1a0] sm:$0xff]
    %v2106 = vld [vmem:[#allocation5 + $0x1a8] sm:$0xff]
    %v2107 = vld [vmem:[#allocation5 + $0x1b0] sm:$0xff]
    %v2108 = vld [vmem:[#allocation5 + $0x1b8] sm:$0xff]
    %v2109 = vld [vmem:[#allocation5 + $0x1c0] sm:$0xff]
    %v2110 = vld [vmem:[#allocation5 + $0x1c8] sm:$0xff]
    %v2111 = vld [vmem:[#allocation5 + $0x1d0] sm:$0xff]
    %v2112 = vld [vmem:[#allocation5 + $0x1d8] sm:$0xff]
    %v2113 = vld [vmem:[#allocation5 + $0x1e0] sm:$0xff]
    %v2114 = vld [vmem:[#allocation5 + $0x1e8] sm:$0xff]
    %v2115 = vld [vmem:[#allocation5 + $0x1f0] sm:$0xff]
    %v2116 = vld [vmem:[#allocation5 + $0x1f8] sm:$0xff]
    %v2117 = vld [vmem:[#allocation5 + $0x200] sm:$0xff]
    %v2118 = vld [vmem:[#allocation5 + $0x208] sm:$0xff]
    %v2119 = vld [vmem:[#allocation5 + $0x210] sm:$0xff]
    %v2120 = vld [vmem:[#allocation5 + $0x218] sm:$0xff]
    %v2121 = vld [vmem:[#allocation5 + $0x220] sm:$0xff]
    %v2122 = vld [vmem:[#allocation5 + $0x228] sm:$0xff]
    %v2123 = vld [vmem:[#allocation5 + $0x230] sm:$0xff]
    %v2124 = vld [vmem:[#allocation5 + $0x238] sm:$0xff]
    %v2125 = vld [vmem:[#allocation5 + $0x240] sm:$0xff]
    %v2126 = vld [vmem:[#allocation5 + $0x248] sm:$0xff]
    %v2127 = vld [vmem:[#allocation5 + $0x250] sm:$0xff]
    %v2128 = vld [vmem:[#allocation5 + $0x258] sm:$0xff]
    %v2129 = vld [vmem:[#allocation5 + $0x260] sm:$0xff]
    %v2130 = vld [vmem:[#allocation5 + $0x268] sm:$0xff]
    %v2131 = vld [vmem:[#allocation5 + $0x270] sm:$0xff]
    %v2132 = vld [vmem:[#allocation5 + $0x278] sm:$0xff]
    %v2133 = vld [vmem:[#allocation5 + $0x280] sm:$0xff]
    %v2134 = vld [vmem:[#allocation5 + $0x288] sm:$0xff]
    %v2135 = vld [vmem:[#allocation5 + $0x290] sm:$0xff]
    %v2136 = vld [vmem:[#allocation5 + $0x298] sm:$0xff]
    %v2137 = vld [vmem:[#allocation5 + $0x2a0] sm:$0xff]
    %v2138 = vld [vmem:[#allocation5 + $0x2a8] sm:$0xff]
    %v2139 = vld [vmem:[#allocation5 + $0x2b0] sm:$0xff]
    %v2140 = vld [vmem:[#allocation5 + $0x2b8] sm:$0xff]
    %v2141 = vld [vmem:[#allocation5 + $0x2c0] sm:$0xff]
    %v2142 = vld [vmem:[#allocation5 + $0x2c8] sm:$0xff]
    %v2143 = vld [vmem:[#allocation5 + $0x2d0] sm:$0xff]
    %v2144 = vld [vmem:[#allocation5 + $0x2d8] sm:$0xff]
    %v2145 = vld [vmem:[#allocation5 + $0x2e0] sm:$0xff]
    %v2146 = vld [vmem:[#allocation5 + $0x2e8] sm:$0xff]
    %v2147 = vld [vmem:[#allocation5 + $0x2f0] sm:$0xff]
    %v2148 = vld [vmem:[#allocation5 + $0x2f8] sm:$0xff]
    %v2149 = vld [vmem:[#allocation5 + $0x300] sm:$0xff]
    %v2150 = vld [vmem:[#allocation5 + $0x308] sm:$0xff]
    %v2151 = vld [vmem:[#allocation5 + $0x310] sm:$0xff]
    %v2152 = vld [vmem:[#allocation5 + $0x318] sm:$0xff]
    %v2153 = vld [vmem:[#allocation5 + $0x320] sm:$0xff]
    %v2154 = vld [vmem:[#allocation5 + $0x328] sm:$0xff]
    %v2155 = vld [vmem:[#allocation5 + $0x330] sm:$0xff]
    %v2156 = vld [vmem:[#allocation5 + $0x338] sm:$0xff]
    %v2157 = vld [vmem:[#allocation5 + $0x340] sm:$0xff]
    %v2158 = vld [vmem:[#allocation5 + $0x348] sm:$0xff]
    %v2159 = vld [vmem:[#allocation5 + $0x350] sm:$0xff]
    %v2160 = vld [vmem:[#allocation5 + $0x358] sm:$0xff]
    %v2161 = vld [vmem:[#allocation5 + $0x360] sm:$0xff]
    %v2162 = vld [vmem:[#allocation5 + $0x368] sm:$0xff]
    %v2163 = vld [vmem:[#allocation5 + $0x370] sm:$0xff]
    %v2164 = vld [vmem:[#allocation5 + $0x378] sm:$0xff]
    %v2165 = vld [vmem:[#allocation5 + $0x380] sm:$0xff]
    %v2166 = vld [vmem:[#allocation5 + $0x388] sm:$0xff]
    %v2167 = vld [vmem:[#allocation5 + $0x390] sm:$0xff]
    %v2168 = vld [vmem:[#allocation5 + $0x398] sm:$0xff]
    %v2169 = vld [vmem:[#allocation5 + $0x3a0] sm:$0xff]
    %v2170 = vld [vmem:[#allocation5 + $0x3a8] sm:$0xff]
    %v2171 = vld [vmem:[#allocation5 + $0x3b0] sm:$0xff]
    %v2172 = vld [vmem:[#allocation5 + $0x3b8] sm:$0xff]
    %v2173 = vld [vmem:[#allocation5 + $0x3c0] sm:$0xff]
    %v2174 = vld [vmem:[#allocation5 + $0x3c8] sm:$0xff]
    %v2175 = vld [vmem:[#allocation5 + $0x3d0] sm:$0xff]
    %v2176 = vld [vmem:[#allocation5 + $0x3d8] sm:$0xff]
    %v2177 = vld [vmem:[#allocation5 + $0x3e0] sm:$0xff]
    %v2178 = vld [vmem:[#allocation5 + $0x3e8] sm:$0xff]
    %v2179 = vld [vmem:[#allocation5 + $0x3f0] sm:$0xff]
    %v2180 = vld [vmem:[#allocation5 + $0x3f8] sm:$0xff]
    %v2181 = vld [vmem:[#allocation5 + $0x400] sm:$0xff]
    %v2182 = vld [vmem:[#allocation5 + $0x408] sm:$0xff]
    %v2183 = vld [vmem:[#allocation5 + $0x410] sm:$0xff]
    %v2184 = vld [vmem:[#allocation5 + $0x418] sm:$0xff]
    %v2185 = vld [vmem:[#allocation5 + $0x420] sm:$0xff]
    %v2186 = vld [vmem:[#allocation5 + $0x428] sm:$0xff]
    %v2187 = vld [vmem:[#allocation5 + $0x430] sm:$0xff]
    %v2188 = vld [vmem:[#allocation5 + $0x438] sm:$0xff]
    %v2189 = vld [vmem:[#allocation5 + $0x440] sm:$0xff]
    %v2190 = vld [vmem:[#allocation5 + $0x448] sm:$0xff]
    %v2191 = vld [vmem:[#allocation5 + $0x450] sm:$0xff]
    %v2192 = vld [vmem:[#allocation5 + $0x458] sm:$0xff]
    %v2193 = vld [vmem:[#allocation5 + $0x460] sm:$0xff]
    %v2194 = vld [vmem:[#allocation5 + $0x468] sm:$0xff]
    %v2195 = vld [vmem:[#allocation5 + $0x470] sm:$0xff]
    %v2196 = vld [vmem:[#allocation5 + $0x478] sm:$0xff]
    %v2197 = vld [vmem:[#allocation5 + $0x480] sm:$0xff]
    %v2198 = vld [vmem:[#allocation5 + $0x488] sm:$0xff]
    %v2199 = vld [vmem:[#allocation5 + $0x490] sm:$0xff]
    %v2200 = vld [vmem:[#allocation5 + $0x498] sm:$0xff]
    %v2201 = vld [vmem:[#allocation5 + $0x4a0] sm:$0xff]
    %v2202 = vld [vmem:[#allocation5 + $0x4a8] sm:$0xff]
    %v2203 = vld [vmem:[#allocation5 + $0x4b0] sm:$0xff]
    %v2204 = vld [vmem:[#allocation5 + $0x4b8] sm:$0xff]
    %v2205 = vld [vmem:[#allocation5 + $0x4c0] sm:$0xff]
    %v2206 = vld [vmem:[#allocation5 + $0x4c8] sm:$0xff]
    %v2207 = vld [vmem:[#allocation5 + $0x4d0] sm:$0xff]
    %v2208 = vld [vmem:[#allocation5 + $0x4d8] sm:$0xff]
    %v2209 = vld [vmem:[#allocation5 + $0x4e0] sm:$0xff]
    %v2210 = vld [vmem:[#allocation5 + $0x4e8] sm:$0xff]
    %v2211 = vld [vmem:[#allocation5 + $0x4f0] sm:$0xff]
    %v2212 = vld [vmem:[#allocation5 + $0x4f8] sm:$0xff]
    %v2213 = vld [vmem:[#allocation5 + $0x500] sm:$0xff]
    %v2214 = vld [vmem:[#allocation5 + $0x508] sm:$0xff]
    %v2215 = vld [vmem:[#allocation5 + $0x510] sm:$0xff]
    %v2216 = vld [vmem:[#allocation5 + $0x518] sm:$0xff]
    %v2217 = vld [vmem:[#allocation5 + $0x520] sm:$0xff]
    %v2218 = vld [vmem:[#allocation5 + $0x528] sm:$0xff]
    %v2219 = vld [vmem:[#allocation5 + $0x530] sm:$0xff]
    %v2220 = vld [vmem:[#allocation5 + $0x538] sm:$0xff]
    %v2221 = vld [vmem:[#allocation5 + $0x540] sm:$0xff]
    %v2222 = vld [vmem:[#allocation5 + $0x548] sm:$0xff]
    %v2223 = vld [vmem:[#allocation5 + $0x550] sm:$0xff]
    %v2224 = vld [vmem:[#allocation5 + $0x558] sm:$0xff]
    %v2225 = vld [vmem:[#allocation5 + $0x560] sm:$0xff]
    %v2226 = vld [vmem:[#allocation5 + $0x568] sm:$0xff]
    %v2227 = vld [vmem:[#allocation5 + $0x570] sm:$0xff]
    %v2228 = vld [vmem:[#allocation5 + $0x578] sm:$0xff]
    %v2229 = vld [vmem:[#allocation5 + $0x580] sm:$0xff]
    %v2230 = vld [vmem:[#allocation5 + $0x588] sm:$0xff]
    %v2231 = vld [vmem:[#allocation5 + $0x590] sm:$0xff]
    %v2232 = vld [vmem:[#allocation5 + $0x598] sm:$0xff]
    %v2233 = vld [vmem:[#allocation5 + $0x5a0] sm:$0xff]
    %v2234 = vld [vmem:[#allocation5 + $0x5a8] sm:$0xff]
    %v2235 = vld [vmem:[#allocation5 + $0x5b0] sm:$0xff]
    %v2236 = vld [vmem:[#allocation5 + $0x5b8] sm:$0xff]
    %v2237 = vld [vmem:[#allocation5 + $0x5c0] sm:$0xff]
    %v2238 = vld [vmem:[#allocation5 + $0x5c8] sm:$0xff]
    %v2239 = vld [vmem:[#allocation5 + $0x5d0] sm:$0xff]
    %v2240 = vld [vmem:[#allocation5 + $0x5d8] sm:$0xff]
    %v2241 = vld [vmem:[#allocation5 + $0x5e0] sm:$0xff]
    %v2242 = vld [vmem:[#allocation5 + $0x5e8] sm:$0xff]
    %v2243 = vld [vmem:[#allocation5 + $0x5f0] sm:$0xff]
    %v2244 = vld [vmem:[#allocation5 + $0x5f8] sm:$0xff]
    %v2245 = vld [vmem:[#allocation5 + $0x600] sm:$0xff]
    %v2246 = vld [vmem:[#allocation5 + $0x608] sm:$0xff]
    %v2247 = vld [vmem:[#allocation5 + $0x610] sm:$0xff]
    %v2248 = vld [vmem:[#allocation5 + $0x618] sm:$0xff]
    %v2249 = vld [vmem:[#allocation5 + $0x620] sm:$0xff]
    %v2250 = vld [vmem:[#allocation5 + $0x628] sm:$0xff]
    %v2251 = vld [vmem:[#allocation5 + $0x630] sm:$0xff]
    %v2252 = vld [vmem:[#allocation5 + $0x638] sm:$0xff]
    %v2253 = vld [vmem:[#allocation5 + $0x640] sm:$0xff]
    %v2254 = vld [vmem:[#allocation5 + $0x648] sm:$0xff]
    %v2255 = vld [vmem:[#allocation5 + $0x650] sm:$0xff]
    %v2256 = vld [vmem:[#allocation5 + $0x658] sm:$0xff]
    %v2257 = vld [vmem:[#allocation5 + $0x660] sm:$0xff]
    %v2258 = vld [vmem:[#allocation5 + $0x668] sm:$0xff]
    %v2259 = vld [vmem:[#allocation5 + $0x670] sm:$0xff]
    %v2260 = vld [vmem:[#allocation5 + $0x678] sm:$0xff]
    %v2261 = vld [vmem:[#allocation5 + $0x680] sm:$0xff]
    %v2262 = vld [vmem:[#allocation5 + $0x688] sm:$0xff]
    %v2263 = vld [vmem:[#allocation5 + $0x690] sm:$0xff]
    %v2264 = vld [vmem:[#allocation5 + $0x698] sm:$0xff]
    %v2265 = vld [vmem:[#allocation5 + $0x6a0] sm:$0xff]
    %v2266 = vld [vmem:[#allocation5 + $0x6a8] sm:$0xff]
    %v2267 = vld [vmem:[#allocation5 + $0x6b0] sm:$0xff]
    %v2268 = vld [vmem:[#allocation5 + $0x6b8] sm:$0xff]
    %v2269 = vld [vmem:[#allocation5 + $0x6c0] sm:$0xff]
    %v2270 = vld [vmem:[#allocation5 + $0x6c8] sm:$0xff]
    %v2271 = vld [vmem:[#allocation5 + $0x6d0] sm:$0xff]
    %v2272 = vld [vmem:[#allocation5 + $0x6d8] sm:$0xff]
    %v2273 = vld [vmem:[#allocation5 + $0x6e0] sm:$0xff]
    %v2274 = vld [vmem:[#allocation5 + $0x6e8] sm:$0xff]
    %v2275 = vld [vmem:[#allocation5 + $0x6f0] sm:$0xff]
    %v2276 = vld [vmem:[#allocation5 + $0x6f8] sm:$0xff]
    %v2277 = vld [vmem:[#allocation5 + $0x700] sm:$0xff]
    %v2278 = vld [vmem:[#allocation5 + $0x708] sm:$0xff]
    %v2279 = vld [vmem:[#allocation5 + $0x710] sm:$0xff]
    %v2280 = vld [vmem:[#allocation5 + $0x718] sm:$0xff]
    %v2281 = vld [vmem:[#allocation5 + $0x720] sm:$0xff]
    %v2282 = vld [vmem:[#allocation5 + $0x728] sm:$0xff]
    %v2283 = vld [vmem:[#allocation5 + $0x730] sm:$0xff]
    %v2284 = vld [vmem:[#allocation5 + $0x738] sm:$0xff]
    %v2285 = vld [vmem:[#allocation5 + $0x740] sm:$0xff]
    %v2286 = vld [vmem:[#allocation5 + $0x748] sm:$0xff]
    %v2287 = vld [vmem:[#allocation5 + $0x750] sm:$0xff]
    %v2288 = vld [vmem:[#allocation5 + $0x758] sm:$0xff]
    %v2289 = vld [vmem:[#allocation5 + $0x760] sm:$0xff]
    %v2290 = vld [vmem:[#allocation5 + $0x768] sm:$0xff]
    %v2291 = vld [vmem:[#allocation5 + $0x770] sm:$0xff]
    %v2292 = vld [vmem:[#allocation5 + $0x778] sm:$0xff]
    %v2293 = vld [vmem:[#allocation5 + $0x780] sm:$0xff]
    %v2294 = vld [vmem:[#allocation5 + $0x788] sm:$0xff]
    %v2295 = vld [vmem:[#allocation5 + $0x790] sm:$0xff]
    %v2296 = vld [vmem:[#allocation5 + $0x798] sm:$0xff]
    %v2297 = vld [vmem:[#allocation5 + $0x7a0] sm:$0xff]
    %v2298 = vld [vmem:[#allocation5 + $0x7a8] sm:$0xff]
    %v2299 = vld [vmem:[#allocation5 + $0x7b0] sm:$0xff]
    %v2300 = vld [vmem:[#allocation5 + $0x7b8] sm:$0xff]
    %v2301 = vld [vmem:[#allocation5 + $0x7c0] sm:$0xff]
    %v2302 = vld [vmem:[#allocation5 + $0x7c8] sm:$0xff]
    %v2303 = vld [vmem:[#allocation5 + $0x7d0] sm:$0xff]
    %v2304 = vld [vmem:[#allocation5 + $0x7d8] sm:$0xff]
    %v2305 = vld [vmem:[#allocation5 + $0x7e0] sm:$0xff]
    %v2306 = vld [vmem:[#allocation5 + $0x7e8] sm:$0xff]
    %v2307 = vld [vmem:[#allocation5 + $0x7f0] sm:$0xff]
    %v2308 = vld [vmem:[#allocation5 + $0x7f8] sm:$0xff]
    %v2309 = vld [vmem:[%s4] sm:$0xf]
    %v2311 = vlaneseq
    %v2312 = vshrl.u32 %v2311, 7
    %v2313 = vsub.s32 0, %v2312
    %v2314 = vrot.slane %v2309, %v2313
    %v2315 = vlaneseq
    %v2316 = vshrl.u32 %v2315, 7
    %v2317 = vsub.s32 1, %v2316
    %v2318 = vrot.slane %v2309, %v2317
    %v2319 = vlaneseq
    %v2320 = vshrl.u32 %v2319, 7
    %v2321 = vsub.s32 2, %v2320
    %v2322 = vrot.slane %v2309, %v2321
    %v2323 = vlaneseq
    %v2324 = vshrl.u32 %v2323, 7
    %v2325 = vsub.s32 3, %v2324
    %v2326 = vrot.slane %v2309, %v2325
    %v2587 = vunpack.c.l.b16 %v2053
    %v2588 = vunpack.c.h.b16 %v2053
    %v2589 = vunpack.c.l.b16 %v2054
    %v2590 = vunpack.c.h.b16 %v2054
    %v2591 = vunpack.c.l.b16 %v2055
    %v2592 = vunpack.c.h.b16 %v2055
    %v2593 = vunpack.c.l.b16 %v2056
    %v2594 = vunpack.c.h.b16 %v2056
    %v2595 = vunpack.c.l.b16 %v2057
    %v2596 = vunpack.c.h.b16 %v2057
    %v2597 = vunpack.c.l.b16 %v2058
    %v2598 = vunpack.c.h.b16 %v2058
    %v2599 = vunpack.c.l.b16 %v2059
    %v2600 = vunpack.c.h.b16 %v2059
    %v2601 = vunpack.c.l.b16 %v2060
    %v2602 = vunpack.c.h.b16 %v2060
    %v2603 = vunpack.c.l.b16 %v2061
    %v2604 = vunpack.c.h.b16 %v2061
    %v2605 = vunpack.c.l.b16 %v2062
    %v2606 = vunpack.c.h.b16 %v2062
    %v2607 = vunpack.c.l.b16 %v2063
    %v2608 = vunpack.c.h.b16 %v2063
    %v2609 = vunpack.c.l.b16 %v2064
    %v2610 = vunpack.c.h.b16 %v2064
    %v2611 = vunpack.c.l.b16 %v2065
    %v2612 = vunpack.c.h.b16 %v2065
    %v2613 = vunpack.c.l.b16 %v2066
    %v2614 = vunpack.c.h.b16 %v2066
    %v2615 = vunpack.c.l.b16 %v2067
    %v2616 = vunpack.c.h.b16 %v2067
    %v2617 = vunpack.c.l.b16 %v2068
    %v2618 = vunpack.c.h.b16 %v2068
    %v2619 = vunpack.c.l.b16 %v2069
    %v2620 = vunpack.c.h.b16 %v2069
    %v2621 = vunpack.c.l.b16 %v2070
    %v2622 = vunpack.c.h.b16 %v2070
    %v2623 = vunpack.c.l.b16 %v2071
    %v2624 = vunpack.c.h.b16 %v2071
    %v2625 = vunpack.c.l.b16 %v2072
    %v2626 = vunpack.c.h.b16 %v2072
    %v2627 = vunpack.c.l.b16 %v2073
    %v2628 = vunpack.c.h.b16 %v2073
    %v2629 = vunpack.c.l.b16 %v2074
    %v2630 = vunpack.c.h.b16 %v2074
    %v2631 = vunpack.c.l.b16 %v2075
    %v2632 = vunpack.c.h.b16 %v2075
    %v2633 = vunpack.c.l.b16 %v2076
    %v2634 = vunpack.c.h.b16 %v2076
    %v2635 = vunpack.c.l.b16 %v2077
    %v2636 = vunpack.c.h.b16 %v2077
    %v2637 = vunpack.c.l.b16 %v2078
    %v2638 = vunpack.c.h.b16 %v2078
    %v2639 = vunpack.c.l.b16 %v2079
    %v2640 = vunpack.c.h.b16 %v2079
    %v2641 = vunpack.c.l.b16 %v2080
    %v2642 = vunpack.c.h.b16 %v2080
    %v2643 = vunpack.c.l.b16 %v2081
    %v2644 = vunpack.c.h.b16 %v2081
    %v2645 = vunpack.c.l.b16 %v2082
    %v2646 = vunpack.c.h.b16 %v2082
    %v2647 = vunpack.c.l.b16 %v2083
    %v2648 = vunpack.c.h.b16 %v2083
    %v2649 = vunpack.c.l.b16 %v2084
    %v2650 = vunpack.c.h.b16 %v2084
    %v2651 = vunpack.c.l.b16 %v2085
    %v2652 = vunpack.c.h.b16 %v2085
    %v2653 = vunpack.c.l.b16 %v2086
    %v2654 = vunpack.c.h.b16 %v2086
    %v2655 = vunpack.c.l.b16 %v2087
    %v2656 = vunpack.c.h.b16 %v2087
    %v2657 = vunpack.c.l.b16 %v2088
    %v2658 = vunpack.c.h.b16 %v2088
    %v2659 = vunpack.c.l.b16 %v2089
    %v2660 = vunpack.c.h.b16 %v2089
    %v2661 = vunpack.c.l.b16 %v2090
    %v2662 = vunpack.c.h.b16 %v2090
    %v2663 = vunpack.c.l.b16 %v2091
    %v2664 = vunpack.c.h.b16 %v2091
    %v2665 = vunpack.c.l.b16 %v2092
    %v2666 = vunpack.c.h.b16 %v2092
    %v2667 = vunpack.c.l.b16 %v2093
    %v2668 = vunpack.c.h.b16 %v2093
    %v2669 = vunpack.c.l.b16 %v2094
    %v2670 = vunpack.c.h.b16 %v2094
    %v2671 = vunpack.c.l.b16 %v2095
    %v2672 = vunpack.c.h.b16 %v2095
    %v2673 = vunpack.c.l.b16 %v2096
    %v2674 = vunpack.c.h.b16 %v2096
    %v2675 = vunpack.c.l.b16 %v2097
    %v2676 = vunpack.c.h.b16 %v2097
    %v2677 = vunpack.c.l.b16 %v2098
    %v2678 = vunpack.c.h.b16 %v2098
    %v2679 = vunpack.c.l.b16 %v2099
    %v2680 = vunpack.c.h.b16 %v2099
    %v2681 = vunpack.c.l.b16 %v2100
    %v2682 = vunpack.c.h.b16 %v2100
    %v2683 = vunpack.c.l.b16 %v2101
    %v2684 = vunpack.c.h.b16 %v2101
    %v2685 = vunpack.c.l.b16 %v2102
    %v2686 = vunpack.c.h.b16 %v2102
    %v2687 = vunpack.c.l.b16 %v2103
    %v2688 = vunpack.c.h.b16 %v2103
    %v2689 = vunpack.c.l.b16 %v2104
    %v2690 = vunpack.c.h.b16 %v2104
    %v2691 = vunpack.c.l.b16 %v2105
    %v2692 = vunpack.c.h.b16 %v2105
    %v2693 = vunpack.c.l.b16 %v2106
    %v2694 = vunpack.c.h.b16 %v2106
    %v2695 = vunpack.c.l.b16 %v2107
    %v2696 = vunpack.c.h.b16 %v2107
    %v2697 = vunpack.c.l.b16 %v2108
    %v2698 = vunpack.c.h.b16 %v2108
    %v2699 = vunpack.c.l.b16 %v2109
    %v2700 = vunpack.c.h.b16 %v2109
    %v2701 = vunpack.c.l.b16 %v2110
    %v2702 = vunpack.c.h.b16 %v2110
    %v2703 = vunpack.c.l.b16 %v2111
    %v2704 = vunpack.c.h.b16 %v2111
    %v2705 = vunpack.c.l.b16 %v2112
    %v2706 = vunpack.c.h.b16 %v2112
    %v2707 = vunpack.c.l.b16 %v2113
    %v2708 = vunpack.c.h.b16 %v2113
    %v2709 = vunpack.c.l.b16 %v2114
    %v2710 = vunpack.c.h.b16 %v2114
    %v2711 = vunpack.c.l.b16 %v2115
    %v2712 = vunpack.c.h.b16 %v2115
    %v2713 = vunpack.c.l.b16 %v2116
    %v2714 = vunpack.c.h.b16 %v2116
    %v2715 = vunpack.c.l.b16 %v2117
    %v2716 = vunpack.c.h.b16 %v2117
    %v2717 = vunpack.c.l.b16 %v2118
    %v2718 = vunpack.c.h.b16 %v2118
    %v2719 = vunpack.c.l.b16 %v2119
    %v2720 = vunpack.c.h.b16 %v2119
    %v2721 = vunpack.c.l.b16 %v2120
    %v2722 = vunpack.c.h.b16 %v2120
    %v2723 = vunpack.c.l.b16 %v2121
    %v2724 = vunpack.c.h.b16 %v2121
    %v2725 = vunpack.c.l.b16 %v2122
    %v2726 = vunpack.c.h.b16 %v2122
    %v2727 = vunpack.c.l.b16 %v2123
    %v2728 = vunpack.c.h.b16 %v2123
    %v2729 = vunpack.c.l.b16 %v2124
    %v2730 = vunpack.c.h.b16 %v2124
    %v2731 = vunpack.c.l.b16 %v2125
    %v2732 = vunpack.c.h.b16 %v2125
    %v2733 = vunpack.c.l.b16 %v2126
    %v2734 = vunpack.c.h.b16 %v2126
    %v2735 = vunpack.c.l.b16 %v2127
    %v2736 = vunpack.c.h.b16 %v2127
    %v2737 = vunpack.c.l.b16 %v2128
    %v2738 = vunpack.c.h.b16 %v2128
    %v2739 = vunpack.c.l.b16 %v2129
    %v2740 = vunpack.c.h.b16 %v2129
    %v2741 = vunpack.c.l.b16 %v2130
    %v2742 = vunpack.c.h.b16 %v2130
    %v2743 = vunpack.c.l.b16 %v2131
    %v2744 = vunpack.c.h.b16 %v2131
    %v2745 = vunpack.c.l.b16 %v2132
    %v2746 = vunpack.c.h.b16 %v2132
    %v2747 = vunpack.c.l.b16 %v2133
    %v2748 = vunpack.c.h.b16 %v2133
    %v2749 = vunpack.c.l.b16 %v2134
    %v2750 = vunpack.c.h.b16 %v2134
    %v2751 = vunpack.c.l.b16 %v2135
    %v2752 = vunpack.c.h.b16 %v2135
    %v2753 = vunpack.c.l.b16 %v2136
    %v2754 = vunpack.c.h.b16 %v2136
    %v2755 = vunpack.c.l.b16 %v2137
    %v2756 = vunpack.c.h.b16 %v2137
    %v2757 = vunpack.c.l.b16 %v2138
    %v2758 = vunpack.c.h.b16 %v2138
    %v2759 = vunpack.c.l.b16 %v2139
    %v2760 = vunpack.c.h.b16 %v2139
    %v2761 = vunpack.c.l.b16 %v2140
    %v2762 = vunpack.c.h.b16 %v2140
    %v2763 = vunpack.c.l.b16 %v2141
    %v2764 = vunpack.c.h.b16 %v2141
    %v2765 = vunpack.c.l.b16 %v2142
    %v2766 = vunpack.c.h.b16 %v2142
    %v2767 = vunpack.c.l.b16 %v2143
    %v2768 = vunpack.c.h.b16 %v2143
    %v2769 = vunpack.c.l.b16 %v2144
    %v2770 = vunpack.c.h.b16 %v2144
    %v2771 = vunpack.c.l.b16 %v2145
    %v2772 = vunpack.c.h.b16 %v2145
    %v2773 = vunpack.c.l.b16 %v2146
    %v2774 = vunpack.c.h.b16 %v2146
    %v2775 = vunpack.c.l.b16 %v2147
    %v2776 = vunpack.c.h.b16 %v2147
    %v2777 = vunpack.c.l.b16 %v2148
    %v2778 = vunpack.c.h.b16 %v2148
    %v2779 = vunpack.c.l.b16 %v2149
    %v2780 = vunpack.c.h.b16 %v2149
    %v2781 = vunpack.c.l.b16 %v2150
    %v2782 = vunpack.c.h.b16 %v2150
    %v2783 = vunpack.c.l.b16 %v2151
    %v2784 = vunpack.c.h.b16 %v2151
    %v2785 = vunpack.c.l.b16 %v2152
    %v2786 = vunpack.c.h.b16 %v2152
    %v2787 = vunpack.c.l.b16 %v2153
    %v2788 = vunpack.c.h.b16 %v2153
    %v2789 = vunpack.c.l.b16 %v2154
    %v2790 = vunpack.c.h.b16 %v2154
    %v2791 = vunpack.c.l.b16 %v2155
    %v2792 = vunpack.c.h.b16 %v2155
    %v2793 = vunpack.c.l.b16 %v2156
    %v2794 = vunpack.c.h.b16 %v2156
    %v2795 = vunpack.c.l.b16 %v2157
    %v2796 = vunpack.c.h.b16 %v2157
    %v2797 = vunpack.c.l.b16 %v2158
    %v2798 = vunpack.c.h.b16 %v2158
    %v2799 = vunpack.c.l.b16 %v2159
    %v2800 = vunpack.c.h.b16 %v2159
    %v2801 = vunpack.c.l.b16 %v2160
    %v2802 = vunpack.c.h.b16 %v2160
    %v2803 = vunpack.c.l.b16 %v2161
    %v2804 = vunpack.c.h.b16 %v2161
    %v2805 = vunpack.c.l.b16 %v2162
    %v2806 = vunpack.c.h.b16 %v2162
    %v2807 = vunpack.c.l.b16 %v2163
    %v2808 = vunpack.c.h.b16 %v2163
    %v2809 = vunpack.c.l.b16 %v2164
    %v2810 = vunpack.c.h.b16 %v2164
    %v2811 = vunpack.c.l.b16 %v2165
    %v2812 = vunpack.c.h.b16 %v2165
    %v2813 = vunpack.c.l.b16 %v2166
    %v2814 = vunpack.c.h.b16 %v2166
    %v2815 = vunpack.c.l.b16 %v2167
    %v2816 = vunpack.c.h.b16 %v2167
    %v2817 = vunpack.c.l.b16 %v2168
    %v2818 = vunpack.c.h.b16 %v2168
    %v2819 = vunpack.c.l.b16 %v2169
    %v2820 = vunpack.c.h.b16 %v2169
    %v2821 = vunpack.c.l.b16 %v2170
    %v2822 = vunpack.c.h.b16 %v2170
    %v2823 = vunpack.c.l.b16 %v2171
    %v2824 = vunpack.c.h.b16 %v2171
    %v2825 = vunpack.c.l.b16 %v2172
    %v2826 = vunpack.c.h.b16 %v2172
    %v2827 = vunpack.c.l.b16 %v2173
    %v2828 = vunpack.c.h.b16 %v2173
    %v2829 = vunpack.c.l.b16 %v2174
    %v2830 = vunpack.c.h.b16 %v2174
    %v2831 = vunpack.c.l.b16 %v2175
    %v2832 = vunpack.c.h.b16 %v2175
    %v2833 = vunpack.c.l.b16 %v2176
    %v2834 = vunpack.c.h.b16 %v2176
    %v2835 = vunpack.c.l.b16 %v2177
    %v2836 = vunpack.c.h.b16 %v2177
    %v2837 = vunpack.c.l.b16 %v2178
    %v2838 = vunpack.c.h.b16 %v2178
    %v2839 = vunpack.c.l.b16 %v2179
    %v2840 = vunpack.c.h.b16 %v2179
    %v2841 = vunpack.c.l.b16 %v2180
    %v2842 = vunpack.c.h.b16 %v2180
    %v2843 = vunpack.c.l.b16 %v2181
    %v2844 = vunpack.c.h.b16 %v2181
    %v2845 = vunpack.c.l.b16 %v2182
    %v2846 = vunpack.c.h.b16 %v2182
    %v2847 = vunpack.c.l.b16 %v2183
    %v2848 = vunpack.c.h.b16 %v2183
    %v2849 = vunpack.c.l.b16 %v2184
    %v2850 = vunpack.c.h.b16 %v2184
    %v2851 = vunpack.c.l.b16 %v2185
    %v2852 = vunpack.c.h.b16 %v2185
    %v2853 = vunpack.c.l.b16 %v2186
    %v2854 = vunpack.c.h.b16 %v2186
    %v2855 = vunpack.c.l.b16 %v2187
    %v2856 = vunpack.c.h.b16 %v2187
    %v2857 = vunpack.c.l.b16 %v2188
    %v2858 = vunpack.c.h.b16 %v2188
    %v2859 = vunpack.c.l.b16 %v2189
    %v2860 = vunpack.c.h.b16 %v2189
    %v2861 = vunpack.c.l.b16 %v2190
    %v2862 = vunpack.c.h.b16 %v2190
    %v2863 = vunpack.c.l.b16 %v2191
    %v2864 = vunpack.c.h.b16 %v2191
    %v2865 = vunpack.c.l.b16 %v2192
    %v2866 = vunpack.c.h.b16 %v2192
    %v2867 = vunpack.c.l.b16 %v2193
    %v2868 = vunpack.c.h.b16 %v2193
    %v2869 = vunpack.c.l.b16 %v2194
    %v2870 = vunpack.c.h.b16 %v2194
    %v2871 = vunpack.c.l.b16 %v2195
    %v2872 = vunpack.c.h.b16 %v2195
    %v2873 = vunpack.c.l.b16 %v2196
    %v2874 = vunpack.c.h.b16 %v2196
    %v2875 = vunpack.c.l.b16 %v2197
    %v2876 = vunpack.c.h.b16 %v2197
    %v2877 = vunpack.c.l.b16 %v2198
    %v2878 = vunpack.c.h.b16 %v2198
    %v2879 = vunpack.c.l.b16 %v2199
    %v2880 = vunpack.c.h.b16 %v2199
    %v2881 = vunpack.c.l.b16 %v2200
    %v2882 = vunpack.c.h.b16 %v2200
    %v2883 = vunpack.c.l.b16 %v2201
    %v2884 = vunpack.c.h.b16 %v2201
    %v2885 = vunpack.c.l.b16 %v2202
    %v2886 = vunpack.c.h.b16 %v2202
    %v2887 = vunpack.c.l.b16 %v2203
    %v2888 = vunpack.c.h.b16 %v2203
    %v2889 = vunpack.c.l.b16 %v2204
    %v2890 = vunpack.c.h.b16 %v2204
    %v2891 = vunpack.c.l.b16 %v2205
    %v2892 = vunpack.c.h.b16 %v2205
    %v2893 = vunpack.c.l.b16 %v2206
    %v2894 = vunpack.c.h.b16 %v2206
    %v2895 = vunpack.c.l.b16 %v2207
    %v2896 = vunpack.c.h.b16 %v2207
    %v2897 = vunpack.c.l.b16 %v2208
    %v2898 = vunpack.c.h.b16 %v2208
    %v2899 = vunpack.c.l.b16 %v2209
    %v2900 = vunpack.c.h.b16 %v2209
    %v2901 = vunpack.c.l.b16 %v2210
    %v2902 = vunpack.c.h.b16 %v2210
    %v2903 = vunpack.c.l.b16 %v2211
    %v2904 = vunpack.c.h.b16 %v2211
    %v2905 = vunpack.c.l.b16 %v2212
    %v2906 = vunpack.c.h.b16 %v2212
    %v2907 = vunpack.c.l.b16 %v2213
    %v2908 = vunpack.c.h.b16 %v2213
    %v2909 = vunpack.c.l.b16 %v2214
    %v2910 = vunpack.c.h.b16 %v2214
    %v2911 = vunpack.c.l.b16 %v2215
    %v2912 = vunpack.c.h.b16 %v2215
    %v2913 = vunpack.c.l.b16 %v2216
    %v2914 = vunpack.c.h.b16 %v2216
    %v2915 = vunpack.c.l.b16 %v2217
    %v2916 = vunpack.c.h.b16 %v2217
    %v2917 = vunpack.c.l.b16 %v2218
    %v2918 = vunpack.c.h.b16 %v2218
    %v2919 = vunpack.c.l.b16 %v2219
    %v2920 = vunpack.c.h.b16 %v2219
    %v2921 = vunpack.c.l.b16 %v2220
    %v2922 = vunpack.c.h.b16 %v2220
    %v2923 = vunpack.c.l.b16 %v2221
    %v2924 = vunpack.c.h.b16 %v2221
    %v2925 = vunpack.c.l.b16 %v2222
    %v2926 = vunpack.c.h.b16 %v2222
    %v2927 = vunpack.c.l.b16 %v2223
    %v2928 = vunpack.c.h.b16 %v2223
    %v2929 = vunpack.c.l.b16 %v2224
    %v2930 = vunpack.c.h.b16 %v2224
    %v2931 = vunpack.c.l.b16 %v2225
    %v2932 = vunpack.c.h.b16 %v2225
    %v2933 = vunpack.c.l.b16 %v2226
    %v2934 = vunpack.c.h.b16 %v2226
    %v2935 = vunpack.c.l.b16 %v2227
    %v2936 = vunpack.c.h.b16 %v2227
    %v2937 = vunpack.c.l.b16 %v2228
    %v2938 = vunpack.c.h.b16 %v2228
    %v2939 = vunpack.c.l.b16 %v2229
    %v2940 = vunpack.c.h.b16 %v2229
    %v2941 = vunpack.c.l.b16 %v2230
    %v2942 = vunpack.c.h.b16 %v2230
    %v2943 = vunpack.c.l.b16 %v2231
    %v2944 = vunpack.c.h.b16 %v2231
    %v2945 = vunpack.c.l.b16 %v2232
    %v2946 = vunpack.c.h.b16 %v2232
    %v2947 = vunpack.c.l.b16 %v2233
    %v2948 = vunpack.c.h.b16 %v2233
    %v2949 = vunpack.c.l.b16 %v2234
    %v2950 = vunpack.c.h.b16 %v2234
    %v2951 = vunpack.c.l.b16 %v2235
    %v2952 = vunpack.c.h.b16 %v2235
    %v2953 = vunpack.c.l.b16 %v2236
    %v2954 = vunpack.c.h.b16 %v2236
    %v2955 = vunpack.c.l.b16 %v2237
    %v2956 = vunpack.c.h.b16 %v2237
    %v2957 = vunpack.c.l.b16 %v2238
    %v2958 = vunpack.c.h.b16 %v2238
    %v2959 = vunpack.c.l.b16 %v2239
    %v2960 = vunpack.c.h.b16 %v2239
    %v2961 = vunpack.c.l.b16 %v2240
    %v2962 = vunpack.c.h.b16 %v2240
    %v2963 = vunpack.c.l.b16 %v2241
    %v2964 = vunpack.c.h.b16 %v2241
    %v2965 = vunpack.c.l.b16 %v2242
    %v2966 = vunpack.c.h.b16 %v2242
    %v2967 = vunpack.c.l.b16 %v2243
    %v2968 = vunpack.c.h.b16 %v2243
    %v2969 = vunpack.c.l.b16 %v2244
    %v2970 = vunpack.c.h.b16 %v2244
    %v2971 = vunpack.c.l.b16 %v2245
    %v2972 = vunpack.c.h.b16 %v2245
    %v2973 = vunpack.c.l.b16 %v2246
    %v2974 = vunpack.c.h.b16 %v2246
    %v2975 = vunpack.c.l.b16 %v2247
    %v2976 = vunpack.c.h.b16 %v2247
    %v2977 = vunpack.c.l.b16 %v2248
    %v2978 = vunpack.c.h.b16 %v2248
    %v2979 = vunpack.c.l.b16 %v2249
    %v2980 = vunpack.c.h.b16 %v2249
    %v2981 = vunpack.c.l.b16 %v2250
    %v2982 = vunpack.c.h.b16 %v2250
    %v2983 = vunpack.c.l.b16 %v2251
    %v2984 = vunpack.c.h.b16 %v2251
    %v2985 = vunpack.c.l.b16 %v2252
    %v2986 = vunpack.c.h.b16 %v2252
    %v2987 = vunpack.c.l.b16 %v2253
    %v2988 = vunpack.c.h.b16 %v2253
    %v2989 = vunpack.c.l.b16 %v2254
    %v2990 = vunpack.c.h.b16 %v2254
    %v2991 = vunpack.c.l.b16 %v2255
    %v2992 = vunpack.c.h.b16 %v2255
    %v2993 = vunpack.c.l.b16 %v2256
    %v2994 = vunpack.c.h.b16 %v2256
    %v2995 = vunpack.c.l.b16 %v2257
    %v2996 = vunpack.c.h.b16 %v2257
    %v2997 = vunpack.c.l.b16 %v2258
    %v2998 = vunpack.c.h.b16 %v2258
    %v2999 = vunpack.c.l.b16 %v2259
    %v3000 = vunpack.c.h.b16 %v2259
    %v3001 = vunpack.c.l.b16 %v2260
    %v3002 = vunpack.c.h.b16 %v2260
    %v3003 = vunpack.c.l.b16 %v2261
    %v3004 = vunpack.c.h.b16 %v2261
    %v3005 = vunpack.c.l.b16 %v2262
    %v3006 = vunpack.c.h.b16 %v2262
    %v3007 = vunpack.c.l.b16 %v2263
    %v3008 = vunpack.c.h.b16 %v2263
    %v3009 = vunpack.c.l.b16 %v2264
    %v3010 = vunpack.c.h.b16 %v2264
    %v3011 = vunpack.c.l.b16 %v2265
    %v3012 = vunpack.c.h.b16 %v2265
    %v3013 = vunpack.c.l.b16 %v2266
    %v3014 = vunpack.c.h.b16 %v2266
    %v3015 = vunpack.c.l.b16 %v2267
    %v3016 = vunpack.c.h.b16 %v2267
    %v3017 = vunpack.c.l.b16 %v2268
    %v3018 = vunpack.c.h.b16 %v2268
    %v3019 = vunpack.c.l.b16 %v2269
    %v3020 = vunpack.c.h.b16 %v2269
    %v3021 = vunpack.c.l.b16 %v2270
    %v3022 = vunpack.c.h.b16 %v2270
    %v3023 = vunpack.c.l.b16 %v2271
    %v3024 = vunpack.c.h.b16 %v2271
    %v3025 = vunpack.c.l.b16 %v2272
    %v3026 = vunpack.c.h.b16 %v2272
    %v3027 = vunpack.c.l.b16 %v2273
    %v3028 = vunpack.c.h.b16 %v2273
    %v3029 = vunpack.c.l.b16 %v2274
    %v3030 = vunpack.c.h.b16 %v2274
    %v3031 = vunpack.c.l.b16 %v2275
    %v3032 = vunpack.c.h.b16 %v2275
    %v3033 = vunpack.c.l.b16 %v2276
    %v3034 = vunpack.c.h.b16 %v2276
    %v3035 = vunpack.c.l.b16 %v2277
    %v3036 = vunpack.c.h.b16 %v2277
    %v3037 = vunpack.c.l.b16 %v2278
    %v3038 = vunpack.c.h.b16 %v2278
    %v3039 = vunpack.c.l.b16 %v2279
    %v3040 = vunpack.c.h.b16 %v2279
    %v3041 = vunpack.c.l.b16 %v2280
    %v3042 = vunpack.c.h.b16 %v2280
    %v3043 = vunpack.c.l.b16 %v2281
    %v3044 = vunpack.c.h.b16 %v2281
    %v3045 = vunpack.c.l.b16 %v2282
    %v3046 = vunpack.c.h.b16 %v2282
    %v3047 = vunpack.c.l.b16 %v2283
    %v3048 = vunpack.c.h.b16 %v2283
    %v3049 = vunpack.c.l.b16 %v2284
    %v3050 = vunpack.c.h.b16 %v2284
    %v3051 = vunpack.c.l.b16 %v2285
    %v3052 = vunpack.c.h.b16 %v2285
    %v3053 = vunpack.c.l.b16 %v2286
    %v3054 = vunpack.c.h.b16 %v2286
    %v3055 = vunpack.c.l.b16 %v2287
    %v3056 = vunpack.c.h.b16 %v2287
    %v3057 = vunpack.c.l.b16 %v2288
    %v3058 = vunpack.c.h.b16 %v2288
    %v3059 = vunpack.c.l.b16 %v2289
    %v3060 = vunpack.c.h.b16 %v2289
    %v3061 = vunpack.c.l.b16 %v2290
    %v3062 = vunpack.c.h.b16 %v2290
    %v3063 = vunpack.c.l.b16 %v2291
    %v3064 = vunpack.c.h.b16 %v2291
    %v3065 = vunpack.c.l.b16 %v2292
    %v3066 = vunpack.c.h.b16 %v2292
    %v3067 = vunpack.c.l.b16 %v2293
    %v3068 = vunpack.c.h.b16 %v2293
    %v3069 = vunpack.c.l.b16 %v2294
    %v3070 = vunpack.c.h.b16 %v2294
    %v3071 = vunpack.c.l.b16 %v2295
    %v3072 = vunpack.c.h.b16 %v2295
    %v3073 = vunpack.c.l.b16 %v2296
    %v3074 = vunpack.c.h.b16 %v2296
    %v3075 = vunpack.c.l.b16 %v2297
    %v3076 = vunpack.c.h.b16 %v2297
    %v3077 = vunpack.c.l.b16 %v2298
    %v3078 = vunpack.c.h.b16 %v2298
    %v3079 = vunpack.c.l.b16 %v2299
    %v3080 = vunpack.c.h.b16 %v2299
    %v3081 = vunpack.c.l.b16 %v2300
    %v3082 = vunpack.c.h.b16 %v2300
    %v3083 = vunpack.c.l.b16 %v2301
    %v3084 = vunpack.c.h.b16 %v2301
    %v3085 = vunpack.c.l.b16 %v2302
    %v3086 = vunpack.c.h.b16 %v2302
    %v3087 = vunpack.c.l.b16 %v2303
    %v3088 = vunpack.c.h.b16 %v2303
    %v3089 = vunpack.c.l.b16 %v2304
    %v3090 = vunpack.c.h.b16 %v2304
    %v3091 = vunpack.c.l.b16 %v2305
    %v3092 = vunpack.c.h.b16 %v2305
    %v3093 = vunpack.c.l.b16 %v2306
    %v3094 = vunpack.c.h.b16 %v2306
    %v3095 = vunpack.c.l.b16 %v2307
    %v3096 = vunpack.c.h.b16 %v2307
    %v3097 = vunpack.c.l.b16 %v2308
    %v3098 = vunpack.c.h.b16 %v2308
    %v3099 = vpack.c.b16 %v2591, %v2587
    %v3100 = vpack.c.b16 %v2592, %v2588
    %v3101 = vpack.c.b16 %v2593, %v2589
    %v3102 = vpack.c.b16 %v2594, %v2590
    %v3103 = vpack.c.b16 %v2599, %v2595
    %v3104 = vpack.c.b16 %v2600, %v2596
    %v3105 = vpack.c.b16 %v2601, %v2597
    %v3106 = vpack.c.b16 %v2602, %v2598
    %v3107 = vpack.c.b16 %v2607, %v2603
    %v3108 = vpack.c.b16 %v2608, %v2604
    %v3109 = vpack.c.b16 %v2609, %v2605
    %v3110 = vpack.c.b16 %v2610, %v2606
    %v3111 = vpack.c.b16 %v2615, %v2611
    %v3112 = vpack.c.b16 %v2616, %v2612
    %v3113 = vpack.c.b16 %v2617, %v2613
    %v3114 = vpack.c.b16 %v2618, %v2614
    %v3115 = vpack.c.b16 %v2623, %v2619
    %v3116 = vpack.c.b16 %v2624, %v2620
    %v3117 = vpack.c.b16 %v2625, %v2621
    %v3118 = vpack.c.b16 %v2626, %v2622
    %v3119 = vpack.c.b16 %v2631, %v2627
    %v3120 = vpack.c.b16 %v2632, %v2628
    %v3121 = vpack.c.b16 %v2633, %v2629
    %v3122 = vpack.c.b16 %v2634, %v2630
    %v3123 = vpack.c.b16 %v2639, %v2635
    %v3124 = vpack.c.b16 %v2640, %v2636
    %v3125 = vpack.c.b16 %v2641, %v2637
    %v3126 = vpack.c.b16 %v2642, %v2638
    %v3127 = vpack.c.b16 %v2647, %v2643
    %v3128 = vpack.c.b16 %v2648, %v2644
    %v3129 = vpack.c.b16 %v2649, %v2645
    %v3130 = vpack.c.b16 %v2650, %v2646
    %v3131 = vpack.c.b16 %v2655, %v2651
    %v3132 = vpack.c.b16 %v2656, %v2652
    %v3133 = vpack.c.b16 %v2657, %v2653
    %v3134 = vpack.c.b16 %v2658, %v2654
    %v3135 = vpack.c.b16 %v2663, %v2659
    %v3136 = vpack.c.b16 %v2664, %v2660
    %v3137 = vpack.c.b16 %v2665, %v2661
    %v3138 = vpack.c.b16 %v2666, %v2662
    %v3139 = vpack.c.b16 %v2671, %v2667
    %v3140 = vpack.c.b16 %v2672, %v2668
    %v3141 = vpack.c.b16 %v2673, %v2669
    %v3142 = vpack.c.b16 %v2674, %v2670
    %v3143 = vpack.c.b16 %v2679, %v2675
    %v3144 = vpack.c.b16 %v2680, %v2676
    %v3145 = vpack.c.b16 %v2681, %v2677
    %v3146 = vpack.c.b16 %v2682, %v2678
    %v3147 = vpack.c.b16 %v2687, %v2683
    %v3148 = vpack.c.b16 %v2688, %v2684
    %v3149 = vpack.c.b16 %v2689, %v2685
    %v3150 = vpack.c.b16 %v2690, %v2686
    %v3151 = vpack.c.b16 %v2695, %v2691
    %v3152 = vpack.c.b16 %v2696, %v2692
    %v3153 = vpack.c.b16 %v2697, %v2693
    %v3154 = vpack.c.b16 %v2698, %v2694
    %v3155 = vpack.c.b16 %v2703, %v2699
    %v3156 = vpack.c.b16 %v2704, %v2700
    %v3157 = vpack.c.b16 %v2705, %v2701
    %v3158 = vpack.c.b16 %v2706, %v2702
    %v3159 = vpack.c.b16 %v2711, %v2707
    %v3160 = vpack.c.b16 %v2712, %v2708
    %v3161 = vpack.c.b16 %v2713, %v2709
    %v3162 = vpack.c.b16 %v2714, %v2710
    %v3163 = vpack.c.b16 %v2719, %v2715
    %v3164 = vpack.c.b16 %v2720, %v2716
    %v3165 = vpack.c.b16 %v2721, %v2717
    %v3166 = vpack.c.b16 %v2722, %v2718
    %v3167 = vpack.c.b16 %v2727, %v2723
    %v3168 = vpack.c.b16 %v2728, %v2724
    %v3169 = vpack.c.b16 %v2729, %v2725
    %v3170 = vpack.c.b16 %v2730, %v2726
    %v3171 = vpack.c.b16 %v2735, %v2731
    %v3172 = vpack.c.b16 %v2736, %v2732
    %v3173 = vpack.c.b16 %v2737, %v2733
    %v3174 = vpack.c.b16 %v2738, %v2734
    %v3175 = vpack.c.b16 %v2743, %v2739
    %v3176 = vpack.c.b16 %v2744, %v2740
    %v3177 = vpack.c.b16 %v2745, %v2741
    %v3178 = vpack.c.b16 %v2746, %v2742
    %v3179 = vpack.c.b16 %v2751, %v2747
    %v3180 = vpack.c.b16 %v2752, %v2748
    %v3181 = vpack.c.b16 %v2753, %v2749
    %v3182 = vpack.c.b16 %v2754, %v2750
    %v3183 = vpack.c.b16 %v2759, %v2755
    %v3184 = vpack.c.b16 %v2760, %v2756
    %v3185 = vpack.c.b16 %v2761, %v2757
    %v3186 = vpack.c.b16 %v2762, %v2758
    %v3187 = vpack.c.b16 %v2767, %v2763
    %v3188 = vpack.c.b16 %v2768, %v2764
    %v3189 = vpack.c.b16 %v2769, %v2765
    %v3190 = vpack.c.b16 %v2770, %v2766
    %v3191 = vpack.c.b16 %v2775, %v2771
    %v3192 = vpack.c.b16 %v2776, %v2772
    %v3193 = vpack.c.b16 %v2777, %v2773
    %v3194 = vpack.c.b16 %v2778, %v2774
    %v3195 = vpack.c.b16 %v2783, %v2779
    %v3196 = vpack.c.b16 %v2784, %v2780
    %v3197 = vpack.c.b16 %v2785, %v2781
    %v3198 = vpack.c.b16 %v2786, %v2782
    %v3199 = vpack.c.b16 %v2791, %v2787
    %v3200 = vpack.c.b16 %v2792, %v2788
    %v3201 = vpack.c.b16 %v2793, %v2789
    %v3202 = vpack.c.b16 %v2794, %v2790
    %v3203 = vpack.c.b16 %v2799, %v2795
    %v3204 = vpack.c.b16 %v2800, %v2796
    %v3205 = vpack.c.b16 %v2801, %v2797
    %v3206 = vpack.c.b16 %v2802, %v2798
    %v3207 = vpack.c.b16 %v2807, %v2803
    %v3208 = vpack.c.b16 %v2808, %v2804
    %v3209 = vpack.c.b16 %v2809, %v2805
    %v3210 = vpack.c.b16 %v2810, %v2806
    %v3211 = vpack.c.b16 %v2815, %v2811
    %v3212 = vpack.c.b16 %v2816, %v2812
    %v3213 = vpack.c.b16 %v2817, %v2813
    %v3214 = vpack.c.b16 %v2818, %v2814
    %v3215 = vpack.c.b16 %v2823, %v2819
    %v3216 = vpack.c.b16 %v2824, %v2820
    %v3217 = vpack.c.b16 %v2825, %v2821
    %v3218 = vpack.c.b16 %v2826, %v2822
    %v3219 = vpack.c.b16 %v2831, %v2827
    %v3220 = vpack.c.b16 %v2832, %v2828
    %v3221 = vpack.c.b16 %v2833, %v2829
    %v3222 = vpack.c.b16 %v2834, %v2830
    %v3223 = vpack.c.b16 %v2839, %v2835
    %v3224 = vpack.c.b16 %v2840, %v2836
    %v3225 = vpack.c.b16 %v2841, %v2837
    %v3226 = vpack.c.b16 %v2842, %v2838
    %v3227 = vpack.c.b16 %v2847, %v2843
    %v3228 = vpack.c.b16 %v2848, %v2844
    %v3229 = vpack.c.b16 %v2849, %v2845
    %v3230 = vpack.c.b16 %v2850, %v2846
    %v3231 = vpack.c.b16 %v2855, %v2851
    %v3232 = vpack.c.b16 %v2856, %v2852
    %v3233 = vpack.c.b16 %v2857, %v2853
    %v3234 = vpack.c.b16 %v2858, %v2854
    %v3235 = vpack.c.b16 %v2863, %v2859
    %v3236 = vpack.c.b16 %v2864, %v2860
    %v3237 = vpack.c.b16 %v2865, %v2861
    %v3238 = vpack.c.b16 %v2866, %v2862
    %v3239 = vpack.c.b16 %v2871, %v2867
    %v3240 = vpack.c.b16 %v2872, %v2868
    %v3241 = vpack.c.b16 %v2873, %v2869
    %v3242 = vpack.c.b16 %v2874, %v2870
    %v3243 = vpack.c.b16 %v2879, %v2875
    %v3244 = vpack.c.b16 %v2880, %v2876
    %v3245 = vpack.c.b16 %v2881, %v2877
    %v3246 = vpack.c.b16 %v2882, %v2878
    %v3247 = vpack.c.b16 %v2887, %v2883
    %v3248 = vpack.c.b16 %v2888, %v2884
    %v3249 = vpack.c.b16 %v2889, %v2885
    %v3250 = vpack.c.b16 %v2890, %v2886
    %v3251 = vpack.c.b16 %v2895, %v2891
    %v3252 = vpack.c.b16 %v2896, %v2892
    %v3253 = vpack.c.b16 %v2897, %v2893
    %v3254 = vpack.c.b16 %v2898, %v2894
    %v3255 = vpack.c.b16 %v2903, %v2899
    %v3256 = vpack.c.b16 %v2904, %v2900
    %v3257 = vpack.c.b16 %v2905, %v2901
    %v3258 = vpack.c.b16 %v2906, %v2902
    %v3259 = vpack.c.b16 %v2911, %v2907
    %v3260 = vpack.c.b16 %v2912, %v2908
    %v3261 = vpack.c.b16 %v2913, %v2909
    %v3262 = vpack.c.b16 %v2914, %v2910
    %v3263 = vpack.c.b16 %v2919, %v2915
    %v3264 = vpack.c.b16 %v2920, %v2916
    %v3265 = vpack.c.b16 %v2921, %v2917
    %v3266 = vpack.c.b16 %v2922, %v2918
    %v3267 = vpack.c.b16 %v2927, %v2923
    %v3268 = vpack.c.b16 %v2928, %v2924
    %v3269 = vpack.c.b16 %v2929, %v2925
    %v3270 = vpack.c.b16 %v2930, %v2926
    %v3271 = vpack.c.b16 %v2935, %v2931
    %v3272 = vpack.c.b16 %v2936, %v2932
    %v3273 = vpack.c.b16 %v2937, %v2933
    %v3274 = vpack.c.b16 %v2938, %v2934
    %v3275 = vpack.c.b16 %v2943, %v2939
    %v3276 = vpack.c.b16 %v2944, %v2940
    %v3277 = vpack.c.b16 %v2945, %v2941
    %v3278 = vpack.c.b16 %v2946, %v2942
    %v3279 = vpack.c.b16 %v2951, %v2947
    %v3280 = vpack.c.b16 %v2952, %v2948
    %v3281 = vpack.c.b16 %v2953, %v2949
    %v3282 = vpack.c.b16 %v2954, %v2950
    %v3283 = vpack.c.b16 %v2959, %v2955
    %v3284 = vpack.c.b16 %v2960, %v2956
    %v3285 = vpack.c.b16 %v2961, %v2957
    %v3286 = vpack.c.b16 %v2962, %v2958
    %v3287 = vpack.c.b16 %v2967, %v2963
    %v3288 = vpack.c.b16 %v2968, %v2964
    %v3289 = vpack.c.b16 %v2969, %v2965
    %v3290 = vpack.c.b16 %v2970, %v2966
    %v3291 = vpack.c.b16 %v2975, %v2971
    %v3292 = vpack.c.b16 %v2976, %v2972
    %v3293 = vpack.c.b16 %v2977, %v2973
    %v3294 = vpack.c.b16 %v2978, %v2974
    %v3295 = vpack.c.b16 %v2983, %v2979
    %v3296 = vpack.c.b16 %v2984, %v2980
    %v3297 = vpack.c.b16 %v2985, %v2981
    %v3298 = vpack.c.b16 %v2986, %v2982
    %v3299 = vpack.c.b16 %v2991, %v2987
    %v3300 = vpack.c.b16 %v2992, %v2988
    %v3301 = vpack.c.b16 %v2993, %v2989
    %v3302 = vpack.c.b16 %v2994, %v2990
    %v3303 = vpack.c.b16 %v2999, %v2995
    %v3304 = vpack.c.b16 %v3000, %v2996
    %v3305 = vpack.c.b16 %v3001, %v2997
    %v3306 = vpack.c.b16 %v3002, %v2998
    %v3307 = vpack.c.b16 %v3007, %v3003
    %v3308 = vpack.c.b16 %v3008, %v3004
    %v3309 = vpack.c.b16 %v3009, %v3005
    %v3310 = vpack.c.b16 %v3010, %v3006
    %v3311 = vpack.c.b16 %v3015, %v3011
    %v3312 = vpack.c.b16 %v3016, %v3012
    %v3313 = vpack.c.b16 %v3017, %v3013
    %v3314 = vpack.c.b16 %v3018, %v3014
    %v3315 = vpack.c.b16 %v3023, %v3019
    %v3316 = vpack.c.b16 %v3024, %v3020
    %v3317 = vpack.c.b16 %v3025, %v3021
    %v3318 = vpack.c.b16 %v3026, %v3022
    %v3319 = vpack.c.b16 %v3031, %v3027
    %v3320 = vpack.c.b16 %v3032, %v3028
    %v3321 = vpack.c.b16 %v3033, %v3029
    %v3322 = vpack.c.b16 %v3034, %v3030
    %v3323 = vpack.c.b16 %v3039, %v3035
    %v3324 = vpack.c.b16 %v3040, %v3036
    %v3325 = vpack.c.b16 %v3041, %v3037
    %v3326 = vpack.c.b16 %v3042, %v3038
    %v3327 = vpack.c.b16 %v3047, %v3043
    %v3328 = vpack.c.b16 %v3048, %v3044
    %v3329 = vpack.c.b16 %v3049, %v3045
    %v3330 = vpack.c.b16 %v3050, %v3046
    %v3331 = vpack.c.b16 %v3055, %v3051
    %v3332 = vpack.c.b16 %v3056, %v3052
    %v3333 = vpack.c.b16 %v3057, %v3053
    %v3334 = vpack.c.b16 %v3058, %v3054
    %v3335 = vpack.c.b16 %v3063, %v3059
    %v3336 = vpack.c.b16 %v3064, %v3060
    %v3337 = vpack.c.b16 %v3065, %v3061
    %v3338 = vpack.c.b16 %v3066, %v3062
    %v3339 = vpack.c.b16 %v3071, %v3067
    %v3340 = vpack.c.b16 %v3072, %v3068
    %v3341 = vpack.c.b16 %v3073, %v3069
    %v3342 = vpack.c.b16 %v3074, %v3070
    %v3343 = vpack.c.b16 %v3079, %v3075
    %v3344 = vpack.c.b16 %v3080, %v3076
    %v3345 = vpack.c.b16 %v3081, %v3077
    %v3346 = vpack.c.b16 %v3082, %v3078
    %v3347 = vpack.c.b16 %v3087, %v3083
    %v3348 = vpack.c.b16 %v3088, %v3084
    %v3349 = vpack.c.b16 %v3089, %v3085
    %v3350 = vpack.c.b16 %v3090, %v3086
    %v3351 = vpack.c.b16 %v3095, %v3091
    %v3352 = vpack.c.b16 %v3096, %v3092
    %v3353 = vpack.c.b16 %v3097, %v3093
    %v3354 = vpack.c.b16 %v3098, %v3094
    %3611 = vmatprep.subr.bf16.mxu0 %v3100
    %3612 = vmatpush1.bf16.msra.mxu0 %v3099
    %3613 = vmatprep.subr.bf16.mxu0 %v3104
    %3614 = vmatpush1.bf16.msra.mxu0 %v3103
    %3615 = vmatprep.subr.bf16.mxu0 %v3108
    %3616 = vmatpush1.bf16.msra.mxu0 %v3107
    %3617 = vmatprep.subr.bf16.mxu0 %v3112
    %3618 = vmatpush1.bf16.msra.mxu0 %v3111
    %3619 = vmatprep.subr.bf16.mxu0 %v3116
    %3620 = vmatpush1.bf16.msra.mxu0 %v3115
    %3621 = vmatprep.subr.bf16.mxu0 %v3120
    %3622 = vmatpush1.bf16.msra.mxu0 %v3119
    %3623 = vmatprep.subr.bf16.mxu0 %v3124
    %3624 = vmatpush1.bf16.msra.mxu0 %v3123
    %3625 = vmatprep.subr.bf16.mxu0 %v3128
    %3626 = vmatpush1.bf16.msra.mxu0 %v3127
    %3627 = vmatprep.subr.bf16.mxu0 %v3132
    %3628 = vmatpush1.bf16.msra.mxu0 %v3131
    %3629 = vmatprep.subr.bf16.mxu0 %v3136
    %3630 = vmatpush1.bf16.msra.mxu0 %v3135
    %3631 = vmatprep.subr.bf16.mxu0 %v3140
    %3632 = vmatpush1.bf16.msra.mxu0 %v3139
    %3633 = vmatprep.subr.bf16.mxu0 %v3144
    %3634 = vmatpush1.bf16.msra.mxu0 %v3143
    %3635 = vmatprep.subr.bf16.mxu0 %v3148
    %3636 = vmatpush1.bf16.msra.mxu0 %v3147
    %3637 = vmatprep.subr.bf16.mxu0 %v3152
    %3638 = vmatpush1.bf16.msra.mxu0 %v3151
    %3639 = vmatprep.subr.bf16.mxu0 %v3156
    %3640 = vmatpush1.bf16.msra.mxu0 %v3155
    %3641 = vmatprep.subr.bf16.mxu0 %v3160
    %3642 = vmatpush1.bf16.msra.mxu0 %v3159
    %3643 = vmatprep.mubr.bf16.mxu0 %v2046
    %3644 = vmatmul.mubr.bf16.gmra.mrb[0].mxu0 %v2045
    %v3645 = vpop.f32.mrb[0].mxu0
    %v3646 = vadd.f32 %v2314, %v3645
    %v3647 = vpop.f32.mrb[0].mxu0
    %v3648 = vadd.f32 %v2318, %v3647
    %v3649 = vpop.f32.mrb[0].mxu0
    %v3650 = vpop.f32.mrb[0].mxu0
    %3651 = vdwg.mxu0
    %3652 = vmatprep.subr.bf16.mxu0 %v3164
    %3653 = vmatpush1.bf16.msra.mxu0 %v3163
    %3654 = vmatprep.subr.bf16.mxu0 %v3168
    %3655 = vmatpush1.bf16.msra.mxu0 %v3167
    %3656 = vmatprep.subr.bf16.mxu0 %v3172
    %3657 = vmatpush1.bf16.msra.mxu0 %v3171
    %3658 = vmatprep.subr.bf16.mxu0 %v3176
    %3659 = vmatpush1.bf16.msra.mxu0 %v3175
    %3660 = vmatprep.subr.bf16.mxu0 %v3180
    %3661 = vmatpush1.bf16.msra.mxu0 %v3179
    %3662 = vmatprep.subr.bf16.mxu0 %v3184
    %3663 = vmatpush1.bf16.msra.mxu0 %v3183
    %3664 = vmatprep.subr.bf16.mxu0 %v3188
    %3665 = vmatpush1.bf16.msra.mxu0 %v3187
    %3666 = vmatprep.subr.bf16.mxu0 %v3192
    %3667 = vmatpush1.bf16.msra.mxu0 %v3191
    %3668 = vmatprep.subr.bf16.mxu0 %v3196
    %3669 = vmatpush1.bf16.msra.mxu0 %v3195
    %3670 = vmatprep.subr.bf16.mxu0 %v3200
    %3671 = vmatpush1.bf16.msra.mxu0 %v3199
    %3672 = vmatprep.subr.bf16.mxu0 %v3204
    %3673 = vmatpush1.bf16.msra.mxu0 %v3203
    %3674 = vmatprep.subr.bf16.mxu0 %v3208
    %3675 = vmatpush1.bf16.msra.mxu0 %v3207
    %3676 = vmatprep.subr.bf16.mxu0 %v3212
    %3677 = vmatpush1.bf16.msra.mxu0 %v3211
    %3678 = vmatprep.subr.bf16.mxu0 %v3216
    %3679 = vmatpush1.bf16.msra.mxu0 %v3215
    %3680 = vmatprep.subr.bf16.mxu0 %v3220
    %3681 = vmatpush1.bf16.msra.mxu0 %v3219
    %3682 = vmatprep.subr.bf16.mxu0 %v3224
    %3683 = vmatpush1.bf16.msra.mxu0 %v3223
    %3684 = vmatprep.mubr.bf16.mxu0 %v2048
    %3685 = vmatmul.mubr.bf16.gmra.mrb[0].mxu0 %v2047
    %v3686 = vpop.f32.mrb[0].mxu0
    %v3687 = vadd.f32 %v3646, %v3686
    %v3688 = vpop.f32.mrb[0].mxu0
    %v3689 = vadd.f32 %v3648, %v3688
    %v3690 = vpop.f32.mrb[0].mxu0
    %v3691 = vpop.f32.mrb[0].mxu0
    %3692 = vdwg.mxu0
    %3693 = vmatprep.subr.bf16.mxu0 %v3228
    %3694 = vmatpush1.bf16.msra.mxu0 %v3227
    %3695 = vmatprep.subr.bf16.mxu0 %v3232
    %3696 = vmatpush1.bf16.msra.mxu0 %v3231
    %3697 = vmatprep.subr.bf16.mxu0 %v3236
    %3698 = vmatpush1.bf16.msra.mxu0 %v3235
    %3699 = vmatprep.subr.bf16.mxu0 %v3240
    %3700 = vmatpush1.bf16.msra.mxu0 %v3239
    %3701 = vmatprep.subr.bf16.mxu0 %v3244
    %3702 = vmatpush1.bf16.msra.mxu0 %v3243
    %3703 = vmatprep.subr.bf16.mxu0 %v3248
    %3704 = vmatpush1.bf16.msra.mxu0 %v3247
    %3705 = vmatprep.subr.bf16.mxu0 %v3252
    %3706 = vmatpush1.bf16.msra.mxu0 %v3251
    %3707 = vmatprep.subr.bf16.mxu0 %v3256
    %3708 = vmatpush1.bf16.msra.mxu0 %v3255
    %3709 = vmatprep.subr.bf16.mxu0 %v3260
    %3710 = vmatpush1.bf16.msra.mxu0 %v3259
    %3711 = vmatprep.subr.bf16.mxu0 %v3264
    %3712 = vmatpush1.bf16.msra.mxu0 %v3263
    %3713 = vmatprep.subr.bf16.mxu0 %v3268
    %3714 = vmatpush1.bf16.msra.mxu0 %v3267
    %3715 = vmatprep.subr.bf16.mxu0 %v3272
    %3716 = vmatpush1.bf16.msra.mxu0 %v3271
    %3717 = vmatprep.subr.bf16.mxu0 %v3276
    %3718 = vmatpush1.bf16.msra.mxu0 %v3275
    %3719 = vmatprep.subr.bf16.mxu0 %v3280
    %3720 = vmatpush1.bf16.msra.mxu0 %v3279
    %3721 = vmatprep.subr.bf16.mxu0 %v3284
    %3722 = vmatpush1.bf16.msra.mxu0 %v3283
    %3723 = vmatprep.subr.bf16.mxu0 %v3288
    %3724 = vmatpush1.bf16.msra.mxu0 %v3287
    %3725 = vmatprep.mubr.bf16.mxu0 %v2050
    %3726 = vmatmul.mubr.bf16.gmra.mrb[0].mxu0 %v2049
    %v3727 = vpop.f32.mrb[0].mxu0
    %v3728 = vadd.f32 %v3687, %v3727
    %v3729 = vpop.f32.mrb[0].mxu0
    %v3730 = vadd.f32 %v3689, %v3729
    %v3731 = vpop.f32.mrb[0].mxu0
    %v3732 = vpop.f32.mrb[0].mxu0
    %3733 = vdwg.mxu0
    %3734 = vmatprep.subr.bf16.mxu0 %v3292
    %3735 = vmatpush1.bf16.msra.mxu0 %v3291
    %3736 = vmatprep.subr.bf16.mxu0 %v3296
    %3737 = vmatpush1.bf16.msra.mxu0 %v3295
    %3738 = vmatprep.subr.bf16.mxu0 %v3300
    %3739 = vmatpush1.bf16.msra.mxu0 %v3299
    %3740 = vmatprep.subr.bf16.mxu0 %v3304
    %3741 = vmatpush1.bf16.msra.mxu0 %v3303
    %3742 = vmatprep.subr.bf16.mxu0 %v3308
    %3743 = vmatpush1.bf16.msra.mxu0 %v3307
    %3744 = vmatprep.subr.bf16.mxu0 %v3312
    %3745 = vmatpush1.bf16.msra.mxu0 %v3311
    %3746 = vmatprep.subr.bf16.mxu0 %v3316
    %3747 = vmatpush1.bf16.msra.mxu0 %v3315
    %3748 = vmatprep.subr.bf16.mxu0 %v3320
    %3749 = vmatpush1.bf16.msra.mxu0 %v3319
    %3750 = vmatprep.subr.bf16.mxu0 %v3324
    %3751 = vmatpush1.bf16.msra.mxu0 %v3323
    %3752 = vmatprep.subr.bf16.mxu0 %v3328
    %3753 = vmatpush1.bf16.msra.mxu0 %v3327
    %3754 = vmatprep.subr.bf16.mxu0 %v3332
    %3755 = vmatpush1.bf16.msra.mxu0 %v3331
    %3756 = vmatprep.subr.bf16.mxu0 %v3336
    %3757 = vmatpush1.bf16.msra.mxu0 %v3335
    %3758 = vmatprep.subr.bf16.mxu0 %v3340
    %3759 = vmatpush1.bf16.msra.mxu0 %v3339
    %3760 = vmatprep.subr.bf16.mxu0 %v3344
    %3761 = vmatpush1.bf16.msra.mxu0 %v3343
    %3762 = vmatprep.subr.bf16.mxu0 %v3348
    %3763 = vmatpush1.bf16.msra.mxu0 %v3347
    %3764 = vmatprep.subr.bf16.mxu0 %v3352
    %3765 = vmatpush1.bf16.msra.mxu0 %v3351
    %3766 = vmatprep.mubr.bf16.mxu0 %v2052
    %3767 = vmatmul.mubr.bf16.gmra.mrb[0].mxu0 %v2051
    %v3768 = vpop.f32.mrb[0].mxu0
    %v3769 = vadd.f32 %v3728, %v3768
    %v3770 = vpop.f32.mrb[0].mxu0
    %v3771 = vadd.f32 %v3730, %v3770
    %v3772 = vpop.f32.mrb[0].mxu0
    %v3773 = vpop.f32.mrb[0].mxu0
    %3774 = vdwg.mxu0
    %3775 = vmatprep.subr.bf16.mxu0 %v3102
    %3776 = vmatpush1.bf16.msra.mxu0 %v3101
    %3777 = vmatprep.subr.bf16.mxu0 %v3106
    %3778 = vmatpush1.bf16.msra.mxu0 %v3105
    %3779 = vmatprep.subr.bf16.mxu0 %v3110
    %3780 = vmatpush1.bf16.msra.mxu0 %v3109
    %3781 = vmatprep.subr.bf16.mxu0 %v3114
    %3782 = vmatpush1.bf16.msra.mxu0 %v3113
    %3783 = vmatprep.subr.bf16.mxu0 %v3118
    %3784 = vmatpush1.bf16.msra.mxu0 %v3117
    %3785 = vmatprep.subr.bf16.mxu0 %v3122
    %3786 = vmatpush1.bf16.msra.mxu0 %v3121
    %3787 = vmatprep.subr.bf16.mxu0 %v3126
    %3788 = vmatpush1.bf16.msra.mxu0 %v3125
    %3789 = vmatprep.subr.bf16.mxu0 %v3130
    %3790 = vmatpush1.bf16.msra.mxu0 %v3129
    %3791 = vmatprep.subr.bf16.mxu0 %v3134
    %3792 = vmatpush1.bf16.msra.mxu0 %v3133
    %3793 = vmatprep.subr.bf16.mxu0 %v3138
    %3794 = vmatpush1.bf16.msra.mxu0 %v3137
    %3795 = vmatprep.subr.bf16.mxu0 %v3142
    %3796 = vmatpush1.bf16.msra.mxu0 %v3141
    %3797 = vmatprep.subr.bf16.mxu0 %v3146
    %3798 = vmatpush1.bf16.msra.mxu0 %v3145
    %3799 = vmatprep.subr.bf16.mxu0 %v3150
    %3800 = vmatpush1.bf16.msra.mxu0 %v3149
    %3801 = vmatprep.subr.bf16.mxu0 %v3154
    %3802 = vmatpush1.bf16.msra.mxu0 %v3153
    %3803 = vmatprep.subr.bf16.mxu0 %v3158
    %3804 = vmatpush1.bf16.msra.mxu0 %v3157
    %3805 = vmatprep.subr.bf16.mxu0 %v3162
    %3806 = vmatpush1.bf16.msra.mxu0 %v3161
    %3807 = vmatprep.mubr.bf16.mxu0 %v2046
    %3808 = vmatmul.mubr.bf16.gmra.mrb[0].mxu0 %v2045
    %v3809 = vpop.f32.mrb[0].mxu0
    %v3810 = vadd.f32 %v2322, %v3809
    %v3811 = vpop.f32.mrb[0].mxu0
    %v3812 = vadd.f32 %v2326, %v3811
    %v3813 = vpop.f32.mrb[0].mxu0
    %v3814 = vpop.f32.mrb[0].mxu0
    %3815 = vdwg.mxu0
    %3816 = vmatprep.subr.bf16.mxu0 %v3166
    %3817 = vmatpush1.bf16.msra.mxu0 %v3165
    %3818 = vmatprep.subr.bf16.mxu0 %v3170
    %3819 = vmatpush1.bf16.msra.mxu0 %v3169
    %3820 = vmatprep.subr.bf16.mxu0 %v3174
    %3821 = vmatpush1.bf16.msra.mxu0 %v3173
    %3822 = vmatprep.subr.bf16.mxu0 %v3178
    %3823 = vmatpush1.bf16.msra.mxu0 %v3177
    %3824 = vmatprep.subr.bf16.mxu0 %v3182
    %3825 = vmatpush1.bf16.msra.mxu0 %v3181
    %3826 = vmatprep.subr.bf16.mxu0 %v3186
    %3827 = vmatpush1.bf16.msra.mxu0 %v3185
    %3828 = vmatprep.subr.bf16.mxu0 %v3190
    %3829 = vmatpush1.bf16.msra.mxu0 %v3189
    %3830 = vmatprep.subr.bf16.mxu0 %v3194
    %3831 = vmatpush1.bf16.msra.mxu0 %v3193
    %3832 = vmatprep.subr.bf16.mxu0 %v3198
    %3833 = vmatpush1.bf16.msra.mxu0 %v3197
    %3834 = vmatprep.subr.bf16.mxu0 %v3202
    %3835 = vmatpush1.bf16.msra.mxu0 %v3201
    %3836 = vmatprep.subr.bf16.mxu0 %v3206
    %3837 = vmatpush1.bf16.msra.mxu0 %v3205
    %3838 = vmatprep.subr.bf16.mxu0 %v3210
    %3839 = vmatpush1.bf16.msra.mxu0 %v3209
    %3840 = vmatprep.subr.bf16.mxu0 %v3214
    %3841 = vmatpush1.bf16.msra.mxu0 %v3213
    %3842 = vmatprep.subr.bf16.mxu0 %v3218
    %3843 = vmatpush1.bf16.msra.mxu0 %v3217
    %3844 = vmatprep.subr.bf16.mxu0 %v3222
    %3845 = vmatpush1.bf16.msra.mxu0 %v3221
    %3846 = vmatprep.subr.bf16.mxu0 %v3226
    %3847 = vmatpush1.bf16.msra.mxu0 %v3225
    %3848 = vmatprep.mubr.bf16.mxu0 %v2048
    %3849 = vmatmul.mubr.bf16.gmra.mrb[0].mxu0 %v2047
    %v3850 = vpop.f32.mrb[0].mxu0
    %v3851 = vadd.f32 %v3810, %v3850
    %v3852 = vpop.f32.mrb[0].mxu0
    %v3853 = vadd.f32 %v3812, %v3852
    %v3854 = vpop.f32.mrb[0].mxu0
    %v3855 = vpop.f32.mrb[0].mxu0
    %3856 = vdwg.mxu0
    %3857 = vmatprep.subr.bf16.mxu0 %v3230
    %3858 = vmatpush1.bf16.msra.mxu0 %v3229
    %3859 = vmatprep.subr.bf16.mxu0 %v3234
    %3860 = vmatpush1.bf16.msra.mxu0 %v3233
    %3861 = vmatprep.subr.bf16.mxu0 %v3238
    %3862 = vmatpush1.bf16.msra.mxu0 %v3237
    %3863 = vmatprep.subr.bf16.mxu0 %v3242
    %3864 = vmatpush1.bf16.msra.mxu0 %v3241
    %3865 = vmatprep.subr.bf16.mxu0 %v3246
    %3866 = vmatpush1.bf16.msra.mxu0 %v3245
    %3867 = vmatprep.subr.bf16.mxu0 %v3250
    %3868 = vmatpush1.bf16.msra.mxu0 %v3249
    %3869 = vmatprep.subr.bf16.mxu0 %v3254
    %3870 = vmatpush1.bf16.msra.mxu0 %v3253
    %3871 = vmatprep.subr.bf16.mxu0 %v3258
    %3872 = vmatpush1.bf16.msra.mxu0 %v3257
    %3873 = vmatprep.subr.bf16.mxu0 %v3262
    %3874 = vmatpush1.bf16.msra.mxu0 %v3261
    %3875 = vmatprep.subr.bf16.mxu0 %v3266
    %3876 = vmatpush1.bf16.msra.mxu0 %v3265
    %3877 = vmatprep.subr.bf16.mxu0 %v3270
    %3878 = vmatpush1.bf16.msra.mxu0 %v3269
    %3879 = vmatprep.subr.bf16.mxu0 %v3274
    %3880 = vmatpush1.bf16.msra.mxu0 %v3273
    %3881 = vmatprep.subr.bf16.mxu0 %v3278
    %3882 = vmatpush1.bf16.msra.mxu0 %v3277
    %3883 = vmatprep.subr.bf16.mxu0 %v3282
    %3884 = vmatpush1.bf16.msra.mxu0 %v3281
    %3885 = vmatprep.subr.bf16.mxu0 %v3286
    %3886 = vmatpush1.bf16.msra.mxu0 %v3285
    %3887 = vmatprep.subr.bf16.mxu0 %v3290
    %3888 = vmatpush1.bf16.msra.mxu0 %v3289
    %3889 = vmatprep.mubr.bf16.mxu0 %v2050
    %3890 = vmatmul.mubr.bf16.gmra.mrb[0].mxu0 %v2049
    %v3891 = vpop.f32.mrb[0].mxu0
    %v3892 = vadd.f32 %v3851, %v3891
    %v3893 = vpop.f32.mrb[0].mxu0
    %v3894 = vadd.f32 %v3853, %v3893
    %v3895 = vpop.f32.mrb[0].mxu0
    %v3896 = vpop.f32.mrb[0].mxu0
    %3897 = vdwg.mxu0
    %3898 = vmatprep.subr.bf16.mxu0 %v3294
    %3899 = vmatpush1.bf16.msra.mxu0 %v3293
    %3900 = vmatprep.subr.bf16.mxu0 %v3298
    %3901 = vmatpush1.bf16.msra.mxu0 %v3297
    %3902 = vmatprep.subr.bf16.mxu0 %v3302
    %3903 = vmatpush1.bf16.msra.mxu0 %v3301
    %3904 = vmatprep.subr.bf16.mxu0 %v3306
    %3905 = vmatpush1.bf16.msra.mxu0 %v3305
    %3906 = vmatprep.subr.bf16.mxu0 %v3310
    %3907 = vmatpush1.bf16.msra.mxu0 %v3309
    %3908 = vmatprep.subr.bf16.mxu0 %v3314
    %3909 = vmatpush1.bf16.msra.mxu0 %v3313
    %3910 = vmatprep.subr.bf16.mxu0 %v3318
    %3911 = vmatpush1.bf16.msra.mxu0 %v3317
    %3912 = vmatprep.subr.bf16.mxu0 %v3322
    %3913 = vmatpush1.bf16.msra.mxu0 %v3321
    %3914 = vmatprep.subr.bf16.mxu0 %v3326
    %3915 = vmatpush1.bf16.msra.mxu0 %v3325
    %3916 = vmatprep.subr.bf16.mxu0 %v3330
    %3917 = vmatpush1.bf16.msra.mxu0 %v3329
    %3918 = vmatprep.subr.bf16.mxu0 %v3334
    %3919 = vmatpush1.bf16.msra.mxu0 %v3333
    %3920 = vmatprep.subr.bf16.mxu0 %v3338
    %3921 = vmatpush1.bf16.msra.mxu0 %v3337
    %3922 = vmatprep.subr.bf16.mxu0 %v3342
    %3923 = vmatpush1.bf16.msra.mxu0 %v3341
    %3924 = vmatprep.subr.bf16.mxu0 %v3346
    %3925 = vmatpush1.bf16.msra.mxu0 %v3345
    %3926 = vmatprep.subr.bf16.mxu0 %v3350
    %3927 = vmatpush1.bf16.msra.mxu0 %v3349
    %3928 = vmatprep.subr.bf16.mxu0 %v3354
    %3929 = vmatpush1.bf16.msra.mxu0 %v3353
    %3930 = vmatprep.mubr.bf16.mxu0 %v2052
    %3931 = vmatmul.mubr.bf16.gmra.mrb[0].mxu0 %v2051
    %v3932 = vpop.f32.mrb[0].mxu0
    %v3933 = vadd.f32 %v3892, %v3932
    %v3934 = vpop.f32.mrb[0].mxu0
    %v3935 = vadd.f32 %v3894, %v3934
    %v3936 = vpop.f32.mrb[0].mxu0
    %v3937 = vpop.f32.mrb[0].mxu0
    %3938 = vdwg.mxu0
    %v3939 = vxor.u32 %v3769, 2147483648
    %v3940 = vxor.u32 %v3771, 2147483648
    %v3941 = vxor.u32 %v3933, 2147483648
    %v3942 = vxor.u32 %v3935, 2147483648
    %v3943 = vmul.f32 %v3939, 1.442695
    %v3944 = vpow.pop %v3943
    %v3945 = vmul.f32 %v3940, 1.442695
    %v3946 = vpow.pop %v3945
    %v3947 = vmul.f32 %v3941, 1.442695
    %v3948 = vpow.pop %v3947
    %v3949 = vmul.f32 %v3942, 1.442695
    %v3950 = vpow.pop %v3949
    %v3951 = vadd.f32 %v3944, 1.0
    %v3952 = vadd.f32 %v3946, 1.0
    %v3953 = vadd.f32 %v3948, 1.0
    %v3954 = vadd.f32 %v3950, 1.0
    %v3955 = vrcp.pop %v3951
    %v3956 = vmul.f32 1.0, %v3955
    %v3957 = vrcp.pop %v3952
    %v3958 = vmul.f32 1.0, %v3957
    %v3959 = vrcp.pop %v3953
    %v3960 = vmul.f32 1.0, %v3959
    %v3961 = vrcp.pop %v3954
    %v3962 = vmul.f32 1.0, %v3961
    %v3963 = vpack.c.bf16 %v3956, %v3956
    %v3964 = vpack.c.bf16 %v3958, %v3958
    %v3965 = vpack.c.bf16 %v3960, %v3960
    %v3966 = vpack.c.bf16 %v3962, %v3962
    %v3967 = vld [vmem:[#allocation7] sm:$0xf]
    %v3968 = vld [vmem:[#allocation7 + $0x4] sm:$0xf]
    %v3969 = vld [vmem:[#allocation7 + $0x8] sm:$0xf]
    %v3970 = vld [vmem:[#allocation7 + $0xc] sm:$0xf]
    %v3971 = vld [vmem:[#allocation7 + $0x10] sm:$0xf]
    %v3972 = vld [vmem:[#allocation7 + $0x14] sm:$0xf]
    %v3973 = vld [vmem:[#allocation7 + $0x18] sm:$0xf]
    %v3974 = vld [vmem:[#allocation7 + $0x1c] sm:$0xf]
    %v3975 = vld [vmem:[#allocation7 + $0x20] sm:$0xf]
    %v3976 = vld [vmem:[#allocation7 + $0x24] sm:$0xf]
    %v3977 = vld [vmem:[#allocation7 + $0x28] sm:$0xf]
    %v3978 = vld [vmem:[#allocation7 + $0x2c] sm:$0xf]
    %v3979 = vld [vmem:[#allocation7 + $0x30] sm:$0xf]
    %v3980 = vld [vmem:[#allocation7 + $0x34] sm:$0xf]
    %v3981 = vld [vmem:[#allocation7 + $0x38] sm:$0xf]
    %v3982 = vld [vmem:[#allocation7 + $0x3c] sm:$0xf]
    %v3983 = vld [vmem:[#allocation7 + $0x40] sm:$0xf]
    %v3984 = vld [vmem:[#allocation7 + $0x44] sm:$0xf]
    %v3985 = vld [vmem:[#allocation7 + $0x48] sm:$0xf]
    %v3986 = vld [vmem:[#allocation7 + $0x4c] sm:$0xf]
    %v3987 = vld [vmem:[#allocation7 + $0x50] sm:$0xf]
    %v3988 = vld [vmem:[#allocation7 + $0x54] sm:$0xf]
    %v3989 = vld [vmem:[#allocation7 + $0x58] sm:$0xf]
    %v3990 = vld [vmem:[#allocation7 + $0x5c] sm:$0xf]
    %v3991 = vld [vmem:[#allocation7 + $0x60] sm:$0xf]
    %v3992 = vld [vmem:[#allocation7 + $0x64] sm:$0xf]
    %v3993 = vld [vmem:[#allocation7 + $0x68] sm:$0xf]
    %v3994 = vld [vmem:[#allocation7 + $0x6c] sm:$0xf]
    %v3995 = vld [vmem:[#allocation7 + $0x70] sm:$0xf]
    %v3996 = vld [vmem:[#allocation7 + $0x74] sm:$0xf]
    %v3997 = vld [vmem:[#allocation7 + $0x78] sm:$0xf]
    %v3998 = vld [vmem:[#allocation7 + $0x7c] sm:$0xf]
    %v3999 = vld [vmem:[#allocation7 + $0x80] sm:$0xf]
    %v4000 = vld [vmem:[#allocation7 + $0x84] sm:$0xf]
    %v4001 = vld [vmem:[#allocation7 + $0x88] sm:$0xf]
    %v4002 = vld [vmem:[#allocation7 + $0x8c] sm:$0xf]
    %v4003 = vld [vmem:[#allocation7 + $0x90] sm:$0xf]
    %v4004 = vld [vmem:[#allocation7 + $0x94] sm:$0xf]
    %v4005 = vld [vmem:[#allocation7 + $0x98] sm:$0xf]
    %v4006 = vld [vmem:[#allocation7 + $0x9c] sm:$0xf]
    %v4007 = vld [vmem:[#allocation7 + $0xa0] sm:$0xf]
    %v4008 = vld [vmem:[#allocation7 + $0xa4] sm:$0xf]
    %v4009 = vld [vmem:[#allocation7 + $0xa8] sm:$0xf]
    %v4010 = vld [vmem:[#allocation7 + $0xac] sm:$0xf]
    %v4011 = vld [vmem:[#allocation7 + $0xb0] sm:$0xf]
    %v4012 = vld [vmem:[#allocation7 + $0xb4] sm:$0xf]
    %v4013 = vld [vmem:[#allocation7 + $0xb8] sm:$0xf]
    %v4014 = vld [vmem:[#allocation7 + $0xbc] sm:$0xf]
    %v4015 = vld [vmem:[#allocation7 + $0xc0] sm:$0xf]
    %v4016 = vld [vmem:[#allocation7 + $0xc4] sm:$0xf]
    %v4017 = vld [vmem:[#allocation7 + $0xc8] sm:$0xf]
    %v4018 = vld [vmem:[#allocation7 + $0xcc] sm:$0xf]
    %v4019 = vld [vmem:[#allocation7 + $0xd0] sm:$0xf]
    %v4020 = vld [vmem:[#allocation7 + $0xd4] sm:$0xf]
    %v4021 = vld [vmem:[#allocation7 + $0xd8] sm:$0xf]
    %v4022 = vld [vmem:[#allocation7 + $0xdc] sm:$0xf]
    %v4023 = vld [vmem:[#allocation7 + $0xe0] sm:$0xf]
    %v4024 = vld [vmem:[#allocation7 + $0xe4] sm:$0xf]
    %v4025 = vld [vmem:[#allocation7 + $0xe8] sm:$0xf]
    %v4026 = vld [vmem:[#allocation7 + $0xec] sm:$0xf]
    %v4027 = vld [vmem:[#allocation7 + $0xf0] sm:$0xf]
    %v4028 = vld [vmem:[#allocation7 + $0xf4] sm:$0xf]
    %v4029 = vld [vmem:[#allocation7 + $0xf8] sm:$0xf]
    %v4030 = vld [vmem:[#allocation7 + $0xfc] sm:$0xf]
    %v4031 = vld [vmem:[%s6] sm:$0x1]
    %v4033 = vlaneseq
    %v4034 = vshrl.u32 %v4033, 7
    %v4035 = vsub.s32 0, %v4034
    %v4036 = vrot.slane %v4031, %v4035
    %v4102 = vunpack.c.l.b16 %v3967
    %v4103 = vunpack.c.l.b16 %v3968
    %v4104 = vunpack.c.l.b16 %v3969
    %v4105 = vunpack.c.l.b16 %v3970
    %v4106 = vunpack.c.l.b16 %v3971
    %v4107 = vunpack.c.l.b16 %v3972
    %v4108 = vunpack.c.l.b16 %v3973
    %v4109 = vunpack.c.l.b16 %v3974
    %v4110 = vunpack.c.l.b16 %v3975
    %v4111 = vunpack.c.l.b16 %v3976
    %v4112 = vunpack.c.l.b16 %v3977
    %v4113 = vunpack.c.l.b16 %v3978
    %v4114 = vunpack.c.l.b16 %v3979
    %v4115 = vunpack.c.l.b16 %v3980
    %v4116 = vunpack.c.l.b16 %v3981
    %v4117 = vunpack.c.l.b16 %v3982
    %v4118 = vunpack.c.l.b16 %v3983
    %v4119 = vunpack.c.l.b16 %v3984
    %v4120 = vunpack.c.l.b16 %v3985
    %v4121 = vunpack.c.l.b16 %v3986
    %v4122 = vunpack.c.l.b16 %v3987
    %v4123 = vunpack.c.l.b16 %v3988
    %v4124 = vunpack.c.l.b16 %v3989
    %v4125 = vunpack.c.l.b16 %v3990
    %v4126 = vunpack.c.l.b16 %v3991
    %v4127 = vunpack.c.l.b16 %v3992
    %v4128 = vunpack.c.l.b16 %v3993
    %v4129 = vunpack.c.l.b16 %v3994
    %v4130 = vunpack.c.l.b16 %v3995
    %v4131 = vunpack.c.l.b16 %v3996
    %v4132 = vunpack.c.l.b16 %v3997
    %v4133 = vunpack.c.l.b16 %v3998
    %v4134 = vunpack.c.l.b16 %v3999
    %v4135 = vunpack.c.l.b16 %v4000
    %v4136 = vunpack.c.l.b16 %v4001
    %v4137 = vunpack.c.l.b16 %v4002
    %v4138 = vunpack.c.l.b16 %v4003
    %v4139 = vunpack.c.l.b16 %v4004
    %v4140 = vunpack.c.l.b16 %v4005
    %v4141 = vunpack.c.l.b16 %v4006
    %v4142 = vunpack.c.l.b16 %v4007
    %v4143 = vunpack.c.l.b16 %v4008
    %v4144 = vunpack.c.l.b16 %v4009
    %v4145 = vunpack.c.l.b16 %v4010
    %v4146 = vunpack.c.l.b16 %v4011
    %v4147 = vunpack.c.l.b16 %v4012
    %v4148 = vunpack.c.l.b16 %v4013
    %v4149 = vunpack.c.l.b16 %v4014
    %v4150 = vunpack.c.l.b16 %v4015
    %v4151 = vunpack.c.l.b16 %v4016
    %v4152 = vunpack.c.l.b16 %v4017
    %v4153 = vunpack.c.l.b16 %v4018
    %v4154 = vunpack.c.l.b16 %v4019
    %v4155 = vunpack.c.l.b16 %v4020
    %v4156 = vunpack.c.l.b16 %v4021
    %v4157 = vunpack.c.l.b16 %v4022
    %v4158 = vunpack.c.l.b16 %v4023
    %v4159 = vunpack.c.l.b16 %v4024
    %v4160 = vunpack.c.l.b16 %v4025
    %v4161 = vunpack.c.l.b16 %v4026
    %v4162 = vunpack.c.l.b16 %v4027
    %v4163 = vunpack.c.l.b16 %v4028
    %v4164 = vunpack.c.l.b16 %v4029
    %v4165 = vunpack.c.l.b16 %v4030
    %v4166 = vpack.c.b16 %v4103, %v4102
    %v4167 = vpack.c.b16 %v4105, %v4104
    %v4168 = vpack.c.b16 %v4107, %v4106
    %v4169 = vpack.c.b16 %v4109, %v4108
    %v4170 = vpack.c.b16 %v4111, %v4110
    %v4171 = vpack.c.b16 %v4113, %v4112
    %v4172 = vpack.c.b16 %v4115, %v4114
    %v4173 = vpack.c.b16 %v4117, %v4116
    %v4174 = vpack.c.b16 %v4119, %v4118
    %v4175 = vpack.c.b16 %v4121, %v4120
    %v4176 = vpack.c.b16 %v4123, %v4122
    %v4177 = vpack.c.b16 %v4125, %v4124
    %v4178 = vpack.c.b16 %v4127, %v4126
    %v4179 = vpack.c.b16 %v4129, %v4128
    %v4180 = vpack.c.b16 %v4131, %v4130
    %v4181 = vpack.c.b16 %v4133, %v4132
    %v4182 = vpack.c.b16 %v4135, %v4134
    %v4183 = vpack.c.b16 %v4137, %v4136
    %v4184 = vpack.c.b16 %v4139, %v4138
    %v4185 = vpack.c.b16 %v4141, %v4140
    %v4186 = vpack.c.b16 %v4143, %v4142
    %v4187 = vpack.c.b16 %v4145, %v4144
    %v4188 = vpack.c.b16 %v4147, %v4146
    %v4189 = vpack.c.b16 %v4149, %v4148
    %v4190 = vpack.c.b16 %v4151, %v4150
    %v4191 = vpack.c.b16 %v4153, %v4152
    %v4192 = vpack.c.b16 %v4155, %v4154
    %v4193 = vpack.c.b16 %v4157, %v4156
    %v4194 = vpack.c.b16 %v4159, %v4158
    %v4195 = vpack.c.b16 %v4161, %v4160
    %v4196 = vpack.c.b16 %v4163, %v4162
    %v4197 = vpack.c.b16 %v4165, %v4164
    %4230 = vmatprep.subr.bf16.mxu0 0
    %4231 = vmatpush1.bf16.msra.mxu0 %v4166
    %4232 = vmatprep.subr.bf16.mxu0 0
    %4233 = vmatpush1.bf16.msra.mxu0 %v4167
    %4234 = vmatprep.subr.bf16.mxu0 0
    %4235 = vmatpush1.bf16.msra.mxu0 %v4168
    %4236 = vmatprep.subr.bf16.mxu0 0
    %4237 = vmatpush1.bf16.msra.mxu0 %v4169
    %4238 = vmatprep.subr.bf16.mxu0 0
    %4239 = vmatpush1.bf16.msra.mxu0 %v4170
    %4240 = vmatprep.subr.bf16.mxu0 0
    %4241 = vmatpush1.bf16.msra.mxu0 %v4171
    %4242 = vmatprep.subr.bf16.mxu0 0
    %4243 = vmatpush1.bf16.msra.mxu0 %v4172
    %4244 = vmatprep.subr.bf16.mxu0 0
    %4245 = vmatpush1.bf16.msra.mxu0 %v4173
    %4246 = vmatprep.subr.bf16.mxu0 0
    %4247 = vmatpush1.bf16.msra.mxu0 %v4174
    %4248 = vmatprep.subr.bf16.mxu0 0
    %4249 = vmatpush1.bf16.msra.mxu0 %v4175
    %4250 = vmatprep.subr.bf16.mxu0 0
    %4251 = vmatpush1.bf16.msra.mxu0 %v4176
    %4252 = vmatprep.subr.bf16.mxu0 0
    %4253 = vmatpush1.bf16.msra.mxu0 %v4177
    %4254 = vmatprep.subr.bf16.mxu0 0
    %4255 = vmatpush1.bf16.msra.mxu0 %v4178
    %4256 = vmatprep.subr.bf16.mxu0 0
    %4257 = vmatpush1.bf16.msra.mxu0 %v4179
    %4258 = vmatprep.subr.bf16.mxu0 0
    %4259 = vmatpush1.bf16.msra.mxu0 %v4180
    %4260 = vmatprep.subr.bf16.mxu0 0
    %4261 = vmatpush1.bf16.msra.mxu0 %v4181
    %4262 = vmatprep.mubr.bf16.mxu0 %v3964
    %4263 = vmatmul.mubr.bf16.gmra.mrb[0].mxu0 %v3963
    %v4264 = vpop.f32.mrb[0].mxu0
    %v4265 = vadd.f32 %v4036, %v4264
    %v4266 = vpop.f32.mrb[0].mxu0
    %v4267 = vpop.f32.mrb[0].mxu0
    %v4268 = vpop.f32.mrb[0].mxu0
    %4269 = vdwg.mxu0
    %4270 = vmatprep.subr.bf16.mxu0 0
    %4271 = vmatpush1.bf16.msra.mxu0 %v4182
    %4272 = vmatprep.subr.bf16.mxu0 0
    %4273 = vmatpush1.bf16.msra.mxu0 %v4183
    %4274 = vmatprep.subr.bf16.mxu0 0
    %4275 = vmatpush1.bf16.msra.mxu0 %v4184
    %4276 = vmatprep.subr.bf16.mxu0 0
    %4277 = vmatpush1.bf16.msra.mxu0 %v4185
    %4278 = vmatprep.subr.bf16.mxu0 0
    %4279 = vmatpush1.bf16.msra.mxu0 %v4186
    %4280 = vmatprep.subr.bf16.mxu0 0
    %4281 = vmatpush1.bf16.msra.mxu0 %v4187
    %4282 = vmatprep.subr.bf16.mxu0 0
    %4283 = vmatpush1.bf16.msra.mxu0 %v4188
    %4284 = vmatprep.subr.bf16.mxu0 0
    %4285 = vmatpush1.bf16.msra.mxu0 %v4189
    %4286 = vmatprep.subr.bf16.mxu0 0
    %4287 = vmatpush1.bf16.msra.mxu0 %v4190
    %4288 = vmatprep.subr.bf16.mxu0 0
    %4289 = vmatpush1.bf16.msra.mxu0 %v4191
    %4290 = vmatprep.subr.bf16.mxu0 0
    %4291 = vmatpush1.bf16.msra.mxu0 %v4192
    %4292 = vmatprep.subr.bf16.mxu0 0
    %4293 = vmatpush1.bf16.msra.mxu0 %v4193
    %4294 = vmatprep.subr.bf16.mxu0 0
    %4295 = vmatpush1.bf16.msra.mxu0 %v4194
    %4296 = vmatprep.subr.bf16.mxu0 0
    %4297 = vmatpush1.bf16.msra.mxu0 %v4195
    %4298 = vmatprep.subr.bf16.mxu0 0
    %4299 = vmatpush1.bf16.msra.mxu0 %v4196
    %4300 = vmatprep.subr.bf16.mxu0 0
    %4301 = vmatpush1.bf16.msra.mxu0 %v4197
    %4302 = vmatprep.mubr.bf16.mxu0 %v3966
    %4303 = vmatmul.mubr.bf16.gmra.mrb[0].mxu0 %v3965
    %v4304 = vpop.f32.mrb[0].mxu0
    %v4305 = vadd.f32 %v4265, %v4304
    %v4306 = vpop.f32.mrb[0].mxu0
    %v4307 = vpop.f32.mrb[0].mxu0
    %v4308 = vpop.f32.mrb[0].mxu0
    %4309 = vdwg.mxu0
    %v4310 = vxor.u32 %v4305, 2147483648
    %v4311 = vmul.f32 %v4310, 1.442695
    %v4312 = vpow.pop %v4311
    %v4313 = vadd.f32 %v4312, 1.0
    %v4314 = vrcp.pop %v4313
    %v4315 = vmul.f32 1.0, %v4314
    %v4316 = vpack.c.bf16 %v4315, %v4315
    %v4317 = vld [vmem:[%s7] sm:$0xf]
    %v4318 = vld [vmem:[%s7 + $0x4] sm:$0xf]
    %v4319 = vld [vmem:[%s7 + $0x8] sm:$0xf]
    %v4320 = vld [vmem:[%s7 + $0xc] sm:$0xf]
    %v4321 = vld [vmem:[%s7 + $0x10] sm:$0xf]
    %v4322 = vld [vmem:[%s7 + $0x14] sm:$0xf]
    %v4323 = vld [vmem:[%s7 + $0x18] sm:$0xf]
    %v4324 = vld [vmem:[%s7 + $0x1c] sm:$0xf]
    %v4325 = vld [vmem:[%s7 + $0x20] sm:$0xf]
    %v4326 = vld [vmem:[%s7 + $0x24] sm:$0xf]
    %v4327 = vld [vmem:[%s7 + $0x28] sm:$0xf]
    %v4328 = vld [vmem:[%s7 + $0x2c] sm:$0xf]
    %v4329 = vld [vmem:[%s7 + $0x30] sm:$0xf]
    %v4330 = vld [vmem:[%s7 + $0x34] sm:$0xf]
    %v4331 = vld [vmem:[%s7 + $0x38] sm:$0xf]
    %v4332 = vld [vmem:[%s7 + $0x3c] sm:$0xf]
    %v4333 = vld [vmem:[%s8] sm:$0x1]
    %v4335 = vlaneseq
    %v4336 = vshrl.u32 %v4335, 7
    %v4337 = vsub.s32 0, %v4336
    %v4338 = vrot.slane %v4333, %v4337
    %v4356 = vunpack.c.l.b16 %v4317
    %v4357 = vunpack.c.l.b16 %v4318
    %v4358 = vunpack.c.l.b16 %v4319
    %v4359 = vunpack.c.l.b16 %v4320
    %v4360 = vunpack.c.l.b16 %v4321
    %v4361 = vunpack.c.l.b16 %v4322
    %v4362 = vunpack.c.l.b16 %v4323
    %v4363 = vunpack.c.l.b16 %v4324
    %v4364 = vunpack.c.l.b16 %v4325
    %v4365 = vunpack.c.l.b16 %v4326
    %v4366 = vunpack.c.l.b16 %v4327
    %v4367 = vunpack.c.l.b16 %v4328
    %v4368 = vunpack.c.l.b16 %v4329
    %v4369 = vunpack.c.l.b16 %v4330
    %v4370 = vunpack.c.l.b16 %v4331
    %v4371 = vunpack.c.l.b16 %v4332
    %v4372 = vpack.c.b16 %v4357, %v4356
    %v4373 = vpack.c.b16 %v4359, %v4358
    %v4374 = vpack.c.b16 %v4361, %v4360
    %v4375 = vpack.c.b16 %v4363, %v4362
    %v4376 = vpack.c.b16 %v4365, %v4364
    %v4377 = vpack.c.b16 %v4367, %v4366
    %v4378 = vpack.c.b16 %v4369, %v4368
    %v4379 = vpack.c.b16 %v4371, %v4370
    %4388 = vmatprep.subr.bf16.mxu0 0
    %4389 = vmatpush1.bf16.msra.mxu0 %v4372
    %4390 = vmatprep.subr.bf16.mxu0 0
    %4391 = vmatpush1.bf16.msra.mxu0 %v4373
    %4392 = vmatprep.subr.bf16.mxu0 0
    %4393 = vmatpush1.bf16.msra.mxu0 %v4374
    %4394 = vmatprep.subr.bf16.mxu0 0
    %4395 = vmatpush1.bf16.msra.mxu0 %v4375
    %4396 = vmatprep.subr.bf16.mxu0 0
    %4397 = vmatpush1.bf16.msra.mxu0 %v4376
    %4398 = vmatprep.subr.bf16.mxu0 0
    %4399 = vmatpush1.bf16.msra.mxu0 %v4377
    %4400 = vmatprep.subr.bf16.mxu0 0
    %4401 = vmatpush1.bf16.msra.mxu0 %v4378
    %4402 = vmatprep.subr.bf16.mxu0 0
    %4403 = vmatpush1.bf16.msra.mxu0 %v4379
    %4404 = vmatprep.subr.bf16.mxu0 0
    %4405 = vmatpush1.bf16.msra.mxu0 0
    %4406 = vmatprep.subr.bf16.mxu0 0
    %4407 = vmatpush1.bf16.msra.mxu0 0
    %4408 = vmatprep.subr.bf16.mxu0 0
    %4409 = vmatpush1.bf16.msra.mxu0 0
    %4410 = vmatprep.subr.bf16.mxu0 0
    %4411 = vmatpush1.bf16.msra.mxu0 0
    %4412 = vmatprep.subr.bf16.mxu0 0
    %4413 = vmatpush1.bf16.msra.mxu0 0
    %4414 = vmatprep.subr.bf16.mxu0 0
    %4415 = vmatpush1.bf16.msra.mxu0 0
    %4416 = vmatprep.subr.bf16.mxu0 0
    %4417 = vmatpush1.bf16.msra.mxu0 0
    %4418 = vmatprep.subr.bf16.mxu0 0
    %4419 = vmatpush1.bf16.msra.mxu0 0
    %4420 = vmatprep.mubr.bf16.mxu0 0
    %4421 = vmatmul.mubr.bf16.gmra.mrb[0].mxu0 %v4316
    %v4422 = vpop.f32.mrb[0].mxu0
    %v4423 = vadd.f32 %v4338, %v4422
    %v4424 = vpop.f32.mrb[0].mxu0
    %v4425 = vpop.f32.mrb[0].mxu0
    %v4426 = vpop.f32.mrb[0].mxu0
    %4427 = vdwg.mxu0
    %vm4428 = vcmask 318464
    %4429 = vst.msk [vmem:[#allocation8] sm:$0xff] %vm4428, %v4423
    // Predicated region
    $region50: #{classifier_forward.1} parent=1 // pred_check
      _
    $region51: #{classifier_forward.1} parent=1 // pred_check_branch
      %4431 = sbr.rel (0) target = $region53
    $region52: #{classifier_forward.1} parent=1 // pred_region
      %s4433 = ssub.s32 128, 128
      %4434 = vsyncadd [#allocation4], %s4433
      %s4436 = sshll.u32 [#allocation8], 4
      %s4437 = int_to_ptr.vmem [resolvable:$true] %s4436
      %4439 = dma.vmem_to_hbm [thread:$0]  %s4437, 128, %s9, [#allocation4]
    $region53: #{classifier_forward.1} parent=1 // pred_fallthru
      _
    // Predicated region
    $region54: #{classifier_forward.1} parent=1 // pred_check
      _
    $region55: #{classifier_forward.1} parent=1 // pred_check_branch
      %4441 = sbr.rel (0) target = $region57
    $region56: #{classifier_forward.1} parent=1 // pred_region
      %4442 = dma.done [#allocation4], 128
    $region57: #{classifier_forward.1} parent=1 // pred_fallthru
      _
    %4443 = vsyncpa [#allocation3], 1
    %4444 = vsyncpa [#allocation6], 1
    %4445 = vsyncpa [#allocation4], 1

</llo_original>
